<compile_context>
chip_gen: v5e
topology: v5e:2x2
jax: 0.10.0
libtpu: 0.0.40
codegen_flags: <defaults>
</compile_context>

<pallas_src>
import functools
import math

import jax
import jax.numpy as jnp
from jax.experimental import pallas as pl
from jax.experimental.pallas import tpu as pltpu


def _layer_norm(x, a, b, eps=1e-6, approx=True):
    # Matches the torch module exactly: unbiased std (divide by N-1) and
    # normalization by (std + eps), i.e. a*(x-mean)/(std+eps)+b.
    n = x.shape[-1]
    mean = jnp.mean(x, axis=-1, keepdims=True)
    var = jnp.sum((x - mean) ** 2, axis=-1, keepdims=True) * (1.0 / (n - 1))
    inv = pl.reciprocal(jnp.sqrt(var) + eps, approx=approx)   # EUP slot
    return a * (x - mean) * inv + b


def _mm(a, b, compute_dtype):
    # (M, K) @ (K, N) on the MXU; operands optionally bf16, f32 accumulation.
    return jax.lax.dot_general(
        a.astype(compute_dtype), b.astype(compute_dtype),
        (((1,), (0,)), ((), ())),
        preferred_element_type=jnp.float32)


def _split_heads(x2d, n_head, d_k):
    # (T, H*d_k) -> (H, T, d_k) using ops with well-supported Mosaic
    # lowerings: a 2-D transpose, a leading-dim-split reshape (no relayout
    # when d_k % 8 == 0), and a batched minor-dim transpose.
    t = x2d.shape[0]
    xt = jnp.transpose(x2d)                    # (H*d_k, T)
    xt = xt.reshape(n_head, d_k, t)            # split leading dim
    return jnp.swapaxes(xt, -1, -2)            # (H, T, d_k)


def _merge_heads(ctx):
    # (H, T, d_k) -> (T, H*d_k); inverse of _split_heads.
    h, t, d_k = ctx.shape
    ctx_t = jnp.swapaxes(ctx, -1, -2)          # (H, d_k, T)
    return jnp.transpose(ctx_t.reshape(h * d_k, t))   # (T, D)


def attn_block_kernel(x_q_ref, x_full_ref,
                      ln1_a_ref, ln1_b_ref,
                      wq_ref, bq_ref, wkv_ref, bkv_ref,
                      wo_ref, bo_ref,
                      ln2_a_ref, ln2_b_ref,
                      w1_ref, b1_ref, w2_ref, b2_ref,
                      out_ref,
                      k_scr, v_scr,
                      *, n_head, d_k, kv_block, compute_dtype, approx):
    H, dk = n_head, d_k
    D = H * dk
    S = x_full_ref.shape[1]
    cdt = compute_dtype

    # ---- K/V for the full sequence: computed once per batch element (at
    # qi == 0) and cached in VMEM scratch for every q tile of that element. --
    @pl.when(pl.program_id(1) == 0)
    def _compute_kv():
        xf = x_full_ref[0]                                         # (S, D) f32
        hf = _layer_norm(xf, ln1_a_ref[...], ln1_b_ref[...], approx=approx)
        kv = _mm(hf, wkv_ref[...], cdt) + bkv_ref[...]             # (S, 2D) f32
        kv_h = _split_heads(kv, 2 * H, dk)                         # (2H, S, dk)
        k_scr[...] = kv_h[:H].astype(cdt)
        v_scr[...] = kv_h[H:].astype(cdt)

    # ---- sublayer[0] (q side): x + MHA(LayerNorm(x)) for this q tile -------
    xq = x_q_ref[0]                                                # (TQ, D)
    h1 = _layer_norm(xq, ln1_a_ref[...], ln1_b_ref[...], approx=approx)
    # 1/sqrt(d_k) is folded into wq/bq by the wrapper; no in-kernel scale.
    q2 = _mm(h1, wq_ref[...], cdt) + bq_ref[...]                   # (TQ, D)
    q = _split_heads(q2, H, dk).astype(cdt)                        # (H, TQ, dk)

    def scores(j):
        kj = k_scr[:, j * kv_block:(j + 1) * kv_block, :]          # (H, TKV, dk)
        return jax.lax.dot_general(                                # (H, TQ, TKV)
            q, kj, (((2,), (2,)), ((0,), (0,))),
            preferred_element_type=jnp.float32)

    def pv(p, j):
        vj = v_scr[:, j * kv_block:(j + 1) * kv_block, :]
        return jax.lax.dot_general(                                # (H, TQ, dk)
            p.astype(cdt), vj, (((2,), (1,)), ((0,), (0,))),
            preferred_element_type=jnp.float32)

    # Online softmax over kv tiles: peak live score tensor is (H, TQ, TKV),
    # never (H, S, S).
    n_kv = S // kv_block
    s0 = scores(0)
    m = jnp.max(s0, axis=-1, keepdims=True)                        # (H, TQ, 1)
    p0 = jnp.exp(s0 - m)
    l = jnp.sum(p0, axis=-1, keepdims=True)
    acc = pv(p0, 0)
    for j in range(1, n_kv):            # static trip count (trace-time unroll)
        sj = scores(j)
        m_new = jnp.maximum(m, jnp.max(sj, axis=-1, keepdims=True))
        alpha = jnp.exp(m - m_new)
        pj = jnp.exp(sj - m_new)
        l = alpha * l + jnp.sum(pj, axis=-1, keepdims=True)
        acc = alpha * acc + pv(pj, j)
        m = m_new
    ctx = acc * pl.reciprocal(l, approx=approx)                    # (H, TQ, dk)

    concat = _merge_heads(ctx)                                     # (TQ, D)
    attn_out = _mm(concat, wo_ref[...], cdt) + bo_ref[...]
    x1 = xq + attn_out

    # ---- sublayer[1]: x1 + FFN(LayerNorm(x1)) -------------------------------
    h2 = _layer_norm(x1, ln2_a_ref[...], ln2_b_ref[...], approx=approx)
    ff = jnp.maximum(_mm(h2, w1_ref[...], cdt) + b1_ref[...], 0.0)
    ff = _mm(ff, w2_ref[...], cdt) + b2_ref[...]
    out_ref[0] = (x1 + ff).astype(out_ref.dtype)


def _pick_block(total, target, multiple=8):
    blk = min(int(target), int(total))
    if blk <= 0 or total % blk != 0 or blk % multiple != 0:
        return int(total)
    return blk


def attn_block(x, p, *, n_head, compute_dtype=jnp.bfloat16,
               q_block=256, kv_block=512, approx_reciprocal=True):
    # TODO(synk): mask / layer_cache paths not implemented; dropout = identity.
    B, S, D = x.shape
    assert D % n_head == 0
    d_k = D // n_head
    F_dim = p["w1"].shape[1]

    q_blk = _pick_block(S, q_block)
    kv_blk = _pick_block(S, kv_block)
    n_q = S // q_blk

    w_dt = compute_dtype
    scale = 1.0 / math.sqrt(d_k)
    # Fold the attention scale into the Q projection (removes an H*S*S VPU mul).
    wq = (p["wq"] * scale).astype(w_dt)
    bq = (p["bq"] * scale).reshape(1, D)
    # K and V fused into one lane-dense (D, 2D) matmul.
    wkv = jnp.concatenate([p["wk"], p["wv"]], axis=1).astype(w_dt)
    bkv = jnp.concatenate([p["bk"], p["bv"]], axis=0).reshape(1, 2 * D)

    inputs = (
        x, x,                                   # q-tile view + full-seq view
        p["ln1_a"].reshape(1, D), p["ln1_b"].reshape(1, D),
        wq, bq, wkv, bkv,
        p["wo"].astype(w_dt), p["bo"].reshape(1, D),
        p["ln2_a"].reshape(1, D), p["ln2_b"].reshape(1, D),
        p["w1"].astype(w_dt), p["b1"].reshape(1, F_dim),
        p["w2"].astype(w_dt), p["b2"].reshape(1, D),
    )

    # Explicit VMEM budget (default scoped limits: 16/32/32 MiB on v5e/v6e/v7x).
    wbytes = jnp.dtype(w_dt).itemsize
    weight_bytes = (2 * D * D + D * 2 * D + D * F_dim + F_dim * D) * wbytes
    act_bytes = 4 * (
        2 * S * D + 4 * q_blk * D                  # x_full + x_q/out blocks
        + 2 * S * 2 * D                            # kv projection + relayout
        + 3 * n_head * q_blk * kv_blk              # score / prob tiles
        + 4 * q_blk * max(D, F_dim)                # q / ctx / ffn intermediates
    ) + 2 * n_head * S * d_k * wbytes              # k/v scratch cache
    vmem_limit = int(min(max(2 * (weight_bytes + act_bytes), 32 << 20),
                         100 << 20))

    kernel = functools.partial(
        attn_block_kernel, n_head=n_head, d_k=d_k, kv_block=kv_blk,
        compute_dtype=compute_dtype, approx=approx_reciprocal)

    def build(single_buffer_weights):
        def full(shape):
            im = lambda b, qi, n=len(shape): (0,) * n
            if single_buffer_weights:
                # Constant-index weights: single-buffer -> halves weight VMEM.
                return pl.BlockSpec(shape, im,
                                    pipeline_mode=pl.Buffered(buffer_count=1))
            return pl.BlockSpec(shape, im)

        return pl.pallas_call(
            kernel,
            out_shape=jax.ShapeDtypeStruct((B, S, D), x.dtype),
            grid_spec=pltpu.PrefetchScalarGridSpec(
                num_scalar_prefetch=0,
                grid=(B, n_q),
                in_specs=[
                    pl.BlockSpec((1, q_blk, D), lambda b, qi: (b, qi, 0)),
                    pl.BlockSpec((1, S, D), lambda b, qi: (b, 0, 0)),
                    full((1, D)), full((1, D)),
                    full((D, D)), full((1, D)),
                    full((D, 2 * D)), full((1, 2 * D)),
                    full((D, D)), full((1, D)),
                    full((1, D)), full((1, D)),
                    full((D, F_dim)), full((1, F_dim)),
                    full((F_dim, D)), full((1, D)),
                ],
                out_specs=pl.BlockSpec((1, q_blk, D), lambda b, qi: (b, qi, 0)),
                scratch_shapes=[pltpu.VMEM((n_head, S, d_k), w_dt),
                                pltpu.VMEM((n_head, S, d_k), w_dt)],
            ),
            compiler_params=pltpu.CompilerParams(
                dimension_semantics=("parallel", "arbitrary"),
                vmem_limit_bytes=vmem_limit),
        )

    if hasattr(pl, "Buffered"):
        try:
            return build(True)(*inputs)
        except Exception:
            # TODO(synk): pipeline_mode=pl.Buffered(1) not supported on this
            # JAX/Mosaic version -- fall back to default double buffering.
            pass
    return build(False)(*inputs)


# ---------------- pure-JAX reference (mirrors the PyTorch code) ------------
def ref_attn_block(x, p, *, n_head):
    D = x.shape[-1]
    d_k = D // n_head

    def ln(t, a, b, eps=1e-6):
        mean = t.mean(-1, keepdims=True)
        var = ((t - mean) ** 2).sum(-1, keepdims=True) / (t.shape[-1] - 1)
        return a * (t - mean) / (jnp.sqrt(var) + eps) + b

    def shape_heads(t):
        B, S, _ = t.shape
        return t.reshape(B, S, n_head, d_k).transpose(0, 2, 1, 3)

    h1 = ln(x, p["ln1_a"], p["ln1_b"])
    q = shape_heads(h1 @ p["wq"] + p["bq"])
    k = shape_heads(h1 @ p["wk"] + p["bk"])
    v = shape_heads(h1 @ p["wv"] + p["bv"])
    scores = jnp.einsum("bhqd,bhkd->bhqk", q, k) / math.sqrt(d_k)
    scores = jax.nn.softmax(scores, axis=-1)
    ctx = jnp.einsum("bhqk,bhkd->bhqd", scores, v)
    B, _, S, _ = ctx.shape
    concat = ctx.transpose(0, 2, 1, 3).reshape(B, S, D)
    x1 = x + concat @ p["wo"] + p["bo"]
    h2 = ln(x1, p["ln2_a"], p["ln2_b"])
    ff = jnp.maximum(h2 @ p["w1"] + p["b1"], 0.0) @ p["w2"] + p["b2"]
    return x1 + ff


if __name__ == "__main__":
    # Small deterministic shapes; q_block=8 / kv_block=8 give 2 q tiles and
    # 2 kv tiles so the online-softmax and KV-scratch paths are exercised.
    B, S, D, H, F_dim = 2, 16, 32, 4, 64      # batch, seq, d_model, heads, dim_ff

    key = jax.random.PRNGKey(0)
    keys = jax.random.split(key, 16)

    def init(k, shape, scale=0.05):
        return scale * jax.random.normal(k, shape, jnp.float32)

    params = {
        "ln1_a": jnp.ones((D,), jnp.float32),
        "ln1_b": jnp.zeros((D,), jnp.float32),
        "wq": init(keys[0], (D, D)), "bq": init(keys[1], (D,)),
        "wk": init(keys[2], (D, D)), "bk": init(keys[3], (D,)),
        "wv": init(keys[4], (D, D)), "bv": init(keys[5], (D,)),
        "wo": init(keys[6], (D, D)), "bo": init(keys[7], (D,)),
        "ln2_a": jnp.ones((D,), jnp.float32),
        "ln2_b": jnp.zeros((D,), jnp.float32),
        "w1": init(keys[8], (D, F_dim)), "b1": init(keys[9], (F_dim,)),
        "w2": init(keys[10], (F_dim, D)), "b2": init(keys[11], (D,)),
    }
    x = jax.random.normal(keys[12], (B, S, D), jnp.float32)

    y_ref = ref_attn_block(x, params, n_head=H)

    # Default path: bf16 matmul operands, f32 accumulation, tiled attention.
    y_bf16 = jax.block_until_ready(
        attn_block(x, params, n_head=H, q_block=8, kv_block=8))
    err_bf16 = float(jnp.max(jnp.abs(y_bf16 - y_ref)))
    assert jnp.allclose(y_bf16, y_ref, atol=5e-2, rtol=2e-2), \
        f"bf16 max_err={err_bf16}"

    # f32 matmul path (tight tolerance; only approx reciprocal differs).
    y_f32 = jax.block_until_ready(
        attn_block(x, params, n_head=H, compute_dtype=jnp.float32,
                   q_block=8, kv_block=8))
    err_f32 = float(jnp.max(jnp.abs(y_f32 - y_ref)))
    assert jnp.allclose(y_f32, y_ref, atol=5e-3, rtol=5e-3), \
        f"f32 max_err={err_f32}"

    print("KERNEL_OK")
</pallas_src>

<mosaic_0001>
module attributes {stable_mosaic.version = 11 : i64} {
  func.func @attn_block_kernel(%arg0: i32, %arg1: i32, %arg2: memref<1x8x32xf32, #tpu.memory_space<vmem>>, %arg3: memref<1x16x32xf32, #tpu.memory_space<vmem>>, %arg4: memref<1x32xf32, #tpu.memory_space<vmem>>, %arg5: memref<1x32xf32, #tpu.memory_space<vmem>>, %arg6: memref<32x32xbf16, #tpu.memory_space<vmem>>, %arg7: memref<1x32xf32, #tpu.memory_space<vmem>>, %arg8: memref<32x64xbf16, #tpu.memory_space<vmem>>, %arg9: memref<1x64xf32, #tpu.memory_space<vmem>>, %arg10: memref<32x32xbf16, #tpu.memory_space<vmem>>, %arg11: memref<1x32xf32, #tpu.memory_space<vmem>>, %arg12: memref<1x32xf32, #tpu.memory_space<vmem>>, %arg13: memref<1x32xf32, #tpu.memory_space<vmem>>, %arg14: memref<32x64xbf16, #tpu.memory_space<vmem>>, %arg15: memref<1x64xf32, #tpu.memory_space<vmem>>, %arg16: memref<64x32xbf16, #tpu.memory_space<vmem>>, %arg17: memref<1x32xf32, #tpu.memory_space<vmem>>, %arg18: memref<1x8x32xf32, #tpu.memory_space<vmem>>, %arg19: memref<4x16x8xbf16, #tpu.memory_space<vmem>>, %arg20: memref<4x16x8xbf16, #tpu.memory_space<vmem>>) attributes {dimension_semantics = [#tpu.dimension_semantics<parallel>, #tpu.dimension_semantics<arbitrary>], iteration_bounds = array<i64: 2, 2>, scalar_prefetch = 0 : i64, scratch_operands = 2 : i64, tpu.core_type = #tpu.core_type<tc>, window_params = [{transform_indices = @transform_0, window_bounds = array<i64: 1, 8, 32>}, {transform_indices = @transform_1, window_bounds = array<i64: 1, 16, 32>}, {pipeline_mode = #tpu.pipeline_mode<synchronous>, transform_indices = @transform_2, window_bounds = array<i64: 1, 32>}, {pipeline_mode = #tpu.pipeline_mode<synchronous>, transform_indices = @transform_3, window_bounds = array<i64: 1, 32>}, {pipeline_mode = #tpu.pipeline_mode<synchronous>, transform_indices = @transform_4, window_bounds = array<i64: 32, 32>}, {pipeline_mode = #tpu.pipeline_mode<synchronous>, transform_indices = @transform_5, window_bounds = array<i64: 1, 32>}, {pipeline_mode = #tpu.pipeline_mode<synchronous>, transform_indices = @transform_6, window_bounds = array<i64: 32, 64>}, {pipeline_mode = #tpu.pipeline_mode<synchronous>, transform_indices = @transform_7, window_bounds = array<i64: 1, 64>}, {pipeline_mode = #tpu.pipeline_mode<synchronous>, transform_indices = @transform_8, window_bounds = array<i64: 32, 32>}, {pipeline_mode = #tpu.pipeline_mode<synchronous>, transform_indices = @transform_9, window_bounds = array<i64: 1, 32>}, {pipeline_mode = #tpu.pipeline_mode<synchronous>, transform_indices = @transform_10, window_bounds = array<i64: 1, 32>}, {pipeline_mode = #tpu.pipeline_mode<synchronous>, transform_indices = @transform_11, window_bounds = array<i64: 1, 32>}, {pipeline_mode = #tpu.pipeline_mode<synchronous>, transform_indices = @transform_12, window_bounds = array<i64: 32, 64>}, {pipeline_mode = #tpu.pipeline_mode<synchronous>, transform_indices = @transform_13, window_bounds = array<i64: 1, 64>}, {pipeline_mode = #tpu.pipeline_mode<synchronous>, transform_indices = @transform_14, window_bounds = array<i64: 64, 32>}, {pipeline_mode = #tpu.pipeline_mode<synchronous>, transform_indices = @transform_15, window_bounds = array<i64: 1, 32>}, {transform_indices = @transform_16, window_bounds = array<i64: 1, 8, 32>}]} {
    %c0_i32 = arith.constant 0 : i32
    %0 = arith.cmpi eq, %arg1, %c0_i32 : i32
    %1 = arith.extui %0 : i1 to i32
    %c0_i32_0 = arith.constant 0 : i32
    %2 = arith.cmpi ne, %1, %c0_i32_0 : i32
    scf.if %2 {
      %c0_63 = arith.constant 0 : index
      %c0_64 = arith.constant 0 : index
      %c0_65 = arith.constant 0 : index
      %128 = vector.load %arg3[%c0_63, %c0_64, %c0_65] : memref<1x16x32xf32, #tpu.memory_space<vmem>>, vector<1x16x32xf32>
      %129 = vector.shape_cast %128 : vector<1x16x32xf32> to vector<16x32xf32>
      %c0_66 = arith.constant 0 : index
      %c0_67 = arith.constant 0 : index
      %130 = vector.load %arg4[%c0_66, %c0_67] : memref<1x32xf32, #tpu.memory_space<vmem>>, vector<1x32xf32>
      %c0_68 = arith.constant 0 : index
      %c0_69 = arith.constant 0 : index
      %131 = vector.load %arg5[%c0_68, %c0_69] : memref<1x32xf32, #tpu.memory_space<vmem>>, vector<1x32xf32>
      %cst_70 = arith.constant dense<0.000000e+00> : vector<16xf32>
      %132 = vector.multi_reduction <add>, %129, %cst_70 [1] : vector<16x32xf32> to vector<16xf32>
      %133 = vector.shape_cast %132 : vector<16xf32> to vector<16x1xf32>
      %cst_71 = arith.constant 3.200000e+01 : f32
      %134 = vector.broadcast %cst_71 : f32 to vector<16x1xf32>
      %135 = arith.divf %133, %134 : vector<16x1xf32>
      %136 = vector.broadcast %135 : vector<16x1xf32> to vector<16x32xf32>
      %137 = arith.subf %129, %136 : vector<16x32xf32>
      %138 = arith.mulf %137, %137 : vector<16x32xf32>
      %cst_72 = arith.constant dense<0.000000e+00> : vector<16xf32>
      %139 = vector.multi_reduction <add>, %138, %cst_72 [1] : vector<16x32xf32> to vector<16xf32>
      %140 = vector.shape_cast %139 : vector<16xf32> to vector<16x1xf32>
      %cst_73 = arith.constant 0.0322580636 : f32
      %141 = vector.broadcast %cst_73 : f32 to vector<16x1xf32>
      %142 = arith.mulf %140, %141 : vector<16x1xf32>
      %143 = math.sqrt %142 : vector<16x1xf32>
      %cst_74 = arith.constant 9.99999997E-7 : f32
      %144 = vector.broadcast %cst_74 : f32 to vector<16x1xf32>
      %145 = arith.addf %143, %144 : vector<16x1xf32>
      %146 = tpu.reciprocal %145 {approx = true} : vector<16x1xf32> -> vector<16x1xf32>
      %147 = vector.broadcast %135 : vector<16x1xf32> to vector<16x32xf32>
      %148 = arith.subf %129, %147 : vector<16x32xf32>
      %149 = vector.broadcast %130 : vector<1x32xf32> to vector<16x32xf32>
      %150 = arith.mulf %149, %148 : vector<16x32xf32>
      %151 = vector.broadcast %146 : vector<16x1xf32> to vector<16x32xf32>
      %152 = arith.mulf %150, %151 : vector<16x32xf32>
      %153 = vector.broadcast %131 : vector<1x32xf32> to vector<16x32xf32>
      %154 = arith.addf %152, %153 : vector<16x32xf32>
      %c0_75 = arith.constant 0 : index
      %c0_76 = arith.constant 0 : index
      %155 = vector.load %arg8[%c0_75, %c0_76] : memref<32x64xbf16, #tpu.memory_space<vmem>>, vector<32x64xbf16>
      %156 = arith.truncf %154 : vector<16x32xf32> to vector<16x32xbf16>
      %cst_77 = arith.constant dense<0.000000e+00> : vector<16x64xf32>
      %157 = tpu.matmul %156, %155, %cst_77 {dimension_numbers = #tpu.dot_dimension_numbers<[1], [0], [0], [1], [0, 0, 1, 1], [], []>} : vector<16x32xbf16>, vector<32x64xbf16>, vector<16x64xf32> -> vector<16x64xf32>
      %c0_78 = arith.constant 0 : index
      %c0_79 = arith.constant 0 : index
      %158 = vector.load %arg9[%c0_78, %c0_79] : memref<1x64xf32, #tpu.memory_space<vmem>>, vector<1x64xf32>
      %159 = vector.broadcast %158 : vector<1x64xf32> to vector<16x64xf32>
      %160 = arith.addf %157, %159 : vector<16x64xf32>
      %161 = tpu.transpose %160, [1, 0] : vector<16x64xf32> -> vector<64x16xf32>
      %162 = vector.shape_cast %161 : vector<64x16xf32> to vector<8x8x16xf32>
      %163 = tpu.transpose %162, [0, 2, 1] : vector<8x8x16xf32> -> vector<8x16x8xf32>
      %164 = vector.extract_strided_slice %163 {offsets = [0, 0, 0], sizes = [4, 16, 8], strides = [1, 1, 1]} : vector<8x16x8xf32> to vector<4x16x8xf32>
      %165 = arith.truncf %164 : vector<4x16x8xf32> to vector<4x16x8xbf16>
      %c0_80 = arith.constant 0 : index
      %c0_81 = arith.constant 0 : index
      %c0_82 = arith.constant 0 : index
      %166 = vector.load %arg19[%c0_80, %c0_81, %c0_82] : memref<4x16x8xbf16, #tpu.memory_space<vmem>>, vector<4x16x8xbf16>
      tpu.vector_store %arg19[%c0_80, %c0_81, %c0_82], %165 {strides = array<i32>} : memref<4x16x8xbf16, #tpu.memory_space<vmem>>, vector<4x16x8xbf16>,
      %167 = vector.extract_strided_slice %163 {offsets = [4, 0, 0], sizes = [4, 16, 8], strides = [1, 1, 1]} : vector<8x16x8xf32> to vector<4x16x8xf32>
      %168 = arith.truncf %167 : vector<4x16x8xf32> to vector<4x16x8xbf16>
      %c0_83 = arith.constant 0 : index
      %c0_84 = arith.constant 0 : index
      %c0_85 = arith.constant 0 : index
      %169 = vector.load %arg20[%c0_83, %c0_84, %c0_85] : memref<4x16x8xbf16, #tpu.memory_space<vmem>>, vector<4x16x8xbf16>
      tpu.vector_store %arg20[%c0_83, %c0_84, %c0_85], %168 {strides = array<i32>} : memref<4x16x8xbf16, #tpu.memory_space<vmem>>, vector<4x16x8xbf16>,
    } else {
    }
    %c0 = arith.constant 0 : index
    %c0_1 = arith.constant 0 : index
    %c0_2 = arith.constant 0 : index
    %3 = vector.load %arg2[%c0, %c0_1, %c0_2] : memref<1x8x32xf32, #tpu.memory_space<vmem>>, vector<1x8x32xf32>
    %4 = vector.shape_cast %3 : vector<1x8x32xf32> to vector<8x32xf32>
    %c0_3 = arith.constant 0 : index
    %c0_4 = arith.constant 0 : index
    %5 = vector.load %arg4[%c0_3, %c0_4] : memref<1x32xf32, #tpu.memory_space<vmem>>, vector<1x32xf32>
    %c0_5 = arith.constant 0 : index
    %c0_6 = arith.constant 0 : index
    %6 = vector.load %arg5[%c0_5, %c0_6] : memref<1x32xf32, #tpu.memory_space<vmem>>, vector<1x32xf32>
    %cst = arith.constant dense<0.000000e+00> : vector<8xf32>
    %7 = vector.multi_reduction <add>, %4, %cst [1] : vector<8x32xf32> to vector<8xf32>
    %8 = vector.shape_cast %7 : vector<8xf32> to vector<8x1xf32>
    %cst_7 = arith.constant 3.200000e+01 : f32
    %9 = vector.broadcast %cst_7 : f32 to vector<8x1xf32>
    %10 = arith.divf %8, %9 : vector<8x1xf32>
    %11 = vector.broadcast %10 : vector<8x1xf32> to vector<8x32xf32>
    %12 = arith.subf %4, %11 : vector<8x32xf32>
    %13 = arith.mulf %12, %12 : vector<8x32xf32>
    %cst_8 = arith.constant dense<0.000000e+00> : vector<8xf32>
    %14 = vector.multi_reduction <add>, %13, %cst_8 [1] : vector<8x32xf32> to vector<8xf32>
    %15 = vector.shape_cast %14 : vector<8xf32> to vector<8x1xf32>
    %cst_9 = arith.constant 0.0322580636 : f32
    %16 = vector.broadcast %cst_9 : f32 to vector<8x1xf32>
    %17 = arith.mulf %15, %16 : vector<8x1xf32>
    %18 = math.sqrt %17 : vector<8x1xf32>
    %cst_10 = arith.constant 9.99999997E-7 : f32
    %19 = vector.broadcast %cst_10 : f32 to vector<8x1xf32>
    %20 = arith.addf %18, %19 : vector<8x1xf32>
    %21 = tpu.reciprocal %20 {approx = true} : vector<8x1xf32> -> vector<8x1xf32>
    %22 = vector.broadcast %10 : vector<8x1xf32> to vector<8x32xf32>
    %23 = arith.subf %4, %22 : vector<8x32xf32>
    %24 = vector.broadcast %5 : vector<1x32xf32> to vector<8x32xf32>
    %25 = arith.mulf %24, %23 : vector<8x32xf32>
    %26 = vector.broadcast %21 : vector<8x1xf32> to vector<8x32xf32>
    %27 = arith.mulf %25, %26 : vector<8x32xf32>
    %28 = vector.broadcast %6 : vector<1x32xf32> to vector<8x32xf32>
    %29 = arith.addf %27, %28 : vector<8x32xf32>
    %c0_11 = arith.constant 0 : index
    %c0_12 = arith.constant 0 : index
    %30 = vector.load %arg6[%c0_11, %c0_12] : memref<32x32xbf16, #tpu.memory_space<vmem>>, vector<32x32xbf16>
    %31 = arith.truncf %29 : vector<8x32xf32> to vector<8x32xbf16>
    %cst_13 = arith.constant dense<0.000000e+00> : vector<8x32xf32>
    %32 = tpu.matmul %31, %30, %cst_13 {dimension_numbers = #tpu.dot_dimension_numbers<[1], [0], [0], [1], [0, 0, 1, 1], [], []>} : vector<8x32xbf16>, vector<32x32xbf16>, vector<8x32xf32> -> vector<8x32xf32>
    %c0_14 = arith.constant 0 : index
    %c0_15 = arith.constant 0 : index
    %33 = vector.load %arg7[%c0_14, %c0_15] : memref<1x32xf32, #tpu.memory_space<vmem>>, vector<1x32xf32>
    %34 = vector.broadcast %33 : vector<1x32xf32> to vector<8x32xf32>
    %35 = arith.addf %32, %34 : vector<8x32xf32>
    %36 = tpu.transpose %35, [1, 0] : vector<8x32xf32> -> vector<32x8xf32>
    %37 = vector.shape_cast %36 : vector<32x8xf32> to vector<4x8x8xf32>
    %38 = tpu.transpose %37, [0, 2, 1] : vector<4x8x8xf32> -> vector<4x8x8xf32>
    %39 = arith.truncf %38 : vector<4x8x8xf32> to vector<4x8x8xbf16>
    %c0_16 = arith.constant 0 : index
    %c0_17 = arith.constant 0 : index
    %c0_18 = arith.constant 0 : index
    %40 = vector.load %arg19[%c0_16, %c0_17, %c0_18] : memref<4x16x8xbf16, #tpu.memory_space<vmem>>, vector<4x8x8xbf16>
    %cst_19 = arith.constant dense<0.000000e+00> : vector<4x8x8xf32>
    %41 = tpu.matmul %39, %40, %cst_19 {dimension_numbers = #tpu.dot_dimension_numbers<[2], [2], [1], [1], [0, 0, 0, 1, 1, 1], [0], [0]>} : vector<4x8x8xbf16>, vector<4x8x8xbf16>, vector<4x8x8xf32> -> vector<4x8x8xf32>
    %cst_20 = arith.constant dense<0xFF800000> : vector<4x8xf32>
    %42 = vector.multi_reduction <maximumf>, %41, %cst_20 [2] : vector<4x8x8xf32> to vector<4x8xf32>
    %43 = vector.shape_cast %42 : vector<4x8xf32> to vector<4x8x1xf32>
    %44 = vector.broadcast %43 : vector<4x8x1xf32> to vector<4x8x8xf32>
    %45 = arith.subf %41, %44 : vector<4x8x8xf32>
    %46 = math.exp %45 : vector<4x8x8xf32>
    %cst_21 = arith.constant dense<0.000000e+00> : vector<4x8xf32>
    %47 = vector.multi_reduction <add>, %46, %cst_21 [2] : vector<4x8x8xf32> to vector<4x8xf32>
    %48 = vector.shape_cast %47 : vector<4x8xf32> to vector<4x8x1xf32>
    %c0_22 = arith.constant 0 : index
    %c0_23 = arith.constant 0 : index
    %c0_24 = arith.constant 0 : index
    %49 = vector.load %arg20[%c0_22, %c0_23, %c0_24] : memref<4x16x8xbf16, #tpu.memory_space<vmem>>, vector<4x8x8xbf16>
    %50 = arith.truncf %46 : vector<4x8x8xf32> to vector<4x8x8xbf16>
    %cst_25 = arith.constant dense<0.000000e+00> : vector<4x8x8xf32>
    %51 = tpu.matmul %50, %49, %cst_25 {dimension_numbers = #tpu.dot_dimension_numbers<[2], [1], [1], [2], [0, 0, 0, 1, 1, 2], [0], [0]>} : vector<4x8x8xbf16>, vector<4x8x8xbf16>, vector<4x8x8xf32> -> vector<4x8x8xf32>
    %c0_26 = arith.constant 0 : index
    %c8 = arith.constant 8 : index
    %c0_27 = arith.constant 0 : index
    %52 = vector.load %arg19[%c0_26, %c8, %c0_27] : memref<4x16x8xbf16, #tpu.memory_space<vmem>>, vector<4x8x8xbf16>
    %cst_28 = arith.constant dense<0.000000e+00> : vector<4x8x8xf32>
    %53 = tpu.matmul %39, %52, %cst_28 {dimension_numbers = #tpu.dot_dimension_numbers<[2], [2], [1], [1], [0, 0, 0, 1, 1, 1], [0], [0]>} : vector<4x8x8xbf16>, vector<4x8x8xbf16>, vector<4x8x8xf32> -> vector<4x8x8xf32>
    %cst_29 = arith.constant dense<0xFF800000> : vector<4x8xf32>
    %54 = vector.multi_reduction <maximumf>, %53, %cst_29 [2] : vector<4x8x8xf32> to vector<4x8xf32>
    %55 = vector.shape_cast %54 : vector<4x8xf32> to vector<4x8x1xf32>
    %56 = arith.maximumf %43, %55 : vector<4x8x1xf32>
    %57 = arith.subf %43, %56 : vector<4x8x1xf32>
    %58 = math.exp %57 : vector<4x8x1xf32>
    %59 = vector.broadcast %56 : vector<4x8x1xf32> to vector<4x8x8xf32>
    %60 = arith.subf %53, %59 : vector<4x8x8xf32>
    %61 = math.exp %60 : vector<4x8x8xf32>
    %62 = arith.mulf %58, %48 : vector<4x8x1xf32>
    %cst_30 = arith.constant dense<0.000000e+00> : vector<4x8xf32>
    %63 = vector.multi_reduction <add>, %61, %cst_30 [2] : vector<4x8x8xf32> to vector<4x8xf32>
    %64 = vector.shape_cast %63 : vector<4x8xf32> to vector<4x8x1xf32>
    %65 = arith.addf %62, %64 : vector<4x8x1xf32>
    %66 = vector.broadcast %58 : vector<4x8x1xf32> to vector<4x8x8xf32>
    %67 = arith.mulf %66, %51 : vector<4x8x8xf32>
    %c0_31 = arith.constant 0 : index
    %c8_32 = arith.constant 8 : index
    %c0_33 = arith.constant 0 : index
    %68 = vector.load %arg20[%c0_31, %c8_32, %c0_33] : memref<4x16x8xbf16, #tpu.memory_space<vmem>>, vector<4x8x8xbf16>
    %69 = arith.truncf %61 : vector<4x8x8xf32> to vector<4x8x8xbf16>
    %cst_34 = arith.constant dense<0.000000e+00> : vector<4x8x8xf32>
    %70 = tpu.matmul %69, %68, %cst_34 {dimension_numbers = #tpu.dot_dimension_numbers<[2], [1], [1], [2], [0, 0, 0, 1, 1, 2], [0], [0]>} : vector<4x8x8xbf16>, vector<4x8x8xbf16>, vector<4x8x8xf32> -> vector<4x8x8xf32>
    %71 = arith.addf %67, %70 : vector<4x8x8xf32>
    %72 = tpu.reciprocal %65 {approx = true} : vector<4x8x1xf32> -> vector<4x8x1xf32>
    %73 = vector.broadcast %72 : vector<4x8x1xf32> to vector<4x8x8xf32>
    %74 = arith.mulf %71, %73 : vector<4x8x8xf32>
    %75 = tpu.transpose %74, [0, 2, 1] : vector<4x8x8xf32> -> vector<4x8x8xf32>
    %76 = vector.shape_cast %75 : vector<4x8x8xf32> to vector<32x8xf32>
    %77 = tpu.transpose %76, [1, 0] : vector<32x8xf32> -> vector<8x32xf32>
    %c0_35 = arith.constant 0 : index
    %c0_36 = arith.constant 0 : index
    %78 = vector.load %arg10[%c0_35, %c0_36] : memref<32x32xbf16, #tpu.memory_space<vmem>>, vector<32x32xbf16>
    %79 = arith.truncf %77 : vector<8x32xf32> to vector<8x32xbf16>
    %cst_37 = arith.constant dense<0.000000e+00> : vector<8x32xf32>
    %80 = tpu.matmul %79, %78, %cst_37 {dimension_numbers = #tpu.dot_dimension_numbers<[1], [0], [0], [1], [0, 0, 1, 1], [], []>} : vector<8x32xbf16>, vector<32x32xbf16>, vector<8x32xf32> -> vector<8x32xf32>
    %c0_38 = arith.constant 0 : index
    %c0_39 = arith.constant 0 : index
    %81 = vector.load %arg11[%c0_38, %c0_39] : memref<1x32xf32, #tpu.memory_space<vmem>>, vector<1x32xf32>
    %82 = vector.broadcast %81 : vector<1x32xf32> to vector<8x32xf32>
    %83 = arith.addf %80, %82 : vector<8x32xf32>
    %84 = arith.addf %4, %83 : vector<8x32xf32>
    %c0_40 = arith.constant 0 : index
    %c0_41 = arith.constant 0 : index
    %85 = vector.load %arg12[%c0_40, %c0_41] : memref<1x32xf32, #tpu.memory_space<vmem>>, vector<1x32xf32>
    %c0_42 = arith.constant 0 : index
    %c0_43 = arith.constant 0 : index
    %86 = vector.load %arg13[%c0_42, %c0_43] : memref<1x32xf32, #tpu.memory_space<vmem>>, vector<1x32xf32>
    %cst_44 = arith.constant dense<0.000000e+00> : vector<8xf32>
    %87 = vector.multi_reduction <add>, %84, %cst_44 [1] : vector<8x32xf32> to vector<8xf32>
    %88 = vector.shape_cast %87 : vector<8xf32> to vector<8x1xf32>
    %cst_45 = arith.constant 3.200000e+01 : f32
    %89 = vector.broadcast %cst_45 : f32 to vector<8x1xf32>
    %90 = arith.divf %88, %89 : vector<8x1xf32>
    %91 = vector.broadcast %90 : vector<8x1xf32> to vector<8x32xf32>
    %92 = arith.subf %84, %91 : vector<8x32xf32>
    %93 = arith.mulf %92, %92 : vector<8x32xf32>
    %cst_46 = arith.constant dense<0.000000e+00> : vector<8xf32>
    %94 = vector.multi_reduction <add>, %93, %cst_46 [1] : vector<8x32xf32> to vector<8xf32>
    %95 = vector.shape_cast %94 : vector<8xf32> to vector<8x1xf32>
    %cst_47 = arith.constant 0.0322580636 : f32
    %96 = vector.broadcast %cst_47 : f32 to vector<8x1xf32>
    %97 = arith.mulf %95, %96 : vector<8x1xf32>
    %98 = math.sqrt %97 : vector<8x1xf32>
    %cst_48 = arith.constant 9.99999997E-7 : f32
    %99 = vector.broadcast %cst_48 : f32 to vector<8x1xf32>
    %100 = arith.addf %98, %99 : vector<8x1xf32>
    %101 = tpu.reciprocal %100 {approx = true} : vector<8x1xf32> -> vector<8x1xf32>
    %102 = vector.broadcast %90 : vector<8x1xf32> to vector<8x32xf32>
    %103 = arith.subf %84, %102 : vector<8x32xf32>
    %104 = vector.broadcast %85 : vector<1x32xf32> to vector<8x32xf32>
    %105 = arith.mulf %104, %103 : vector<8x32xf32>
    %106 = vector.broadcast %101 : vector<8x1xf32> to vector<8x32xf32>
    %107 = arith.mulf %105, %106 : vector<8x32xf32>
    %108 = vector.broadcast %86 : vector<1x32xf32> to vector<8x32xf32>
    %109 = arith.addf %107, %108 : vector<8x32xf32>
    %c0_49 = arith.constant 0 : index
    %c0_50 = arith.constant 0 : index
    %110 = vector.load %arg14[%c0_49, %c0_50] : memref<32x64xbf16, #tpu.memory_space<vmem>>, vector<32x64xbf16>
    %111 = arith.truncf %109 : vector<8x32xf32> to vector<8x32xbf16>
    %cst_51 = arith.constant dense<0.000000e+00> : vector<8x64xf32>
    %112 = tpu.matmul %111, %110, %cst_51 {dimension_numbers = #tpu.dot_dimension_numbers<[1], [0], [0], [1], [0, 0, 1, 1], [], []>} : vector<8x32xbf16>, vector<32x64xbf16>, vector<8x64xf32> -> vector<8x64xf32>
    %c0_52 = arith.constant 0 : index
    %c0_53 = arith.constant 0 : index
    %113 = vector.load %arg15[%c0_52, %c0_53] : memref<1x64xf32, #tpu.memory_space<vmem>>, vector<1x64xf32>
    %114 = vector.broadcast %113 : vector<1x64xf32> to vector<8x64xf32>
    %115 = arith.addf %112, %114 : vector<8x64xf32>
    %cst_54 = arith.constant 0.000000e+00 : f32
    %116 = vector.broadcast %cst_54 : f32 to vector<8x64xf32>
    %117 = arith.maximumf %115, %116 : vector<8x64xf32>
    %c0_55 = arith.constant 0 : index
    %c0_56 = arith.constant 0 : index
    %118 = vector.load %arg16[%c0_55, %c0_56] : memref<64x32xbf16, #tpu.memory_space<vmem>>, vector<64x32xbf16>
    %119 = arith.truncf %117 : vector<8x64xf32> to vector<8x64xbf16>
    %cst_57 = arith.constant dense<0.000000e+00> : vector<8x32xf32>
    %120 = tpu.matmul %119, %118, %cst_57 {dimension_numbers = #tpu.dot_dimension_numbers<[1], [0], [0], [1], [0, 0, 1, 1], [], []>} : vector<8x64xbf16>, vector<64x32xbf16>, vector<8x32xf32> -> vector<8x32xf32>
    %c0_58 = arith.constant 0 : index
    %c0_59 = arith.constant 0 : index
    %121 = vector.load %arg17[%c0_58, %c0_59] : memref<1x32xf32, #tpu.memory_space<vmem>>, vector<1x32xf32>
    %122 = vector.broadcast %121 : vector<1x32xf32> to vector<8x32xf32>
    %123 = arith.addf %120, %122 : vector<8x32xf32>
    %124 = arith.addf %84, %123 : vector<8x32xf32>
    %c0_60 = arith.constant 0 : index
    %c0_61 = arith.constant 0 : index
    %c0_62 = arith.constant 0 : index
    %125 = vector.load %arg18[%c0_60, %c0_61, %c0_62] : memref<1x8x32xf32, #tpu.memory_space<vmem>>, vector<1x8x32xf32>
    %126 = vector.shape_cast %125 : vector<1x8x32xf32> to vector<8x32xf32>
    %127 = vector.shape_cast %124 : vector<8x32xf32> to vector<1x8x32xf32>
    tpu.vector_store %arg18[%c0_60, %c0_61, %c0_62], %127 {strides = array<i32>} : memref<1x8x32xf32, #tpu.memory_space<vmem>>, vector<1x8x32xf32>,
    return
  }
  func.func @transform_0(%arg0: i32, %arg1: i32) -> (i32, i32, i32) {
    %c0_i32 = arith.constant 0 : i32
    %c0_i32_0 = arith.constant 0 : i32
    return %arg0, %arg1, %c0_i32 : i32, i32, i32
  }
  func.func @transform_1(%arg0: i32, %arg1: i32) -> (i32, i32, i32) {
    %c0_i32 = arith.constant 0 : i32
    %c0_i32_0 = arith.constant 0 : i32
    %c0_i32_1 = arith.constant 0 : i32
    return %arg0, %c0_i32, %c0_i32_0 : i32, i32, i32
  }
  func.func @transform_2(%arg0: i32, %arg1: i32) -> (i32, i32) {
    %c0_i32 = arith.constant 0 : i32
    %c0_i32_0 = arith.constant 0 : i32
    %c0_i32_1 = arith.constant 0 : i32
    return %c0_i32, %c0_i32_0 : i32, i32
  }
  func.func @transform_3(%arg0: i32, %arg1: i32) -> (i32, i32) {
    %c0_i32 = arith.constant 0 : i32
    %c0_i32_0 = arith.constant 0 : i32
    %c0_i32_1 = arith.constant 0 : i32
    return %c0_i32, %c0_i32_0 : i32, i32
  }
  func.func @transform_4(%arg0: i32, %arg1: i32) -> (i32, i32) {
    %c0_i32 = arith.constant 0 : i32
    %c0_i32_0 = arith.constant 0 : i32
    %c0_i32_1 = arith.constant 0 : i32
    return %c0_i32, %c0_i32_0 : i32, i32
  }
  func.func @transform_5(%arg0: i32, %arg1: i32) -> (i32, i32) {
    %c0_i32 = arith.constant 0 : i32
    %c0_i32_0 = arith.constant 0 : i32
    %c0_i32_1 = arith.constant 0 : i32
    return %c0_i32, %c0_i32_0 : i32, i32
  }
  func.func @transform_6(%arg0: i32, %arg1: i32) -> (i32, i32) {
    %c0_i32 = arith.constant 0 : i32
    %c0_i32_0 = arith.constant 0 : i32
    %c0_i32_1 = arith.constant 0 : i32
    return %c0_i32, %c0_i32_0 : i32, i32
  }
  func.func @transform_7(%arg0: i32, %arg1: i32) -> (i32, i32) {
    %c0_i32 = arith.constant 0 : i32
    %c0_i32_0 = arith.constant 0 : i32
    %c0_i32_1 = arith.constant 0 : i32
    return %c0_i32, %c0_i32_0 : i32, i32
  }
  func.func @transform_8(%arg0: i32, %arg1: i32) -> (i32, i32) {
    %c0_i32 = arith.constant 0 : i32
    %c0_i32_0 = arith.constant 0 : i32
    %c0_i32_1 = arith.constant 0 : i32
    return %c0_i32, %c0_i32_0 : i32, i32
  }
  func.func @transform_9(%arg0: i32, %arg1: i32) -> (i32, i32) {
    %c0_i32 = arith.constant 0 : i32
    %c0_i32_0 = arith.constant 0 : i32
    %c0_i32_1 = arith.constant 0 : i32
    return %c0_i32, %c0_i32_0 : i32, i32
  }
  func.func @transform_10(%arg0: i32, %arg1: i32) -> (i32, i32) {
    %c0_i32 = arith.constant 0 : i32
    %c0_i32_0 = arith.constant 0 : i32
    %c0_i32_1 = arith.constant 0 : i32
    return %c0_i32, %c0_i32_0 : i32, i32
  }
  func.func @transform_11(%arg0: i32, %arg1: i32) -> (i32, i32) {
    %c0_i32 = arith.constant 0 : i32
    %c0_i32_0 = arith.constant 0 : i32
    %c0_i32_1 = arith.constant 0 : i32
    return %c0_i32, %c0_i32_0 : i32, i32
  }
  func.func @transform_12(%arg0: i32, %arg1: i32) -> (i32, i32) {
    %c0_i32 = arith.constant 0 : i32
    %c0_i32_0 = arith.constant 0 : i32
    %c0_i32_1 = arith.constant 0 : i32
    return %c0_i32, %c0_i32_0 : i32, i32
  }
  func.func @transform_13(%arg0: i32, %arg1: i32) -> (i32, i32) {
    %c0_i32 = arith.constant 0 : i32
    %c0_i32_0 = arith.constant 0 : i32
    %c0_i32_1 = arith.constant 0 : i32
    return %c0_i32, %c0_i32_0 : i32, i32
  }
  func.func @transform_14(%arg0: i32, %arg1: i32) -> (i32, i32) {
    %c0_i32 = arith.constant 0 : i32
    %c0_i32_0 = arith.constant 0 : i32
    %c0_i32_1 = arith.constant 0 : i32
    return %c0_i32, %c0_i32_0 : i32, i32
  }
  func.func @transform_15(%arg0: i32, %arg1: i32) -> (i32, i32) {
    %c0_i32 = arith.constant 0 : i32
    %c0_i32_0 = arith.constant 0 : i32
    %c0_i32_1 = arith.constant 0 : i32
    return %c0_i32, %c0_i32_0 : i32, i32
  }
  func.func @transform_16(%arg0: i32, %arg1: i32) -> (i32, i32, i32) {
    %c0_i32 = arith.constant 0 : i32
    %c0_i32_0 = arith.constant 0 : i32
    return %arg0, %arg1, %c0_i32 : i32, i32, i32
  }
}

module attributes {stable_mosaic.version = 11 : i64} {
  func.func @attn_block_kernel(%arg0: i32, %arg1: i32, %arg2: memref<1x8x32xf32, #tpu.memory_space<vmem>>, %arg3: memref<1x16x32xf32, #tpu.memory_space<vmem>>, %arg4: memref<1x32xf32, #tpu.memory_space<vmem>>, %arg5: memref<1x32xf32, #tpu.memory_space<vmem>>, %arg6: memref<32x32xbf16, #tpu.memory_space<vmem>>, %arg7: memref<1x32xf32, #tpu.memory_space<vmem>>, %arg8: memref<32x64xbf16, #tpu.memory_space<vmem>>, %arg9: memref<1x64xf32, #tpu.memory_space<vmem>>, %arg10: memref<32x32xbf16, #tpu.memory_space<vmem>>, %arg11: memref<1x32xf32, #tpu.memory_space<vmem>>, %arg12: memref<1x32xf32, #tpu.memory_space<vmem>>, %arg13: memref<1x32xf32, #tpu.memory_space<vmem>>, %arg14: memref<32x64xbf16, #tpu.memory_space<vmem>>, %arg15: memref<1x64xf32, #tpu.memory_space<vmem>>, %arg16: memref<64x32xbf16, #tpu.memory_space<vmem>>, %arg17: memref<1x32xf32, #tpu.memory_space<vmem>>, %arg18: memref<1x8x32xf32, #tpu.memory_space<vmem>>, %arg19: memref<4x16x8xbf16, #tpu.memory_space<vmem>>, %arg20: memref<4x16x8xbf16, #tpu.memory_space<vmem>>) attributes {dimension_semantics = [#tpu.dimension_semantics<parallel>, #tpu.dimension_semantics<arbitrary>], iteration_bounds = array<i64: 2, 2>, scalar_prefetch = 0 : i64, scratch_operands = 2 : i64, tpu.core_type = #tpu.core_type<tc>, window_params = [{transform_indices = @transform_0, window_bounds = array<i64: 1, 8, 32>}, {transform_indices = @transform_1, window_bounds = array<i64: 1, 16, 32>}, {pipeline_mode = #tpu.pipeline_mode<synchronous>, transform_indices = @transform_2, window_bounds = array<i64: 1, 32>}, {pipeline_mode = #tpu.pipeline_mode<synchronous>, transform_indices = @transform_3, window_bounds = array<i64: 1, 32>}, {pipeline_mode = #tpu.pipeline_mode<synchronous>, transform_indices = @transform_4, window_bounds = array<i64: 32, 32>}, {pipeline_mode = #tpu.pipeline_mode<synchronous>, transform_indices = @transform_5, window_bounds = array<i64: 1, 32>}, {pipeline_mode = #tpu.pipeline_mode<synchronous>, transform_indices = @transform_6, window_bounds = array<i64: 32, 64>}, {pipeline_mode = #tpu.pipeline_mode<synchronous>, transform_indices = @transform_7, window_bounds = array<i64: 1, 64>}, {pipeline_mode = #tpu.pipeline_mode<synchronous>, transform_indices = @transform_8, window_bounds = array<i64: 32, 32>}, {pipeline_mode = #tpu.pipeline_mode<synchronous>, transform_indices = @transform_9, window_bounds = array<i64: 1, 32>}, {pipeline_mode = #tpu.pipeline_mode<synchronous>, transform_indices = @transform_10, window_bounds = array<i64: 1, 32>}, {pipeline_mode = #tpu.pipeline_mode<synchronous>, transform_indices = @transform_11, window_bounds = array<i64: 1, 32>}, {pipeline_mode = #tpu.pipeline_mode<synchronous>, transform_indices = @transform_12, window_bounds = array<i64: 32, 64>}, {pipeline_mode = #tpu.pipeline_mode<synchronous>, transform_indices = @transform_13, window_bounds = array<i64: 1, 64>}, {pipeline_mode = #tpu.pipeline_mode<synchronous>, transform_indices = @transform_14, window_bounds = array<i64: 64, 32>}, {pipeline_mode = #tpu.pipeline_mode<synchronous>, transform_indices = @transform_15, window_bounds = array<i64: 1, 32>}, {transform_indices = @transform_16, window_bounds = array<i64: 1, 8, 32>}]} {
    %c0_i32 = arith.constant 0 : i32
    %0 = arith.cmpi eq, %arg1, %c0_i32 : i32
    %1 = arith.extui %0 : i1 to i32
    %c0_i32_0 = arith.constant 0 : i32
    %2 = arith.cmpi ne, %1, %c0_i32_0 : i32
    scf.if %2 {
      %c0_63 = arith.constant 0 : index
      %c0_64 = arith.constant 0 : index
      %c0_65 = arith.constant 0 : index
      %128 = vector.load %arg3[%c0_63, %c0_64, %c0_65] : memref<1x16x32xf32, #tpu.memory_space<vmem>>, vector<1x16x32xf32>
      %129 = vector.shape_cast %128 : vector<1x16x32xf32> to vector<16x32xf32>
      %c0_66 = arith.constant 0 : index
      %c0_67 = arith.constant 0 : index
      %130 = vector.load %arg4[%c0_66, %c0_67] : memref<1x32xf32, #tpu.memory_space<vmem>>, vector<1x32xf32>
      %c0_68 = arith.constant 0 : index
      %c0_69 = arith.constant 0 : index
      %131 = vector.load %arg5[%c0_68, %c0_69] : memref<1x32xf32, #tpu.memory_space<vmem>>, vector<1x32xf32>
      %cst_70 = arith.constant dense<0.000000e+00> : vector<16xf32>
      %132 = vector.multi_reduction <add>, %129, %cst_70 [1] : vector<16x32xf32> to vector<16xf32>
      %133 = vector.shape_cast %132 : vector<16xf32> to vector<16x1xf32>
      %cst_71 = arith.constant 3.200000e+01 : f32
      %134 = vector.broadcast %cst_71 : f32 to vector<16x1xf32>
      %135 = arith.divf %133, %134 : vector<16x1xf32>
      %136 = vector.broadcast %135 : vector<16x1xf32> to vector<16x32xf32>
      %137 = arith.subf %129, %136 : vector<16x32xf32>
      %138 = arith.mulf %137, %137 : vector<16x32xf32>
      %cst_72 = arith.constant dense<0.000000e+00> : vector<16xf32>
      %139 = vector.multi_reduction <add>, %138, %cst_72 [1] : vector<16x32xf32> to vector<16xf32>
      %140 = vector.shape_cast %139 : vector<16xf32> to vector<16x1xf32>
      %cst_73 = arith.constant 0.0322580636 : f32
      %141 = vector.broadcast %cst_73 : f32 to vector<16x1xf32>
      %142 = arith.mulf %140, %141 : vector<16x1xf32>
      %143 = math.sqrt %142 : vector<16x1xf32>
      %cst_74 = arith.constant 9.99999997E-7 : f32
      %144 = vector.broadcast %cst_74 : f32 to vector<16x1xf32>
      %145 = arith.addf %143, %144 : vector<16x1xf32>
      %146 = tpu.reciprocal %145 {approx = true} : vector<16x1xf32> -> vector<16x1xf32>
      %147 = vector.broadcast %135 : vector<16x1xf32> to vector<16x32xf32>
      %148 = arith.subf %129, %147 : vector<16x32xf32>
      %149 = vector.broadcast %130 : vector<1x32xf32> to vector<16x32xf32>
      %150 = arith.mulf %149, %148 : vector<16x32xf32>
      %151 = vector.broadcast %146 : vector<16x1xf32> to vector<16x32xf32>
      %152 = arith.mulf %150, %151 : vector<16x32xf32>
      %153 = vector.broadcast %131 : vector<1x32xf32> to vector<16x32xf32>
      %154 = arith.addf %152, %153 : vector<16x32xf32>
      %c0_75 = arith.constant 0 : index
      %c0_76 = arith.constant 0 : index
      %155 = vector.load %arg8[%c0_75, %c0_76] : memref<32x64xbf16, #tpu.memory_space<vmem>>, vector<32x64xbf16>
      %156 = arith.truncf %154 : vector<16x32xf32> to vector<16x32xbf16>
      %cst_77 = arith.constant dense<0.000000e+00> : vector<16x64xf32>
      %157 = tpu.matmul %156, %155, %cst_77 {dimension_numbers = #tpu.dot_dimension_numbers<[1], [0], [0], [1], [0, 0, 1, 1], [], []>} : vector<16x32xbf16>, vector<32x64xbf16>, vector<16x64xf32> -> vector<16x64xf32>
      %c0_78 = arith.constant 0 : index
      %c0_79 = arith.constant 0 : index
      %158 = vector.load %arg9[%c0_78, %c0_79] : memref<1x64xf32, #tpu.memory_space<vmem>>, vector<1x64xf32>
      %159 = vector.broadcast %158 : vector<1x64xf32> to vector<16x64xf32>
      %160 = arith.addf %157, %159 : vector<16x64xf32>
      %161 = tpu.transpose %160, [1, 0] : vector<16x64xf32> -> vector<64x16xf32>
      %162 = vector.shape_cast %161 : vector<64x16xf32> to vector<8x8x16xf32>
      %163 = tpu.transpose %162, [0, 2, 1] : vector<8x8x16xf32> -> vector<8x16x8xf32>
      %164 = vector.extract_strided_slice %163 {offsets = [0, 0, 0], sizes = [4, 16, 8], strides = [1, 1, 1]} : vector<8x16x8xf32> to vector<4x16x8xf32>
      %165 = arith.truncf %164 : vector<4x16x8xf32> to vector<4x16x8xbf16>
      %c0_80 = arith.constant 0 : index
      %c0_81 = arith.constant 0 : index
      %c0_82 = arith.constant 0 : index
      %166 = vector.load %arg19[%c0_80, %c0_81, %c0_82] : memref<4x16x8xbf16, #tpu.memory_space<vmem>>, vector<4x16x8xbf16>
      tpu.vector_store %arg19[%c0_80, %c0_81, %c0_82], %165 {strides = array<i32>} : memref<4x16x8xbf16, #tpu.memory_space<vmem>>, vector<4x16x8xbf16>,
      %167 = vector.extract_strided_slice %163 {offsets = [4, 0, 0], sizes = [4, 16, 8], strides = [1, 1, 1]} : vector<8x16x8xf32> to vector<4x16x8xf32>
      %168 = arith.truncf %167 : vector<4x16x8xf32> to vector<4x16x8xbf16>
      %c0_83 = arith.constant 0 : index
      %c0_84 = arith.constant 0 : index
      %c0_85 = arith.constant 0 : index
      %169 = vector.load %arg20[%c0_83, %c0_84, %c0_85] : memref<4x16x8xbf16, #tpu.memory_space<vmem>>, vector<4x16x8xbf16>
      tpu.vector_store %arg20[%c0_83, %c0_84, %c0_85], %168 {strides = array<i32>} : memref<4x16x8xbf16, #tpu.memory_space<vmem>>, vector<4x16x8xbf16>,
    } else {
    }
    %c0 = arith.constant 0 : index
    %c0_1 = arith.constant 0 : index
    %c0_2 = arith.constant 0 : index
    %3 = vector.load %arg2[%c0, %c0_1, %c0_2] : memref<1x8x32xf32, #tpu.memory_space<vmem>>, vector<1x8x32xf32>
    %4 = vector.shape_cast %3 : vector<1x8x32xf32> to vector<8x32xf32>
    %c0_3 = arith.constant 0 : index
    %c0_4 = arith.constant 0 : index
    %5 = vector.load %arg4[%c0_3, %c0_4] : memref<1x32xf32, #tpu.memory_space<vmem>>, vector<1x32xf32>
    %c0_5 = arith.constant 0 : index
    %c0_6 = arith.constant 0 : index
    %6 = vector.load %arg5[%c0_5, %c0_6] : memref<1x32xf32, #tpu.memory_space<vmem>>, vector<1x32xf32>
    %cst = arith.constant dense<0.000000e+00> : vector<8xf32>
    %7 = vector.multi_reduction <add>, %4, %cst [1] : vector<8x32xf32> to vector<8xf32>
    %8 = vector.shape_cast %7 : vector<8xf32> to vector<8x1xf32>
    %cst_7 = arith.constant 3.200000e+01 : f32
    %9 = vector.broadcast %cst_7 : f32 to vector<8x1xf32>
    %10 = arith.divf %8, %9 : vector<8x1xf32>
    %11 = vector.broadcast %10 : vector<8x1xf32> to vector<8x32xf32>
    %12 = arith.subf %4, %11 : vector<8x32xf32>
    %13 = arith.mulf %12, %12 : vector<8x32xf32>
    %cst_8 = arith.constant dense<0.000000e+00> : vector<8xf32>
    %14 = vector.multi_reduction <add>, %13, %cst_8 [1] : vector<8x32xf32> to vector<8xf32>
    %15 = vector.shape_cast %14 : vector<8xf32> to vector<8x1xf32>
    %cst_9 = arith.constant 0.0322580636 : f32
    %16 = vector.broadcast %cst_9 : f32 to vector<8x1xf32>
    %17 = arith.mulf %15, %16 : vector<8x1xf32>
    %18 = math.sqrt %17 : vector<8x1xf32>
    %cst_10 = arith.constant 9.99999997E-7 : f32
    %19 = vector.broadcast %cst_10 : f32 to vector<8x1xf32>
    %20 = arith.addf %18, %19 : vector<8x1xf32>
    %21 = tpu.reciprocal %20 {approx = true} : vector<8x1xf32> -> vector<8x1xf32>
    %22 = vector.broadcast %10 : vector<8x1xf32> to vector<8x32xf32>
    %23 = arith.subf %4, %22 : vector<8x32xf32>
    %24 = vector.broadcast %5 : vector<1x32xf32> to vector<8x32xf32>
    %25 = arith.mulf %24, %23 : vector<8x32xf32>
    %26 = vector.broadcast %21 : vector<8x1xf32> to vector<8x32xf32>
    %27 = arith.mulf %25, %26 : vector<8x32xf32>
    %28 = vector.broadcast %6 : vector<1x32xf32> to vector<8x32xf32>
    %29 = arith.addf %27, %28 : vector<8x32xf32>
    %c0_11 = arith.constant 0 : index
    %c0_12 = arith.constant 0 : index
    %30 = vector.load %arg6[%c0_11, %c0_12] : memref<32x32xbf16, #tpu.memory_space<vmem>>, vector<32x32xbf16>
    %31 = arith.truncf %29 : vector<8x32xf32> to vector<8x32xbf16>
    %cst_13 = arith.constant dense<0.000000e+00> : vector<8x32xf32>
    %32 = tpu.matmul %31, %30, %cst_13 {dimension_numbers = #tpu.dot_dimension_numbers<[1], [0], [0], [1], [0, 0, 1, 1], [], []>} : vector<8x32xbf16>, vector<32x32xbf16>, vector<8x32xf32> -> vector<8x32xf32>
    %c0_14 = arith.constant 0 : index
    %c0_15 = arith.constant 0 : index
    %33 = vector.load %arg7[%c0_14, %c0_15] : memref<1x32xf32, #tpu.memory_space<vmem>>, vector<1x32xf32>
    %34 = vector.broadcast %33 : vector<1x32xf32> to vector<8x32xf32>
    %35 = arith.addf %32, %34 : vector<8x32xf32>
    %36 = tpu.transpose %35, [1, 0] : vector<8x32xf32> -> vector<32x8xf32>
    %37 = vector.shape_cast %36 : vector<32x8xf32> to vector<4x8x8xf32>
    %38 = tpu.transpose %37, [0, 2, 1] : vector<4x8x8xf32> -> vector<4x8x8xf32>
    %39 = arith.truncf %38 : vector<4x8x8xf32> to vector<4x8x8xbf16>
    %c0_16 = arith.constant 0 : index
    %c0_17 = arith.constant 0 : index
    %c0_18 = arith.constant 0 : index
    %40 = vector.load %arg19[%c0_16, %c0_17, %c0_18] : memref<4x16x8xbf16, #tpu.memory_space<vmem>>, vector<4x8x8xbf16>
    %cst_19 = arith.constant dense<0.000000e+00> : vector<4x8x8xf32>
    %41 = tpu.matmul %39, %40, %cst_19 {dimension_numbers = #tpu.dot_dimension_numbers<[2], [2], [1], [1], [0, 0, 0, 1, 1, 1], [0], [0]>} : vector<4x8x8xbf16>, vector<4x8x8xbf16>, vector<4x8x8xf32> -> vector<4x8x8xf32>
    %cst_20 = arith.constant dense<0xFF800000> : vector<4x8xf32>
    %42 = vector.multi_reduction <maximumf>, %41, %cst_20 [2] : vector<4x8x8xf32> to vector<4x8xf32>
    %43 = vector.shape_cast %42 : vector<4x8xf32> to vector<4x8x1xf32>
    %44 = vector.broadcast %43 : vector<4x8x1xf32> to vector<4x8x8xf32>
    %45 = arith.subf %41, %44 : vector<4x8x8xf32>
    %46 = math.exp %45 : vector<4x8x8xf32>
    %cst_21 = arith.constant dense<0.000000e+00> : vector<4x8xf32>
    %47 = vector.multi_reduction <add>, %46, %cst_21 [2] : vector<4x8x8xf32> to vector<4x8xf32>
    %48 = vector.shape_cast %47 : vector<4x8xf32> to vector<4x8x1xf32>
    %c0_22 = arith.constant 0 : index
    %c0_23 = arith.constant 0 : index
    %c0_24 = arith.constant 0 : index
    %49 = vector.load %arg20[%c0_22, %c0_23, %c0_24] : memref<4x16x8xbf16, #tpu.memory_space<vmem>>, vector<4x8x8xbf16>
    %50 = arith.truncf %46 : vector<4x8x8xf32> to vector<4x8x8xbf16>
    %cst_25 = arith.constant dense<0.000000e+00> : vector<4x8x8xf32>
    %51 = tpu.matmul %50, %49, %cst_25 {dimension_numbers = #tpu.dot_dimension_numbers<[2], [1], [1], [2], [0, 0, 0, 1, 1, 2], [0], [0]>} : vector<4x8x8xbf16>, vector<4x8x8xbf16>, vector<4x8x8xf32> -> vector<4x8x8xf32>
    %c0_26 = arith.constant 0 : index
    %c8 = arith.constant 8 : index
    %c0_27 = arith.constant 0 : index
    %52 = vector.load %arg19[%c0_26, %c8, %c0_27] : memref<4x16x8xbf16, #tpu.memory_space<vmem>>, vector<4x8x8xbf16>
    %cst_28 = arith.constant dense<0.000000e+00> : vector<4x8x8xf32>
    %53 = tpu.matmul %39, %52, %cst_28 {dimension_numbers = #tpu.dot_dimension_numbers<[2], [2], [1], [1], [0, 0, 0, 1, 1, 1], [0], [0]>} : vector<4x8x8xbf16>, vector<4x8x8xbf16>, vector<4x8x8xf32> -> vector<4x8x8xf32>
    %cst_29 = arith.constant dense<0xFF800000> : vector<4x8xf32>
    %54 = vector.multi_reduction <maximumf>, %53, %cst_29 [2] : vector<4x8x8xf32> to vector<4x8xf32>
    %55 = vector.shape_cast %54 : vector<4x8xf32> to vector<4x8x1xf32>
    %56 = arith.maximumf %43, %55 : vector<4x8x1xf32>
    %57 = arith.subf %43, %56 : vector<4x8x1xf32>
    %58 = math.exp %57 : vector<4x8x1xf32>
    %59 = vector.broadcast %56 : vector<4x8x1xf32> to vector<4x8x8xf32>
    %60 = arith.subf %53, %59 : vector<4x8x8xf32>
    %61 = math.exp %60 : vector<4x8x8xf32>
    %62 = arith.mulf %58, %48 : vector<4x8x1xf32>
    %cst_30 = arith.constant dense<0.000000e+00> : vector<4x8xf32>
    %63 = vector.multi_reduction <add>, %61, %cst_30 [2] : vector<4x8x8xf32> to vector<4x8xf32>
    %64 = vector.shape_cast %63 : vector<4x8xf32> to vector<4x8x1xf32>
    %65 = arith.addf %62, %64 : vector<4x8x1xf32>
    %66 = vector.broadcast %58 : vector<4x8x1xf32> to vector<4x8x8xf32>
    %67 = arith.mulf %66, %51 : vector<4x8x8xf32>
    %c0_31 = arith.constant 0 : index
    %c8_32 = arith.constant 8 : index
    %c0_33 = arith.constant 0 : index
    %68 = vector.load %arg20[%c0_31, %c8_32, %c0_33] : memref<4x16x8xbf16, #tpu.memory_space<vmem>>, vector<4x8x8xbf16>
    %69 = arith.truncf %61 : vector<4x8x8xf32> to vector<4x8x8xbf16>
    %cst_34 = arith.constant dense<0.000000e+00> : vector<4x8x8xf32>
    %70 = tpu.matmul %69, %68, %cst_34 {dimension_numbers = #tpu.dot_dimension_numbers<[2], [1], [1], [2], [0, 0, 0, 1, 1, 2], [0], [0]>} : vector<4x8x8xbf16>, vector<4x8x8xbf16>, vector<4x8x8xf32> -> vector<4x8x8xf32>
    %71 = arith.addf %67, %70 : vector<4x8x8xf32>
    %72 = tpu.reciprocal %65 {approx = true} : vector<4x8x1xf32> -> vector<4x8x1xf32>
    %73 = vector.broadcast %72 : vector<4x8x1xf32> to vector<4x8x8xf32>
    %74 = arith.mulf %71, %73 : vector<4x8x8xf32>
    %75 = tpu.transpose %74, [0, 2, 1] : vector<4x8x8xf32> -> vector<4x8x8xf32>
    %76 = vector.shape_cast %75 : vector<4x8x8xf32> to vector<32x8xf32>
    %77 = tpu.transpose %76, [1, 0] : vector<32x8xf32> -> vector<8x32xf32>
    %c0_35 = arith.constant 0 : index
    %c0_36 = arith.constant 0 : index
    %78 = vector.load %arg10[%c0_35, %c0_36] : memref<32x32xbf16, #tpu.memory_space<vmem>>, vector<32x32xbf16>
    %79 = arith.truncf %77 : vector<8x32xf32> to vector<8x32xbf16>
    %cst_37 = arith.constant dense<0.000000e+00> : vector<8x32xf32>
    %80 = tpu.matmul %79, %78, %cst_37 {dimension_numbers = #tpu.dot_dimension_numbers<[1], [0], [0], [1], [0, 0, 1, 1], [], []>} : vector<8x32xbf16>, vector<32x32xbf16>, vector<8x32xf32> -> vector<8x32xf32>
    %c0_38 = arith.constant 0 : index
    %c0_39 = arith.constant 0 : index
    %81 = vector.load %arg11[%c0_38, %c0_39] : memref<1x32xf32, #tpu.memory_space<vmem>>, vector<1x32xf32>
    %82 = vector.broadcast %81 : vector<1x32xf32> to vector<8x32xf32>
    %83 = arith.addf %80, %82 : vector<8x32xf32>
    %84 = arith.addf %4, %83 : vector<8x32xf32>
    %c0_40 = arith.constant 0 : index
    %c0_41 = arith.constant 0 : index
    %85 = vector.load %arg12[%c0_40, %c0_41] : memref<1x32xf32, #tpu.memory_space<vmem>>, vector<1x32xf32>
    %c0_42 = arith.constant 0 : index
    %c0_43 = arith.constant 0 : index
    %86 = vector.load %arg13[%c0_42, %c0_43] : memref<1x32xf32, #tpu.memory_space<vmem>>, vector<1x32xf32>
    %cst_44 = arith.constant dense<0.000000e+00> : vector<8xf32>
    %87 = vector.multi_reduction <add>, %84, %cst_44 [1] : vector<8x32xf32> to vector<8xf32>
    %88 = vector.shape_cast %87 : vector<8xf32> to vector<8x1xf32>
    %cst_45 = arith.constant 3.200000e+01 : f32
    %89 = vector.broadcast %cst_45 : f32 to vector<8x1xf32>
    %90 = arith.divf %88, %89 : vector<8x1xf32>
    %91 = vector.broadcast %90 : vector<8x1xf32> to vector<8x32xf32>
    %92 = arith.subf %84, %91 : vector<8x32xf32>
    %93 = arith.mulf %92, %92 : vector<8x32xf32>
    %cst_46 = arith.constant dense<0.000000e+00> : vector<8xf32>
    %94 = vector.multi_reduction <add>, %93, %cst_46 [1] : vector<8x32xf32> to vector<8xf32>
    %95 = vector.shape_cast %94 : vector<8xf32> to vector<8x1xf32>
    %cst_47 = arith.constant 0.0322580636 : f32
    %96 = vector.broadcast %cst_47 : f32 to vector<8x1xf32>
    %97 = arith.mulf %95, %96 : vector<8x1xf32>
    %98 = math.sqrt %97 : vector<8x1xf32>
    %cst_48 = arith.constant 9.99999997E-7 : f32
    %99 = vector.broadcast %cst_48 : f32 to vector<8x1xf32>
    %100 = arith.addf %98, %99 : vector<8x1xf32>
    %101 = tpu.reciprocal %100 {approx = true} : vector<8x1xf32> -> vector<8x1xf32>
    %102 = vector.broadcast %90 : vector<8x1xf32> to vector<8x32xf32>
    %103 = arith.subf %84, %102 : vector<8x32xf32>
    %104 = vector.broadcast %85 : vector<1x32xf32> to vector<8x32xf32>
    %105 = arith.mulf %104, %103 : vector<8x32xf32>
    %106 = vector.broadcast %101 : vector<8x1xf32> to vector<8x32xf32>
    %107 = arith.mulf %105, %106 : vector<8x32xf32>
    %108 = vector.broadcast %86 : vector<1x32xf32> to vector<8x32xf32>
    %109 = arith.addf %107, %108 : vector<8x32xf32>
    %c0_49 = arith.constant 0 : index
    %c0_50 = arith.constant 0 : index
    %110 = vector.load %arg14[%c0_49, %c0_50] : memref<32x64xbf16, #tpu.memory_space<vmem>>, vector<32x64xbf16>
    %111 = arith.truncf %109 : vector<8x32xf32> to vector<8x32xbf16>
    %cst_51 = arith.constant dense<0.000000e+00> : vector<8x64xf32>
    %112 = tpu.matmul %111, %110, %cst_51 {dimension_numbers = #tpu.dot_dimension_numbers<[1], [0], [0], [1], [0, 0, 1, 1], [], []>} : vector<8x32xbf16>, vector<32x64xbf16>, vector<8x64xf32> -> vector<8x64xf32>
    %c0_52 = arith.constant 0 : index
    %c0_53 = arith.constant 0 : index
    %113 = vector.load %arg15[%c0_52, %c0_53] : memref<1x64xf32, #tpu.memory_space<vmem>>, vector<1x64xf32>
    %114 = vector.broadcast %113 : vector<1x64xf32> to vector<8x64xf32>
    %115 = arith.addf %112, %114 : vector<8x64xf32>
    %cst_54 = arith.constant 0.000000e+00 : f32
    %116 = vector.broadcast %cst_54 : f32 to vector<8x64xf32>
    %117 = arith.maximumf %115, %116 : vector<8x64xf32>
    %c0_55 = arith.constant 0 : index
    %c0_56 = arith.constant 0 : index
    %118 = vector.load %arg16[%c0_55, %c0_56] : memref<64x32xbf16, #tpu.memory_space<vmem>>, vector<64x32xbf16>
    %119 = arith.truncf %117 : vector<8x64xf32> to vector<8x64xbf16>
    %cst_57 = arith.constant dense<0.000000e+00> : vector<8x32xf32>
    %120 = tpu.matmul %119, %118, %cst_57 {dimension_numbers = #tpu.dot_dimension_numbers<[1], [0], [0], [1], [0, 0, 1, 1], [], []>} : vector<8x64xbf16>, vector<64x32xbf16>, vector<8x32xf32> -> vector<8x32xf32>
    %c0_58 = arith.constant 0 : index
    %c0_59 = arith.constant 0 : index
    %121 = vector.load %arg17[%c0_58, %c0_59] : memref<1x32xf32, #tpu.memory_space<vmem>>, vector<1x32xf32>
    %122 = vector.broadcast %121 : vector<1x32xf32> to vector<8x32xf32>
    %123 = arith.addf %120, %122 : vector<8x32xf32>
    %124 = arith.addf %84, %123 : vector<8x32xf32>
    %c0_60 = arith.constant 0 : index
    %c0_61 = arith.constant 0 : index
    %c0_62 = arith.constant 0 : index
    %125 = vector.load %arg18[%c0_60, %c0_61, %c0_62] : memref<1x8x32xf32, #tpu.memory_space<vmem>>, vector<1x8x32xf32>
    %126 = vector.shape_cast %125 : vector<1x8x32xf32> to vector<8x32xf32>
    %127 = vector.shape_cast %124 : vector<8x32xf32> to vector<1x8x32xf32>
    tpu.vector_store %arg18[%c0_60, %c0_61, %c0_62], %127 {strides = array<i32>} : memref<1x8x32xf32, #tpu.memory_space<vmem>>, vector<1x8x32xf32>,
    return
  }
  func.func @transform_0(%arg0: i32, %arg1: i32) -> (i32, i32, i32) {
    %c0_i32 = arith.constant 0 : i32
    %c0_i32_0 = arith.constant 0 : i32
    return %arg0, %arg1, %c0_i32 : i32, i32, i32
  }
  func.func @transform_1(%arg0: i32, %arg1: i32) -> (i32, i32, i32) {
    %c0_i32 = arith.constant 0 : i32
    %c0_i32_0 = arith.constant 0 : i32
    %c0_i32_1 = arith.constant 0 : i32
    return %arg0, %c0_i32, %c0_i32_0 : i32, i32, i32
  }
  func.func @transform_2(%arg0: i32, %arg1: i32) -> (i32, i32) {
    %c0_i32 = arith.constant 0 : i32
    %c0_i32_0 = arith.constant 0 : i32
    %c0_i32_1 = arith.constant 0 : i32
    return %c0_i32, %c0_i32_0 : i32, i32
  }
  func.func @transform_3(%arg0: i32, %arg1: i32) -> (i32, i32) {
    %c0_i32 = arith.constant 0 : i32
    %c0_i32_0 = arith.constant 0 : i32
    %c0_i32_1 = arith.constant 0 : i32
    return %c0_i32, %c0_i32_0 : i32, i32
  }
  func.func @transform_4(%arg0: i32, %arg1: i32) -> (i32, i32) {
    %c0_i32 = arith.constant 0 : i32
    %c0_i32_0 = arith.constant 0 : i32
    %c0_i32_1 = arith.constant 0 : i32
    return %c0_i32, %c0_i32_0 : i32, i32
  }
  func.func @transform_5(%arg0: i32, %arg1: i32) -> (i32, i32) {
    %c0_i32 = arith.constant 0 : i32
    %c0_i32_0 = arith.constant 0 : i32
    %c0_i32_1 = arith.constant 0 : i32
    return %c0_i32, %c0_i32_0 : i32, i32
  }
  func.func @transform_6(%arg0: i32, %arg1: i32) -> (i32, i32) {
    %c0_i32 = arith.constant 0 : i32
    %c0_i32_0 = arith.constant 0 : i32
    %c0_i32_1 = arith.constant 0 : i32
    return %c0_i32, %c0_i32_0 : i32, i32
  }
  func.func @transform_7(%arg0: i32, %arg1: i32) -> (i32, i32) {
    %c0_i32 = arith.constant 0 : i32
    %c0_i32_0 = arith.constant 0 : i32
    %c0_i32_1 = arith.constant 0 : i32
    return %c0_i32, %c0_i32_0 : i32, i32
  }
  func.func @transform_8(%arg0: i32, %arg1: i32) -> (i32, i32) {
    %c0_i32 = arith.constant 0 : i32
    %c0_i32_0 = arith.constant 0 : i32
    %c0_i32_1 = arith.constant 0 : i32
    return %c0_i32, %c0_i32_0 : i32, i32
  }
  func.func @transform_9(%arg0: i32, %arg1: i32) -> (i32, i32) {
    %c0_i32 = arith.constant 0 : i32
    %c0_i32_0 = arith.constant 0 : i32
    %c0_i32_1 = arith.constant 0 : i32
    return %c0_i32, %c0_i32_0 : i32, i32
  }
  func.func @transform_10(%arg0: i32, %arg1: i32) -> (i32, i32) {
    %c0_i32 = arith.constant 0 : i32
    %c0_i32_0 = arith.constant 0 : i32
    %c0_i32_1 = arith.constant 0 : i32
    return %c0_i32, %c0_i32_0 : i32, i32
  }
  func.func @transform_11(%arg0: i32, %arg1: i32) -> (i32, i32) {
    %c0_i32 = arith.constant 0 : i32
    %c0_i32_0 = arith.constant 0 : i32
    %c0_i32_1 = arith.constant 0 : i32
    return %c0_i32, %c0_i32_0 : i32, i32
  }
  func.func @transform_12(%arg0: i32, %arg1: i32) -> (i32, i32) {
    %c0_i32 = arith.constant 0 : i32
    %c0_i32_0 = arith.constant 0 : i32
    %c0_i32_1 = arith.constant 0 : i32
    return %c0_i32, %c0_i32_0 : i32, i32
  }
  func.func @transform_13(%arg0: i32, %arg1: i32) -> (i32, i32) {
    %c0_i32 = arith.constant 0 : i32
    %c0_i32_0 = arith.constant 0 : i32
    %c0_i32_1 = arith.constant 0 : i32
    return %c0_i32, %c0_i32_0 : i32, i32
  }
  func.func @transform_14(%arg0: i32, %arg1: i32) -> (i32, i32) {
    %c0_i32 = arith.constant 0 : i32
    %c0_i32_0 = arith.constant 0 : i32
    %c0_i32_1 = arith.constant 0 : i32
    return %c0_i32, %c0_i32_0 : i32, i32
  }
  func.func @transform_15(%arg0: i32, %arg1: i32) -> (i32, i32) {
    %c0_i32 = arith.constant 0 : i32
    %c0_i32_0 = arith.constant 0 : i32
    %c0_i32_1 = arith.constant 0 : i32
    return %c0_i32, %c0_i32_0 : i32, i32
  }
  func.func @transform_16(%arg0: i32, %arg1: i32) -> (i32, i32, i32) {
    %c0_i32 = arith.constant 0 : i32
    %c0_i32_0 = arith.constant 0 : i32
    return %arg0, %arg1, %c0_i32 : i32, i32, i32
  }
}

</mosaic_0001>

<llo_original>
// kernel: tpu_custom_call.1
$region0: #{tpu_custom_call.1}
  #allocation0 [shape = 'u32[]', space=smem, size = 0x4, offset = 0x4, fixed_abs, tag = 'smem constant byte address 0x4 - core index']
  #allocation1 [shape = 'u32[72,128]{1,0:T(1,128)}', space=vmem, size = 0x9000, scoped, tag = 'internal scratch']
  #allocation2 [shape = 'bf16[4,16,8]{2,1,0:T(8,128)(2,1)}', space=vmem, size = 0x4000, scoped, tag = 'scratch operand']
  #allocation3 [shape = 'bf16[4,16,8]{2,1,0:T(8,128)(2,1)}', space=vmem, size = 0x4000, scoped, tag = 'scratch operand']
  %s0 = inlined_call_operand.vmem [shape: f32[2,16,32], index: 0, kind: input, shape index: {}]
  %s1 = inlined_call_operand.hbm [shape: f32[2,16,32], index: 1, kind: input, shape index: {}]
  %s2 = inlined_call_operand.vmem [shape: f32[1,32], index: 2, kind: input, shape index: {}]
  %s3 = inlined_call_operand.vmem [shape: f32[1,32], index: 3, kind: input, shape index: {}]
  %s4 = inlined_call_operand.vmem [shape: bf16[32,32], index: 4, kind: input, shape index: {}]
  %s5 = inlined_call_operand.vmem [shape: f32[1,32], index: 5, kind: input, shape index: {}]
  %s6 = inlined_call_operand.hbm [shape: bf16[32,64], index: 6, kind: input, shape index: {}]
  %s7 = inlined_call_operand.vmem [shape: f32[1,64], index: 7, kind: input, shape index: {}]
  %s8 = inlined_call_operand.hbm [shape: bf16[32,32], index: 8, kind: input, shape index: {}]
  %s9 = inlined_call_operand.vmem [shape: f32[1,32], index: 9, kind: input, shape index: {}]
  %s10 = inlined_call_operand.vmem [shape: f32[1,32], index: 10, kind: input, shape index: {}]
  %s11 = inlined_call_operand.vmem [shape: f32[1,32], index: 11, kind: input, shape index: {}]
  %s12 = inlined_call_operand.hbm [shape: bf16[32,64], index: 12, kind: input, shape index: {}]
  %s13 = inlined_call_operand.vmem [shape: f32[1,64], index: 13, kind: input, shape index: {}]
  %s14 = inlined_call_operand.vmem [shape: bf16[64,32], index: 14, kind: input, shape index: {}]
  %s15 = inlined_call_operand.vmem [shape: f32[1,32], index: 15, kind: input, shape index: {}]
  %s16 = inlined_call_operand.hbm [shape: f32[2,16,32], index: 16, kind: output, shape index: {}]
  %s17 = sld [smem:[#allocation0]]
  $region117: #{tpu_custom_call.1} parent=0
    _
  %s19 = ssub.s32 1, %s17
  %s20 = scalar_select 0, %s19, %s17
  $region1: #{tpu_custom_call.1} parent=0
    #allocation4 [shape = 'u8[16384]{0}', space=vmem, size = 0x4000, scoped, tag = 'input window, operand 1']
    #allocation5 [shape = 's32[2]{0}', space=sflag, size = 0x8, scoped, tag = 'scoped memory for tpu_custom_call.1']
    #allocation6 [shape = 's32[2]{0}', space=sflag, size = 0x8, scoped, tag = 'scoped memory for tpu_custom_call.1']
    #allocation7 [shape = 'u8[8192]{0}', space=vmem, size = 0x2000, scoped, tag = 'input window, operand 6, single buffered']
    #allocation8 [shape = 's32[1]{0}', space=sflag, size = 0x4, scoped, tag = 'scoped memory for tpu_custom_call.1']
    #allocation9 [shape = 'u8[8192]{0}', space=vmem, size = 0x2000, scoped, tag = 'input window, operand 8, single buffered']
    #allocation10 [shape = 'u8[8192]{0}', space=vmem, size = 0x2000, scoped, tag = 'input window, operand 12, single buffered']
    #allocation11 [shape = 's32[1]{0}', space=sflag, size = 0x4, scoped, tag = 'scoped memory for tpu_custom_call.1']
    #allocation12 [shape = 'u8[8192]{0}', space=vmem, size = 0x2000, scoped, tag = 'output window, operand 0']
    %21 = vsyncpa [#allocation5], 0
    %s22 = scalar_lea.sflag [#allocation5], 1
    %23 = vsyncpa %s22, 0
    %24 = vsyncpa [#allocation8], 0
    %25 = vsyncpa [#allocation11], 0
    %26 = vsyncpa [#allocation6], 0
    %s27 = scalar_lea.sflag [#allocation6], 1
    %28 = vsyncpa %s27, 0
    loop: start=0, step=1, limit=6
    $region2: #{tpu_custom_call.1} parent=1 // loop_pre_header
      _
    $region3: #{tpu_custom_call.1} parent=1 // loop_header
      %s30 = sphi 0, %s34
      %p31 = scmp.ge.s32.totalorder %s30, 6
      %s37 = sphi 0, %s49
      %s38 = sphi 0, %s45
      %s39 = sphi 0, %s37
      %s40 = sphi 0, %s38
      %s41 = sphi 0, %s39
      %s42 = sphi 0, %s40
      %s54 = sphi 0, %s56
      %s57 = sphi 0, %s54
      %s58 = sphi 0, %s57
      %s74 = sphi 0, %s58
      %s80 = sphi 0, %s82
      %s83 = sphi 0, %s80
      %s84 = sphi 0, %s83
      %s100 = sphi 0, %s84
      %s104 = sphi 0, %s104
      %s106 = sphi 0, %s104
      %s107 = sphi 0, %s106
      %s121 = sphi 0, %s107
      %s125 = sphi 0, %s125
      %s127 = sphi 0, %s125
      %s128 = sphi 0, %s127
      %s142 = sphi 0, %s128
      %s146 = sphi 0, %s146
      %s148 = sphi 0, %s146
      %s149 = sphi 0, %s148
      %s163 = sphi 0, %s149
      %s167 = sphi 0, %s167
      %s169 = sphi 0, %s167
      %s170 = sphi 0, %s169
      %s184 = sphi 0, %s170
      %s188 = sphi 0, %s188
      %s190 = sphi 0, %s188
      %s191 = sphi 0, %s190
      %s205 = sphi 0, %s191
      %s209 = sphi 0, %s209
      %s211 = sphi 0, %s209
      %s212 = sphi 0, %s211
      %s226 = sphi 0, %s212
      %s230 = sphi 0, %s230
      %s232 = sphi 0, %s230
      %s233 = sphi 0, %s232
      %s247 = sphi 0, %s233
      %s251 = sphi 0, %s251
      %s253 = sphi 0, %s251
      %s254 = sphi 0, %s253
      %s268 = sphi 0, %s254
      %s272 = sphi 0, %s272
      %s274 = sphi 0, %s272
      %s275 = sphi 0, %s274
      %s289 = sphi 0, %s275
      %s293 = sphi 0, %s293
      %s295 = sphi 0, %s293
      %s296 = sphi 0, %s295
      %s310 = sphi 0, %s296
      %s314 = sphi 0, %s314
      %s316 = sphi 0, %s314
      %s317 = sphi 0, %s316
      %s331 = sphi 0, %s317
      %s335 = sphi 0, %s335
      %s337 = sphi 0, %s335
      %s338 = sphi 0, %s337
      %s352 = sphi 0, %s338
      %s356 = sphi 0, %s356
      %s358 = sphi 0, %s356
      %s359 = sphi 0, %s358
      %s373 = sphi 0, %s359
      %s377 = sphi 0, %s377
      %s379 = sphi 0, %s377
      %s380 = sphi 0, %s379
      %s394 = sphi 0, %s380
      %s402 = sphi 0, %s404
      %s405 = sphi 0, %s402
      %s406 = sphi 0, %s405
      %s422 = sphi 0, %s406
    $region4: #{tpu_custom_call.1} parent=1 // loop_header_branch
      %33 = sbr.rel (%p31) target = $region8
    $region5: #{tpu_custom_call.1} parent=1 // loop_body
      %s35 = ssub.s32 %s30, 1
      %s36 = ssub.s32 %s30, 2
      %s43 = sadd.s32 1, %s38
      %p44 = scmp.ge.s32.totalorder %s43, 2
      %s45 = scalar_select %p44, 0, %s43
      %s46 = sadd.s32 1, %s37
      %s47 = scalar_select %p44, %s46, %s37
      %p48 = scmp.ge.s32.totalorder %s47, 2
      %s49 = scalar_select %p48, 0, %s47
      %s50 = ssub.s32 %s37, %s49
      %s51 = ssub.s32 %s38, %s45
      %s52 = sor.u32 %s50, %s51
      %p53 = scmp.eq.s32.totalorder %s52, 0
      %s55 = sadd.s32 %s54, 1
      %s56 = scalar_select %p53, %s54, %s55
      %p59 = pneg %p53
      %p60 = scmp.eq.s32.totalorder %s30, 3
      %p61 = por %p59, %p60
      %p62 = scmp.ne.s32.totalorder %s54, %s57
      %p63 = scmp.eq.s32.totalorder %s30, 0
      %p64 = por %p62, %p63
      %p65 = scmp.ne.s32.totalorder %s54, %s57
      %p66 = scmp.eq.s32.totalorder %s35, 3
      %p67 = por %p65, %p66
      %p68 = scmp.ne.s32.totalorder %s57, %s58
      %p69 = scmp.eq.s32.totalorder %s35, 0
      %p70 = por %p68, %p69
      %p71 = scmp.ne.s32.totalorder %s57, %s58
      %p72 = scmp.eq.s32.totalorder %s36, 3
      %p73 = por %p71, %p72
      %p75 = scmp.ne.s32.totalorder %s58, %s74
      %p76 = scmp.eq.s32.totalorder %s36, 0
      %p77 = por %p75, %p76
      %s78 = ssub.s32 %s37, %s49
      %p79 = scmp.eq.s32.totalorder %s78, 0
      %s81 = sadd.s32 %s80, 1
      %s82 = scalar_select %p79, %s80, %s81
      %p85 = pneg %p79
      %p86 = scmp.eq.s32.totalorder %s30, 3
      %p87 = por %p85, %p86
      %p88 = scmp.ne.s32.totalorder %s80, %s83
      %p89 = scmp.eq.s32.totalorder %s30, 0
      %p90 = por %p88, %p89
      %p91 = scmp.ne.s32.totalorder %s80, %s83
      %p92 = scmp.eq.s32.totalorder %s35, 3
      %p93 = por %p91, %p92
      %p94 = scmp.ne.s32.totalorder %s83, %s84
      %p95 = scmp.eq.s32.totalorder %s35, 0
      %p96 = por %p94, %p95
      %p97 = scmp.ne.s32.totalorder %s83, %s84
      %p98 = scmp.eq.s32.totalorder %s36, 3
      %p99 = por %p97, %p98
      %p101 = scmp.ne.s32.totalorder %s84, %s100
      %p102 = scmp.eq.s32.totalorder %s36, 0
      %p103 = por %p101, %p102
      %s105 = sadd.s32 %s104, 1
      %p108 = scmp.eq.s32.totalorder %s30, 3
      %p109 = scmp.ne.s32.totalorder %s104, %s106
      %p110 = scmp.eq.s32.totalorder %s30, 0
      %p111 = por %p109, %p110
      %p112 = scmp.ne.s32.totalorder %s104, %s106
      %p113 = scmp.eq.s32.totalorder %s35, 3
      %p114 = por %p112, %p113
      %p115 = scmp.ne.s32.totalorder %s106, %s107
      %p116 = scmp.eq.s32.totalorder %s35, 0
      %p117 = por %p115, %p116
      %p118 = scmp.ne.s32.totalorder %s106, %s107
      %p119 = scmp.eq.s32.totalorder %s36, 3
      %p120 = por %p118, %p119
      %p122 = scmp.ne.s32.totalorder %s107, %s121
      %p123 = scmp.eq.s32.totalorder %s36, 0
      %p124 = por %p122, %p123
      %s126 = sadd.s32 %s125, 1
      %p129 = scmp.eq.s32.totalorder %s30, 3
      %p130 = scmp.ne.s32.totalorder %s125, %s127
      %p131 = scmp.eq.s32.totalorder %s30, 0
      %p132 = por %p130, %p131
      %p133 = scmp.ne.s32.totalorder %s125, %s127
      %p134 = scmp.eq.s32.totalorder %s35, 3
      %p135 = por %p133, %p134
      %p136 = scmp.ne.s32.totalorder %s127, %s128
      %p137 = scmp.eq.s32.totalorder %s35, 0
      %p138 = por %p136, %p137
      %p139 = scmp.ne.s32.totalorder %s127, %s128
      %p140 = scmp.eq.s32.totalorder %s36, 3
      %p141 = por %p139, %p140
      %p143 = scmp.ne.s32.totalorder %s128, %s142
      %p144 = scmp.eq.s32.totalorder %s36, 0
      %p145 = por %p143, %p144
      %s147 = sadd.s32 %s146, 1
      %p150 = scmp.eq.s32.totalorder %s30, 3
      %p151 = scmp.ne.s32.totalorder %s146, %s148
      %p152 = scmp.eq.s32.totalorder %s30, 0
      %p153 = por %p151, %p152
      %p154 = scmp.ne.s32.totalorder %s146, %s148
      %p155 = scmp.eq.s32.totalorder %s35, 3
      %p156 = por %p154, %p155
      %p157 = scmp.ne.s32.totalorder %s148, %s149
      %p158 = scmp.eq.s32.totalorder %s35, 0
      %p159 = por %p157, %p158
      %p160 = scmp.ne.s32.totalorder %s148, %s149
      %p161 = scmp.eq.s32.totalorder %s36, 3
      %p162 = por %p160, %p161
      %p164 = scmp.ne.s32.totalorder %s149, %s163
      %p165 = scmp.eq.s32.totalorder %s36, 0
      %p166 = por %p164, %p165
      %s168 = sadd.s32 %s167, 1
      %p171 = scmp.eq.s32.totalorder %s30, 3
      %p172 = scmp.ne.s32.totalorder %s167, %s169
      %p173 = scmp.eq.s32.totalorder %s30, 0
      %p174 = por %p172, %p173
      %p175 = scmp.ne.s32.totalorder %s167, %s169
      %p176 = scmp.eq.s32.totalorder %s35, 3
      %p177 = por %p175, %p176
      %p178 = scmp.ne.s32.totalorder %s169, %s170
      %p179 = scmp.eq.s32.totalorder %s35, 0
      %p180 = por %p178, %p179
      %p181 = scmp.ne.s32.totalorder %s169, %s170
      %p182 = scmp.eq.s32.totalorder %s36, 3
      %p183 = por %p181, %p182
      %p185 = scmp.ne.s32.totalorder %s170, %s184
      %p186 = scmp.eq.s32.totalorder %s36, 0
      %p187 = por %p185, %p186
      %s189 = sadd.s32 %s188, 1
      %p192 = scmp.eq.s32.totalorder %s30, 3
      %p193 = scmp.ne.s32.totalorder %s188, %s190
      %p194 = scmp.eq.s32.totalorder %s30, 0
      %p195 = por %p193, %p194
      %p196 = scmp.ne.s32.totalorder %s188, %s190
      %p197 = scmp.eq.s32.totalorder %s35, 3
      %p198 = por %p196, %p197
      %p199 = scmp.ne.s32.totalorder %s190, %s191
      %p200 = scmp.eq.s32.totalorder %s35, 0
      %p201 = por %p199, %p200
      %p202 = scmp.ne.s32.totalorder %s190, %s191
      %p203 = scmp.eq.s32.totalorder %s36, 3
      %p204 = por %p202, %p203
      %p206 = scmp.ne.s32.totalorder %s191, %s205
      %p207 = scmp.eq.s32.totalorder %s36, 0
      %p208 = por %p206, %p207
      %s210 = sadd.s32 %s209, 1
      %p213 = scmp.eq.s32.totalorder %s30, 3
      %p214 = scmp.ne.s32.totalorder %s209, %s211
      %p215 = scmp.eq.s32.totalorder %s30, 0
      %p216 = por %p214, %p215
      %p217 = scmp.ne.s32.totalorder %s209, %s211
      %p218 = scmp.eq.s32.totalorder %s35, 3
      %p219 = por %p217, %p218
      %p220 = scmp.ne.s32.totalorder %s211, %s212
      %p221 = scmp.eq.s32.totalorder %s35, 0
      %p222 = por %p220, %p221
      %p223 = scmp.ne.s32.totalorder %s211, %s212
      %p224 = scmp.eq.s32.totalorder %s36, 3
      %p225 = por %p223, %p224
      %p227 = scmp.ne.s32.totalorder %s212, %s226
      %p228 = scmp.eq.s32.totalorder %s36, 0
      %p229 = por %p227, %p228
      %s231 = sadd.s32 %s230, 1
      %p234 = scmp.eq.s32.totalorder %s30, 3
      %p235 = scmp.ne.s32.totalorder %s230, %s232
      %p236 = scmp.eq.s32.totalorder %s30, 0
      %p237 = por %p235, %p236
      %p238 = scmp.ne.s32.totalorder %s230, %s232
      %p239 = scmp.eq.s32.totalorder %s35, 3
      %p240 = por %p238, %p239
      %p241 = scmp.ne.s32.totalorder %s232, %s233
      %p242 = scmp.eq.s32.totalorder %s35, 0
      %p243 = por %p241, %p242
      %p244 = scmp.ne.s32.totalorder %s232, %s233
      %p245 = scmp.eq.s32.totalorder %s36, 3
      %p246 = por %p244, %p245
      %p248 = scmp.ne.s32.totalorder %s233, %s247
      %p249 = scmp.eq.s32.totalorder %s36, 0
      %p250 = por %p248, %p249
      %s252 = sadd.s32 %s251, 1
      %p255 = scmp.eq.s32.totalorder %s30, 3
      %p256 = scmp.ne.s32.totalorder %s251, %s253
      %p257 = scmp.eq.s32.totalorder %s30, 0
      %p258 = por %p256, %p257
      %p259 = scmp.ne.s32.totalorder %s251, %s253
      %p260 = scmp.eq.s32.totalorder %s35, 3
      %p261 = por %p259, %p260
      %p262 = scmp.ne.s32.totalorder %s253, %s254
      %p263 = scmp.eq.s32.totalorder %s35, 0
      %p264 = por %p262, %p263
      %p265 = scmp.ne.s32.totalorder %s253, %s254
      %p266 = scmp.eq.s32.totalorder %s36, 3
      %p267 = por %p265, %p266
      %p269 = scmp.ne.s32.totalorder %s254, %s268
      %p270 = scmp.eq.s32.totalorder %s36, 0
      %p271 = por %p269, %p270
      %s273 = sadd.s32 %s272, 1
      %p276 = scmp.eq.s32.totalorder %s30, 3
      %p277 = scmp.ne.s32.totalorder %s272, %s274
      %p278 = scmp.eq.s32.totalorder %s30, 0
      %p279 = por %p277, %p278
      %p280 = scmp.ne.s32.totalorder %s272, %s274
      %p281 = scmp.eq.s32.totalorder %s35, 3
      %p282 = por %p280, %p281
      %p283 = scmp.ne.s32.totalorder %s274, %s275
      %p284 = scmp.eq.s32.totalorder %s35, 0
      %p285 = por %p283, %p284
      %p286 = scmp.ne.s32.totalorder %s274, %s275
      %p287 = scmp.eq.s32.totalorder %s36, 3
      %p288 = por %p286, %p287
      %p290 = scmp.ne.s32.totalorder %s275, %s289
      %p291 = scmp.eq.s32.totalorder %s36, 0
      %p292 = por %p290, %p291
      %s294 = sadd.s32 %s293, 1
      %p297 = scmp.eq.s32.totalorder %s30, 3
      %p298 = scmp.ne.s32.totalorder %s293, %s295
      %p299 = scmp.eq.s32.totalorder %s30, 0
      %p300 = por %p298, %p299
      %p301 = scmp.ne.s32.totalorder %s293, %s295
      %p302 = scmp.eq.s32.totalorder %s35, 3
      %p303 = por %p301, %p302
      %p304 = scmp.ne.s32.totalorder %s295, %s296
      %p305 = scmp.eq.s32.totalorder %s35, 0
      %p306 = por %p304, %p305
      %p307 = scmp.ne.s32.totalorder %s295, %s296
      %p308 = scmp.eq.s32.totalorder %s36, 3
      %p309 = por %p307, %p308
      %p311 = scmp.ne.s32.totalorder %s296, %s310
      %p312 = scmp.eq.s32.totalorder %s36, 0
      %p313 = por %p311, %p312
      %s315 = sadd.s32 %s314, 1
      %p318 = scmp.eq.s32.totalorder %s30, 3
      %p319 = scmp.ne.s32.totalorder %s314, %s316
      %p320 = scmp.eq.s32.totalorder %s30, 0
      %p321 = por %p319, %p320
      %p322 = scmp.ne.s32.totalorder %s314, %s316
      %p323 = scmp.eq.s32.totalorder %s35, 3
      %p324 = por %p322, %p323
      %p325 = scmp.ne.s32.totalorder %s316, %s317
      %p326 = scmp.eq.s32.totalorder %s35, 0
      %p327 = por %p325, %p326
      %p328 = scmp.ne.s32.totalorder %s316, %s317
      %p329 = scmp.eq.s32.totalorder %s36, 3
      %p330 = por %p328, %p329
      %p332 = scmp.ne.s32.totalorder %s317, %s331
      %p333 = scmp.eq.s32.totalorder %s36, 0
      %p334 = por %p332, %p333
      %s336 = sadd.s32 %s335, 1
      %p339 = scmp.eq.s32.totalorder %s30, 3
      %p340 = scmp.ne.s32.totalorder %s335, %s337
      %p341 = scmp.eq.s32.totalorder %s30, 0
      %p342 = por %p340, %p341
      %p343 = scmp.ne.s32.totalorder %s335, %s337
      %p344 = scmp.eq.s32.totalorder %s35, 3
      %p345 = por %p343, %p344
      %p346 = scmp.ne.s32.totalorder %s337, %s338
      %p347 = scmp.eq.s32.totalorder %s35, 0
      %p348 = por %p346, %p347
      %p349 = scmp.ne.s32.totalorder %s337, %s338
      %p350 = scmp.eq.s32.totalorder %s36, 3
      %p351 = por %p349, %p350
      %p353 = scmp.ne.s32.totalorder %s338, %s352
      %p354 = scmp.eq.s32.totalorder %s36, 0
      %p355 = por %p353, %p354
      %s357 = sadd.s32 %s356, 1
      %p360 = scmp.eq.s32.totalorder %s30, 3
      %p361 = scmp.ne.s32.totalorder %s356, %s358
      %p362 = scmp.eq.s32.totalorder %s30, 0
      %p363 = por %p361, %p362
      %p364 = scmp.ne.s32.totalorder %s356, %s358
      %p365 = scmp.eq.s32.totalorder %s35, 3
      %p366 = por %p364, %p365
      %p367 = scmp.ne.s32.totalorder %s358, %s359
      %p368 = scmp.eq.s32.totalorder %s35, 0
      %p369 = por %p367, %p368
      %p370 = scmp.ne.s32.totalorder %s358, %s359
      %p371 = scmp.eq.s32.totalorder %s36, 3
      %p372 = por %p370, %p371
      %p374 = scmp.ne.s32.totalorder %s359, %s373
      %p375 = scmp.eq.s32.totalorder %s36, 0
      %p376 = por %p374, %p375
      %s378 = sadd.s32 %s377, 1
      %p381 = scmp.eq.s32.totalorder %s30, 3
      %p382 = scmp.ne.s32.totalorder %s377, %s379
      %p383 = scmp.eq.s32.totalorder %s30, 0
      %p384 = por %p382, %p383
      %p385 = scmp.ne.s32.totalorder %s377, %s379
      %p386 = scmp.eq.s32.totalorder %s35, 3
      %p387 = por %p385, %p386
      %p388 = scmp.ne.s32.totalorder %s379, %s380
      %p389 = scmp.eq.s32.totalorder %s35, 0
      %p390 = por %p388, %p389
      %p391 = scmp.ne.s32.totalorder %s379, %s380
      %p392 = scmp.eq.s32.totalorder %s36, 3
      %p393 = por %p391, %p392
      %p395 = scmp.ne.s32.totalorder %s380, %s394
      %p396 = scmp.eq.s32.totalorder %s36, 0
      %p397 = por %p395, %p396
      %s398 = ssub.s32 %s37, %s49
      %s399 = ssub.s32 %s38, %s45
      %s400 = sor.u32 %s398, %s399
      %p401 = scmp.eq.s32.totalorder %s400, 0
      %s403 = sadd.s32 %s402, 1
      %s404 = scalar_select %p401, %s402, %s403
      %p407 = pneg %p401
      %p408 = scmp.eq.s32.totalorder %s30, 3
      %p409 = por %p407, %p408
      %p410 = scmp.ne.s32.totalorder %s402, %s405
      %p411 = scmp.eq.s32.totalorder %s30, 0
      %p412 = por %p410, %p411
      %p413 = scmp.ne.s32.totalorder %s402, %s405
      %p414 = scmp.eq.s32.totalorder %s35, 3
      %p415 = por %p413, %p414
      %p416 = scmp.ne.s32.totalorder %s405, %s406
      %p417 = scmp.eq.s32.totalorder %s35, 0
      %p418 = por %p416, %p417
      %p419 = scmp.ne.s32.totalorder %s405, %s406
      %p420 = scmp.eq.s32.totalorder %s36, 3
      %p421 = por %p419, %p420
      %p423 = scmp.ne.s32.totalorder %s406, %s422
      %p424 = scmp.eq.s32.totalorder %s36, 0
      %p425 = por %p423, %p424
      %p426 = scmp.le.s32.totalorder 1, %s30
      %p427 = scmp.lt.s32.totalorder %s30, 5
      %p428 = pnand %p426, %p427
      %p429 = pneg %p428
      // Predicated region
      $region9: #{tpu_custom_call.1} parent=5 // pred_check
        _
      $region10: #{tpu_custom_call.1} parent=5 // pred_check_branch
        %431 = sbr.rel (%p428) target = $region12
      $region11: #{tpu_custom_call.1} parent=5 // pred_region
        %s432 = ssub.s32 %s30, 1
        // Predicated region
        $region13: #{tpu_custom_call.1} parent=11 // pred_check
          %p433 = pneg %p117
        $region14: #{tpu_custom_call.1} parent=11 // pred_check_branch
          %435 = sbr.rel (%p433) target = $region16
        $region15: #{tpu_custom_call.1} parent=11 // pred_region
          _
        $region16: #{tpu_custom_call.1} parent=11 // pred_fallthru
          _
        // Predicated region
        $region17: #{tpu_custom_call.1} parent=11 // pred_check
          %p436 = pneg %p138
        $region18: #{tpu_custom_call.1} parent=11 // pred_check_branch
          %438 = sbr.rel (%p436) target = $region20
        $region19: #{tpu_custom_call.1} parent=11 // pred_region
          _
        $region20: #{tpu_custom_call.1} parent=11 // pred_fallthru
          _
        // Predicated region
        $region21: #{tpu_custom_call.1} parent=11 // pred_check
          %p439 = pneg %p159
        $region22: #{tpu_custom_call.1} parent=11 // pred_check_branch
          %441 = sbr.rel (%p439) target = $region24
        $region23: #{tpu_custom_call.1} parent=11 // pred_region
          _
        $region24: #{tpu_custom_call.1} parent=11 // pred_fallthru
          _
        // Predicated region
        $region25: #{tpu_custom_call.1} parent=11 // pred_check
          %p442 = pneg %p180
        $region26: #{tpu_custom_call.1} parent=11 // pred_check_branch
          %444 = sbr.rel (%p442) target = $region28
        $region27: #{tpu_custom_call.1} parent=11 // pred_region
          _
        $region28: #{tpu_custom_call.1} parent=11 // pred_fallthru
          _
        // Predicated region
        $region29: #{tpu_custom_call.1} parent=11 // pred_check
          %p445 = pneg %p201
        $region30: #{tpu_custom_call.1} parent=11 // pred_check_branch
          %447 = sbr.rel (%p445) target = $region32
        $region31: #{tpu_custom_call.1} parent=11 // pred_region
          %449 = vsyncadd [#allocation8], 0
          %s450 = sshll.u32 %s6, 4
          %s451 = int_to_ptr.hbm [resolvable:$true] %s450
          %s452 = sshll.u32 [#allocation7], 4
          %s453 = int_to_ptr.vmem [resolvable:$true] %s452
          %458 = dma.hbm_to_vmem [thread:$0]  %s451, 256, %s453, [#allocation8], 64, 64, 4
        $region32: #{tpu_custom_call.1} parent=11 // pred_fallthru
          _
        // Predicated region
        $region33: #{tpu_custom_call.1} parent=11 // pred_check
          %p459 = pneg %p222
        $region34: #{tpu_custom_call.1} parent=11 // pred_check_branch
          %461 = sbr.rel (%p459) target = $region36
        $region35: #{tpu_custom_call.1} parent=11 // pred_region
          _
        $region36: #{tpu_custom_call.1} parent=11 // pred_fallthru
          _
        // Predicated region
        $region37: #{tpu_custom_call.1} parent=11 // pred_check
          %p462 = pneg %p243
        $region38: #{tpu_custom_call.1} parent=11 // pred_check_branch
          %464 = sbr.rel (%p462) target = $region40
        $region39: #{tpu_custom_call.1} parent=11 // pred_region
          %466 = vsyncadd [#allocation8], 0
          %s467 = sshll.u32 %s8, 4
          %s468 = int_to_ptr.hbm [resolvable:$true] %s467
          %s469 = sshll.u32 [#allocation9], 4
          %s470 = int_to_ptr.vmem [resolvable:$true] %s469
          %475 = dma.hbm_to_vmem [thread:$0]  %s468, 256, %s470, [#allocation8], 64, 64, 4
        $region40: #{tpu_custom_call.1} parent=11 // pred_fallthru
          _
        // Predicated region
        $region41: #{tpu_custom_call.1} parent=11 // pred_check
          %p476 = pneg %p264
        $region42: #{tpu_custom_call.1} parent=11 // pred_check_branch
          %478 = sbr.rel (%p476) target = $region44
        $region43: #{tpu_custom_call.1} parent=11 // pred_region
          _
        $region44: #{tpu_custom_call.1} parent=11 // pred_fallthru
          _
        // Predicated region
        $region45: #{tpu_custom_call.1} parent=11 // pred_check
          %p479 = pneg %p285
        $region46: #{tpu_custom_call.1} parent=11 // pred_check_branch
          %481 = sbr.rel (%p479) target = $region48
        $region47: #{tpu_custom_call.1} parent=11 // pred_region
          _
        $region48: #{tpu_custom_call.1} parent=11 // pred_fallthru
          _
        // Predicated region
        $region49: #{tpu_custom_call.1} parent=11 // pred_check
          %p482 = pneg %p306
        $region50: #{tpu_custom_call.1} parent=11 // pred_check_branch
          %484 = sbr.rel (%p482) target = $region52
        $region51: #{tpu_custom_call.1} parent=11 // pred_region
          _
        $region52: #{tpu_custom_call.1} parent=11 // pred_fallthru
          _
        // Predicated region
        $region53: #{tpu_custom_call.1} parent=11 // pred_check
          %p485 = pneg %p327
        $region54: #{tpu_custom_call.1} parent=11 // pred_check_branch
          %487 = sbr.rel (%p485) target = $region56
        $region55: #{tpu_custom_call.1} parent=11 // pred_region
          %489 = vsyncadd [#allocation11], 0
          %s490 = sshll.u32 %s12, 4
          %s491 = int_to_ptr.hbm [resolvable:$true] %s490
          %s492 = sshll.u32 [#allocation10], 4
          %s493 = int_to_ptr.vmem [resolvable:$true] %s492
          %498 = dma.hbm_to_vmem [thread:$0]  %s491, 256, %s493, [#allocation11], 64, 64, 4
        $region56: #{tpu_custom_call.1} parent=11 // pred_fallthru
          _
        // Predicated region
        $region57: #{tpu_custom_call.1} parent=11 // pred_check
          %p499 = pneg %p348
        $region58: #{tpu_custom_call.1} parent=11 // pred_check_branch
          %501 = sbr.rel (%p499) target = $region60
        $region59: #{tpu_custom_call.1} parent=11 // pred_region
          _
        $region60: #{tpu_custom_call.1} parent=11 // pred_fallthru
          _
        // Predicated region
        $region61: #{tpu_custom_call.1} parent=11 // pred_check
          %p502 = pneg %p369
        $region62: #{tpu_custom_call.1} parent=11 // pred_check_branch
          %504 = sbr.rel (%p502) target = $region64
        $region63: #{tpu_custom_call.1} parent=11 // pred_region
          _
        $region64: #{tpu_custom_call.1} parent=11 // pred_fallthru
          _
        // Predicated region
        $region65: #{tpu_custom_call.1} parent=11 // pred_check
          %p505 = pneg %p390
        $region66: #{tpu_custom_call.1} parent=11 // pred_check_branch
          %507 = sbr.rel (%p505) target = $region68
        $region67: #{tpu_custom_call.1} parent=11 // pred_region
          _
        $region68: #{tpu_custom_call.1} parent=11 // pred_fallthru
          _
      $region12: #{tpu_custom_call.1} parent=5 // pred_fallthru
        _
      %p508 = scmp.lt.s32.totalorder %s30, 4
      // Predicated region
      $region69: #{tpu_custom_call.1} parent=5 // pred_check
        %p509 = pneg %p508
      $region70: #{tpu_custom_call.1} parent=5 // pred_check_branch
        %511 = sbr.rel (%p509) target = $region72
      $region71: #{tpu_custom_call.1} parent=5 // pred_region
        // Predicated region
        $region73: #{tpu_custom_call.1} parent=71 // pred_check
          %p512 = pneg %p64
        $region74: #{tpu_custom_call.1} parent=71 // pred_check_branch
          %514 = sbr.rel (%p512) target = $region76
        $region75: #{tpu_custom_call.1} parent=71 // pred_region
          %p515 = scmp.lt.s32.totalorder %s37, 1
          %s516 = scalar_select %p515, %s37, 1
          %p517 = scmp.lt.s32.totalorder %s38, 1
          %s518 = scalar_select %p517, %s38, 1
          %s519 = smul.addr %s516, 2
          %s520 = sadd.s32 %s518, %s519
          %s521 = smul.addr %s520, 8
          %s522 = scalar_lea.vmem %s0, %s521
        $region76: #{tpu_custom_call.1} parent=71 // pred_fallthru
          _
        // Predicated region
        $region77: #{tpu_custom_call.1} parent=71 // pred_check
          %p523 = pneg %p90
        $region78: #{tpu_custom_call.1} parent=71 // pred_check_branch
          %525 = sbr.rel (%p523) target = $region80
        $region79: #{tpu_custom_call.1} parent=71 // pred_region
          %s526 = sand.u32 %s80, 1
          %s527 = scalar_lea.sflag [#allocation5], %s526
          %s528 = sand.u32 %s80, 1
          %s529 = smul.addr %s528, 16
          %s530 = scalar_lea.vmem [#allocation4], %s529
          %532 = vsyncadd %s527, 0
          %s533 = smul.addr %s37, 2
          %s534 = smul.addr %s533, 8
          %s535 = scalar_lea.hbm %s1, %s534
          %s536 = sshll.u32 %s535, 4
          %s537 = int_to_ptr.hbm [resolvable:$true] %s536
          %s538 = sshll.u32 %s530, 4
          %s539 = int_to_ptr.vmem [resolvable:$true] %s538
          %544 = dma.hbm_to_vmem [thread:$0]  %s537, 256, %s539, %s527, 128, 128, 8
        $region80: #{tpu_custom_call.1} parent=71 // pred_fallthru
          _
      $region72: #{tpu_custom_call.1} parent=5 // pred_fallthru
        _
      %p545 = scmp.le.s32.totalorder 1, %s30
      %p546 = scmp.lt.s32.totalorder %s30, 5
      %p547 = pnand %p545, %p546
      %p548 = pneg %p547
      // Predicated region
      $region81: #{tpu_custom_call.1} parent=5 // pred_check
        _
      $region82: #{tpu_custom_call.1} parent=5 // pred_check_branch
        %550 = sbr.rel (%p547) target = $region84
      $region83: #{tpu_custom_call.1} parent=5 // pred_region
        %s551 = ssub.s32 %s30, 1
        %s552 = sand.u32 %s83, 1
        %s553 = scalar_lea.sflag [#allocation5], %s552
        %s554 = sand.u32 %s83, 1
        %s555 = smul.addr %s554, 16
        %s556 = scalar_lea.vmem [#allocation4], %s555
        // Predicated region
        $region85: #{tpu_custom_call.1} parent=83 // pred_check
          %p557 = pneg %p96
        $region86: #{tpu_custom_call.1} parent=83 // pred_check_branch
          %559 = sbr.rel (%p557) target = $region88
        $region87: #{tpu_custom_call.1} parent=83 // pred_region
          %561 = dma.done %s553, 256
        $region88: #{tpu_custom_call.1} parent=83 // pred_fallthru
          _
        // Predicated region
        $region89: #{tpu_custom_call.1} parent=83 // pred_check
          %p562 = pneg %p201
        $region90: #{tpu_custom_call.1} parent=83 // pred_check_branch
          %564 = sbr.rel (%p562) target = $region92
        $region91: #{tpu_custom_call.1} parent=83 // pred_region
          %566 = dma.done [#allocation8], 256
        $region92: #{tpu_custom_call.1} parent=83 // pred_fallthru
          _
        // Predicated region
        $region93: #{tpu_custom_call.1} parent=83 // pred_check
          %p567 = pneg %p243
        $region94: #{tpu_custom_call.1} parent=83 // pred_check_branch
          %569 = sbr.rel (%p567) target = $region96
        $region95: #{tpu_custom_call.1} parent=83 // pred_region
          %571 = dma.done [#allocation8], 256
        $region96: #{tpu_custom_call.1} parent=83 // pred_fallthru
          _
        // Predicated region
        $region97: #{tpu_custom_call.1} parent=83 // pred_check
          %p572 = pneg %p327
        $region98: #{tpu_custom_call.1} parent=83 // pred_check_branch
          %574 = sbr.rel (%p572) target = $region100
        $region99: #{tpu_custom_call.1} parent=83 // pred_region
          %576 = dma.done [#allocation11], 256
        $region100: #{tpu_custom_call.1} parent=83 // pred_fallthru
          _
        %p577 = scmp.lt.s32.totalorder %s39, 1
        %s578 = scalar_select %p577, %s39, 1
        %p579 = scmp.lt.s32.totalorder %s40, 1
        %s580 = scalar_select %p579, %s40, 1
        %s581 = smul.addr %s578, 2
        %s582 = sadd.s32 %s580, %s581
        %s583 = smul.addr %s582, 8
        %s584 = scalar_lea.vmem %s0, %s583
        %p585 = pneg %p70
        %p586 = pneg %p67
        %s587 = sand.u32 %s83, 1
        %s588 = scalar_lea.sflag [#allocation5], %s587
        %s589 = sand.u32 %s83, 1
        %s590 = smul.addr %s589, 16
        %s591 = scalar_lea.vmem [#allocation4], %s590
        %p592 = pneg %p96
        %p593 = pneg %p93
        %p594 = pneg %p117
        %p595 = pneg %p114
        %p596 = pneg %p138
        %p597 = pneg %p135
        %p598 = pneg %p159
        %p599 = pneg %p156
        %p600 = pneg %p180
        %p601 = pneg %p177
        %p602 = pneg %p201
        %p603 = pneg %p198
        %p604 = pneg %p222
        %p605 = pneg %p219
        %p606 = pneg %p243
        %p607 = pneg %p240
        %p608 = pneg %p264
        %p609 = pneg %p261
        %p610 = pneg %p285
        %p611 = pneg %p282
        %p612 = pneg %p306
        %p613 = pneg %p303
        %p614 = pneg %p327
        %p615 = pneg %p324
        %p616 = pneg %p348
        %p617 = pneg %p345
        %p618 = pneg %p369
        %p619 = pneg %p366
        %p620 = pneg %p390
        %p621 = pneg %p387
        %p622 = pneg %p418
        %p623 = pneg %p415
        %s624 = sand.u32 %s405, 1
        %s625 = scalar_lea.sflag [#allocation6], %s624
        %s626 = sand.u32 %s405, 1
        %s627 = smul.addr %s626, 8
        %s628 = scalar_lea.vmem [#allocation12], %s627
        %p629 = scmp.lt.s32.totalorder %s39, 1
        %s630 = scalar_select %p629, %s39, 1
        %p631 = scmp.lt.s32.totalorder %s40, 1
        %s632 = scalar_select %p631, %s40, 1
        %s633 = smul.addr %s630, 2
        %s634 = sadd.s32 %s632, %s633
        %s635 = smul.addr %s634, 8
        %s636 = scalar_lea.vmem %s0, %s635
        %p638 = scmp.eq.s32.totalorder %s40, 0
        // Predicated region
        $region101: #{tpu_custom_call.1} parent=83 // pred_check
          %p639 = pneg %p638
        $region102: #{tpu_custom_call.1} parent=83 // pred_check_branch
          %641 = sbr.rel (%p639) target = $region104
        $region103: #{tpu_custom_call.1} parent=83 // pred_region
          %v642 = vld [vmem:[%s556] sm:$0xff]
          %v643 = vld [vmem:[%s556 + $0x8] sm:$0xff]
          %v644 = vld [vmem:[%s2] sm:$0x1]
          %v645 = vld [vmem:[%s3] sm:$0x1]
          %vm646 = vcmask 261120
          %v647 = vsel %vm646, %v642, 0.0
          %648 = vadd.xlane.f32.xlu0 %v647
          %v649 = vpop.xlane.xlu0 %648
          %v650 = vsel %vm646, %v643, 0.0
          %651 = vadd.xlane.f32.xlu0 %v650
          %v652 = vpop.xlane.xlu0 %651
          %v653 = vrcp.pop 32.0
          %v654 = vmul.f32 32.0, %v653
          %v655 = vsub.f32 1.0, %v654
          %v656 = vmul.f32 %v653, %v655
          %v657 = vadd.f32 %v653, %v656
          %vm658 = vweird.f32 %v653
          %v659 = vsel %vm658, %v653, %v657
          %v660 = vmul.f32 %v649, %v659
          %v661 = vmul.f32 %v652, %v659
          %v662 = vsub.f32 %v642, %v660
          %v663 = vsub.f32 %v643, %v661
          %v664 = vmul.f32 %v662, %v662
          %v665 = vmul.f32 %v663, %v663
          %v666 = vsel %vm646, %v664, 0.0
          %667 = vadd.xlane.f32.xlu0 %v666
          %v668 = vpop.xlane.xlu0 %667
          %v669 = vsel %vm646, %v665, 0.0
          %670 = vadd.xlane.f32.xlu0 %v669
          %v671 = vpop.xlane.xlu0 %670
          %v672 = vmul.f32 %v668, 0.032258064
          %v673 = vmul.f32 %v671, 0.032258064
          %v674 = vrsqrt.pop %v672
          %v675 = vmul.f32 %v674, %v672
          %v676 = vmul.f32 %v675, %v674
          %v677 = vmul.f32 0.5, %v676
          %v678 = vsub.f32 1.5, %v677
          %v679 = vmul.f32 %v674, %v678
          %v680 = vmul.f32 %v672, %v679
          %vm681 = vcmp.eq.f32.partialorder %v672, inf
          %v682 = vsel %vm681, %v672, %v680
          %vm683 = vcmp.eq.f32.partialorder %v672, 0.0
          %v684 = vand.u32 %v672, 2147483648
          %v685 = vsel %vm683, %v684, %v682
          %v686 = vrsqrt.pop %v673
          %v687 = vmul.f32 %v686, %v673
          %v688 = vmul.f32 %v687, %v686
          %v689 = vmul.f32 0.5, %v688
          %v690 = vsub.f32 1.5, %v689
          %v691 = vmul.f32 %v686, %v690
          %v692 = vmul.f32 %v673, %v691
          %vm693 = vcmp.eq.f32.partialorder %v673, inf
          %v694 = vsel %vm693, %v673, %v692
          %vm695 = vcmp.eq.f32.partialorder %v673, 0.0
          %v696 = vand.u32 %v673, 2147483648
          %v697 = vsel %vm695, %v696, %v694
          %v698 = vadd.f32 %v685, 1e-06
          %v699 = vadd.f32 %v697, 1e-06
          %v700 = vrcp.pop %v698
          %v701 = vrcp.pop %v699
          %v703 = vperm.slane %v644, 0
          %v705 = vmul.f32 %v703, %v662
          %v706 = vmul.f32 %v703, %v663
          %v707 = vmul.f32 %v705, %v700
          %v708 = vmul.f32 %v706, %v701
          %v710 = vperm.slane %v645, 0
          %v712 = vadd.f32 %v707, %v710
          %v713 = vadd.f32 %v708, %v710
          %v714 = vld [vmem:[#allocation7] sm:$0xf]
          %v715 = vld [vmem:[#allocation7 + $0x4] sm:$0xf]
          %v716 = vld [vmem:[#allocation7 + $0x8] sm:$0xf]
          %v717 = vld [vmem:[#allocation7 + $0xc] sm:$0xf]
          %v718 = vpack.c.bf16 %v713, %v712
          %v719 = vld [vmem:[%s7] sm:$0x1]
          %v721 = vperm.slane %v719, 0
          %v727 = vunpack.c.l.b16 %v714
          %v728 = vunpack.c.l.b16 %v715
          %v729 = vunpack.c.l.b16 %v716
          %v730 = vunpack.c.l.b16 %v717
          %v731 = vpack.c.b16 %v728, %v727
          %v732 = vpack.c.b16 %v730, %v729
          %v736 = vsel %vm646, %v718, 0
          %738 = vmatpush.bf16.msra.mxu0 0
          %739 = vmatpush.bf16.msra.mxu0 0
          %740 = vmatpush.bf16.msra.mxu0 0
          %741 = vmatpush.bf16.msra.mxu0 0
          %742 = vmatpush.bf16.msra.mxu0 0
          %743 = vmatpush.bf16.msra.mxu0 0
          %744 = vmatpush.bf16.msra.mxu0 %v732
          %745 = vmatpush.bf16.msra.mxu0 %v731
          %746 = vmatmul.bf16.gmra.mxu0 %v736
          %v747 = vpop.f32.mrf.mxu0
          %v748 = vadd.f32 %v721, %v747
          %v749 = vpop.f32.mrf.mxu0
          %v750 = vadd.f32 %v721, %v749
          %751 = vdwg.mxu0
          %752 = vxpose.xlu0.b32.start [1/16] %v748, 128
          %753 = vxpose.xlu0.b32.cont [2/16] %v750, 128
          %754 = vxpose.xlu0.b32.cont [3/16] 0.0, 128
          %755 = vxpose.xlu0.b32.cont [4/16] 0.0, 128
          %756 = vxpose.xlu0.b32.cont [5/16] 0.0, 128
          %757 = vxpose.xlu0.b32.cont [6/16] 0.0, 128
          %758 = vxpose.xlu0.b32.cont [7/16] 0.0, 128
          %759 = vxpose.xlu0.b32.cont [8/16] 0.0, 128
          %760 = vxpose.xlu0.b32.cont [9/16] 0.0, 128
          %761 = vxpose.xlu0.b32.cont [10/16] 0.0, 128
          %762 = vxpose.xlu0.b32.cont [11/16] 0.0, 128
          %763 = vxpose.xlu0.b32.cont [12/16] 0.0, 128
          %764 = vxpose.xlu0.b32.cont [13/16] 0.0, 128
          %765 = vxpose.xlu0.b32.cont [14/16] 0.0, 128
          %766 = vxpose.xlu0.b32.cont [15/16] 0.0, 128
          %767 = vxpose.xlu0.b32.end [16/16] 0.0, 128
          %v768 = vpop.trf.xlu0
          %v769 = vpop.trf.xlu0
          %v770 = vpop.trf.xlu0
          %v771 = vpop.trf.xlu0
          %v772 = vpop.trf.xlu0
          %v773 = vpop.trf.xlu0
          %v774 = vpop.trf.xlu0
          %v775 = vpop.trf.xlu0
          %v776 = vpop.trf.xlu0
          %v777 = vpop.trf.xlu0
          %v778 = vpop.trf.xlu0
          %v779 = vpop.trf.xlu0
          %v780 = vpop.trf.xlu0
          %v781 = vpop.trf.xlu0
          %v782 = vpop.trf.xlu0
          %v783 = vpop.trf.xlu0
          %784 = vxpose.xlu0.b32.start [1/16] %v768, 128
          %785 = vxpose.xlu0.b32.cont [2/16] 0.0, 128
          %786 = vxpose.xlu0.b32.cont [3/16] 0.0, 128
          %787 = vxpose.xlu0.b32.cont [4/16] 0.0, 128
          %788 = vxpose.xlu0.b32.cont [5/16] 0.0, 128
          %789 = vxpose.xlu0.b32.cont [6/16] 0.0, 128
          %790 = vxpose.xlu0.b32.cont [7/16] 0.0, 128
          %791 = vxpose.xlu0.b32.cont [8/16] 0.0, 128
          %792 = vxpose.xlu0.b32.cont [9/16] 0.0, 128
          %793 = vxpose.xlu0.b32.cont [10/16] 0.0, 128
          %794 = vxpose.xlu0.b32.cont [11/16] 0.0, 128
          %795 = vxpose.xlu0.b32.cont [12/16] 0.0, 128
          %796 = vxpose.xlu0.b32.cont [13/16] 0.0, 128
          %797 = vxpose.xlu0.b32.cont [14/16] 0.0, 128
          %798 = vxpose.xlu0.b32.cont [15/16] 0.0, 128
          %799 = vxpose.xlu0.b32.end [16/16] 0.0, 128
          %v800 = vpop.trf.xlu0
          %v801 = vpop.trf.xlu0
          %v802 = vpop.trf.xlu0
          %v803 = vpop.trf.xlu0
          %v804 = vpop.trf.xlu0
          %v805 = vpop.trf.xlu0
          %v806 = vpop.trf.xlu0
          %v807 = vpop.trf.xlu0
          %v808 = vpop.trf.xlu0
          %v809 = vpop.trf.xlu0
          %v810 = vpop.trf.xlu0
          %v811 = vpop.trf.xlu0
          %v812 = vpop.trf.xlu0
          %v813 = vpop.trf.xlu0
          %v814 = vpop.trf.xlu0
          %v815 = vpop.trf.xlu0
          %816 = vxpose.xlu0.b32.start [1/16] %v769, 128
          %817 = vxpose.xlu0.b32.cont [2/16] 0.0, 128
          %818 = vxpose.xlu0.b32.cont [3/16] 0.0, 128
          %819 = vxpose.xlu0.b32.cont [4/16] 0.0, 128
          %820 = vxpose.xlu0.b32.cont [5/16] 0.0, 128
          %821 = vxpose.xlu0.b32.cont [6/16] 0.0, 128
          %822 = vxpose.xlu0.b32.cont [7/16] 0.0, 128
          %823 = vxpose.xlu0.b32.cont [8/16] 0.0, 128
          %824 = vxpose.xlu0.b32.cont [9/16] 0.0, 128
          %825 = vxpose.xlu0.b32.cont [10/16] 0.0, 128
          %826 = vxpose.xlu0.b32.cont [11/16] 0.0, 128
          %827 = vxpose.xlu0.b32.cont [12/16] 0.0, 128
          %828 = vxpose.xlu0.b32.cont [13/16] 0.0, 128
          %829 = vxpose.xlu0.b32.cont [14/16] 0.0, 128
          %830 = vxpose.xlu0.b32.cont [15/16] 0.0, 128
          %831 = vxpose.xlu0.b32.end [16/16] 0.0, 128
          %v832 = vpop.trf.xlu0
          %v833 = vpop.trf.xlu0
          %v834 = vpop.trf.xlu0
          %v835 = vpop.trf.xlu0
          %v836 = vpop.trf.xlu0
          %v837 = vpop.trf.xlu0
          %v838 = vpop.trf.xlu0
          %v839 = vpop.trf.xlu0
          %v840 = vpop.trf.xlu0
          %v841 = vpop.trf.xlu0
          %v842 = vpop.trf.xlu0
          %v843 = vpop.trf.xlu0
          %v844 = vpop.trf.xlu0
          %v845 = vpop.trf.xlu0
          %v846 = vpop.trf.xlu0
          %v847 = vpop.trf.xlu0
          %848 = vxpose.xlu0.b32.start [1/16] %v770, 128
          %849 = vxpose.xlu0.b32.cont [2/16] 0.0, 128
          %850 = vxpose.xlu0.b32.cont [3/16] 0.0, 128
          %851 = vxpose.xlu0.b32.cont [4/16] 0.0, 128
          %852 = vxpose.xlu0.b32.cont [5/16] 0.0, 128
          %853 = vxpose.xlu0.b32.cont [6/16] 0.0, 128
          %854 = vxpose.xlu0.b32.cont [7/16] 0.0, 128
          %855 = vxpose.xlu0.b32.cont [8/16] 0.0, 128
          %856 = vxpose.xlu0.b32.cont [9/16] 0.0, 128
          %857 = vxpose.xlu0.b32.cont [10/16] 0.0, 128
          %858 = vxpose.xlu0.b32.cont [11/16] 0.0, 128
          %859 = vxpose.xlu0.b32.cont [12/16] 0.0, 128
          %860 = vxpose.xlu0.b32.cont [13/16] 0.0, 128
          %861 = vxpose.xlu0.b32.cont [14/16] 0.0, 128
          %862 = vxpose.xlu0.b32.cont [15/16] 0.0, 128
          %863 = vxpose.xlu0.b32.end [16/16] 0.0, 128
          %v864 = vpop.trf.xlu0
          %v865 = vpop.trf.xlu0
          %v866 = vpop.trf.xlu0
          %v867 = vpop.trf.xlu0
          %v868 = vpop.trf.xlu0
          %v869 = vpop.trf.xlu0
          %v870 = vpop.trf.xlu0
          %v871 = vpop.trf.xlu0
          %v872 = vpop.trf.xlu0
          %v873 = vpop.trf.xlu0
          %v874 = vpop.trf.xlu0
          %v875 = vpop.trf.xlu0
          %v876 = vpop.trf.xlu0
          %v877 = vpop.trf.xlu0
          %v878 = vpop.trf.xlu0
          %v879 = vpop.trf.xlu0
          %880 = vxpose.xlu0.b32.start [1/16] %v771, 128
          %881 = vxpose.xlu0.b32.cont [2/16] 0.0, 128
          %882 = vxpose.xlu0.b32.cont [3/16] 0.0, 128
          %883 = vxpose.xlu0.b32.cont [4/16] 0.0, 128
          %884 = vxpose.xlu0.b32.cont [5/16] 0.0, 128
          %885 = vxpose.xlu0.b32.cont [6/16] 0.0, 128
          %886 = vxpose.xlu0.b32.cont [7/16] 0.0, 128
          %887 = vxpose.xlu0.b32.cont [8/16] 0.0, 128
          %888 = vxpose.xlu0.b32.cont [9/16] 0.0, 128
          %889 = vxpose.xlu0.b32.cont [10/16] 0.0, 128
          %890 = vxpose.xlu0.b32.cont [11/16] 0.0, 128
          %891 = vxpose.xlu0.b32.cont [12/16] 0.0, 128
          %892 = vxpose.xlu0.b32.cont [13/16] 0.0, 128
          %893 = vxpose.xlu0.b32.cont [14/16] 0.0, 128
          %894 = vxpose.xlu0.b32.cont [15/16] 0.0, 128
          %895 = vxpose.xlu0.b32.end [16/16] 0.0, 128
          %v896 = vpop.trf.xlu0
          %v897 = vpop.trf.xlu0
          %v898 = vpop.trf.xlu0
          %v899 = vpop.trf.xlu0
          %v900 = vpop.trf.xlu0
          %v901 = vpop.trf.xlu0
          %v902 = vpop.trf.xlu0
          %v903 = vpop.trf.xlu0
          %v904 = vpop.trf.xlu0
          %v905 = vpop.trf.xlu0
          %v906 = vpop.trf.xlu0
          %v907 = vpop.trf.xlu0
          %v908 = vpop.trf.xlu0
          %v909 = vpop.trf.xlu0
          %v910 = vpop.trf.xlu0
          %v911 = vpop.trf.xlu0
          %912 = vxpose.xlu0.b32.start [1/16] %v772, 128
          %913 = vxpose.xlu0.b32.cont [2/16] 0.0, 128
          %914 = vxpose.xlu0.b32.cont [3/16] 0.0, 128
          %915 = vxpose.xlu0.b32.cont [4/16] 0.0, 128
          %916 = vxpose.xlu0.b32.cont [5/16] 0.0, 128
          %917 = vxpose.xlu0.b32.cont [6/16] 0.0, 128
          %918 = vxpose.xlu0.b32.cont [7/16] 0.0, 128
          %919 = vxpose.xlu0.b32.cont [8/16] 0.0, 128
          %920 = vxpose.xlu0.b32.cont [9/16] 0.0, 128
          %921 = vxpose.xlu0.b32.cont [10/16] 0.0, 128
          %922 = vxpose.xlu0.b32.cont [11/16] 0.0, 128
          %923 = vxpose.xlu0.b32.cont [12/16] 0.0, 128
          %924 = vxpose.xlu0.b32.cont [13/16] 0.0, 128
          %925 = vxpose.xlu0.b32.cont [14/16] 0.0, 128
          %926 = vxpose.xlu0.b32.cont [15/16] 0.0, 128
          %927 = vxpose.xlu0.b32.end [16/16] 0.0, 128
          %v928 = vpop.trf.xlu0
          %v929 = vpop.trf.xlu0
          %v930 = vpop.trf.xlu0
          %v931 = vpop.trf.xlu0
          %v932 = vpop.trf.xlu0
          %v933 = vpop.trf.xlu0
          %v934 = vpop.trf.xlu0
          %v935 = vpop.trf.xlu0
          %v936 = vpop.trf.xlu0
          %v937 = vpop.trf.xlu0
          %v938 = vpop.trf.xlu0
          %v939 = vpop.trf.xlu0
          %v940 = vpop.trf.xlu0
          %v941 = vpop.trf.xlu0
          %v942 = vpop.trf.xlu0
          %v943 = vpop.trf.xlu0
          %944 = vxpose.xlu0.b32.start [1/16] %v773, 128
          %945 = vxpose.xlu0.b32.cont [2/16] 0.0, 128
          %946 = vxpose.xlu0.b32.cont [3/16] 0.0, 128
          %947 = vxpose.xlu0.b32.cont [4/16] 0.0, 128
          %948 = vxpose.xlu0.b32.cont [5/16] 0.0, 128
          %949 = vxpose.xlu0.b32.cont [6/16] 0.0, 128
          %950 = vxpose.xlu0.b32.cont [7/16] 0.0, 128
          %951 = vxpose.xlu0.b32.cont [8/16] 0.0, 128
          %952 = vxpose.xlu0.b32.cont [9/16] 0.0, 128
          %953 = vxpose.xlu0.b32.cont [10/16] 0.0, 128
          %954 = vxpose.xlu0.b32.cont [11/16] 0.0, 128
          %955 = vxpose.xlu0.b32.cont [12/16] 0.0, 128
          %956 = vxpose.xlu0.b32.cont [13/16] 0.0, 128
          %957 = vxpose.xlu0.b32.cont [14/16] 0.0, 128
          %958 = vxpose.xlu0.b32.cont [15/16] 0.0, 128
          %959 = vxpose.xlu0.b32.end [16/16] 0.0, 128
          %v960 = vpop.trf.xlu0
          %v961 = vpop.trf.xlu0
          %v962 = vpop.trf.xlu0
          %v963 = vpop.trf.xlu0
          %v964 = vpop.trf.xlu0
          %v965 = vpop.trf.xlu0
          %v966 = vpop.trf.xlu0
          %v967 = vpop.trf.xlu0
          %v968 = vpop.trf.xlu0
          %v969 = vpop.trf.xlu0
          %v970 = vpop.trf.xlu0
          %v971 = vpop.trf.xlu0
          %v972 = vpop.trf.xlu0
          %v973 = vpop.trf.xlu0
          %v974 = vpop.trf.xlu0
          %v975 = vpop.trf.xlu0
          %976 = vxpose.xlu0.b32.start [1/16] %v774, 128
          %977 = vxpose.xlu0.b32.cont [2/16] 0.0, 128
          %978 = vxpose.xlu0.b32.cont [3/16] 0.0, 128
          %979 = vxpose.xlu0.b32.cont [4/16] 0.0, 128
          %980 = vxpose.xlu0.b32.cont [5/16] 0.0, 128
          %981 = vxpose.xlu0.b32.cont [6/16] 0.0, 128
          %982 = vxpose.xlu0.b32.cont [7/16] 0.0, 128
          %983 = vxpose.xlu0.b32.cont [8/16] 0.0, 128
          %984 = vxpose.xlu0.b32.cont [9/16] 0.0, 128
          %985 = vxpose.xlu0.b32.cont [10/16] 0.0, 128
          %986 = vxpose.xlu0.b32.cont [11/16] 0.0, 128
          %987 = vxpose.xlu0.b32.cont [12/16] 0.0, 128
          %988 = vxpose.xlu0.b32.cont [13/16] 0.0, 128
          %989 = vxpose.xlu0.b32.cont [14/16] 0.0, 128
          %990 = vxpose.xlu0.b32.cont [15/16] 0.0, 128
          %991 = vxpose.xlu0.b32.end [16/16] 0.0, 128
          %v992 = vpop.trf.xlu0
          %v993 = vpop.trf.xlu0
          %v994 = vpop.trf.xlu0
          %v995 = vpop.trf.xlu0
          %v996 = vpop.trf.xlu0
          %v997 = vpop.trf.xlu0
          %v998 = vpop.trf.xlu0
          %v999 = vpop.trf.xlu0
          %v1000 = vpop.trf.xlu0
          %v1001 = vpop.trf.xlu0
          %v1002 = vpop.trf.xlu0
          %v1003 = vpop.trf.xlu0
          %v1004 = vpop.trf.xlu0
          %v1005 = vpop.trf.xlu0
          %v1006 = vpop.trf.xlu0
          %v1007 = vpop.trf.xlu0
          %1008 = vxpose.xlu0.b32.start [1/16] %v775, 128
          %1009 = vxpose.xlu0.b32.cont [2/16] 0.0, 128
          %1010 = vxpose.xlu0.b32.cont [3/16] 0.0, 128
          %1011 = vxpose.xlu0.b32.cont [4/16] 0.0, 128
          %1012 = vxpose.xlu0.b32.cont [5/16] 0.0, 128
          %1013 = vxpose.xlu0.b32.cont [6/16] 0.0, 128
          %1014 = vxpose.xlu0.b32.cont [7/16] 0.0, 128
          %1015 = vxpose.xlu0.b32.cont [8/16] 0.0, 128
          %1016 = vxpose.xlu0.b32.cont [9/16] 0.0, 128
          %1017 = vxpose.xlu0.b32.cont [10/16] 0.0, 128
          %1018 = vxpose.xlu0.b32.cont [11/16] 0.0, 128
          %1019 = vxpose.xlu0.b32.cont [12/16] 0.0, 128
          %1020 = vxpose.xlu0.b32.cont [13/16] 0.0, 128
          %1021 = vxpose.xlu0.b32.cont [14/16] 0.0, 128
          %1022 = vxpose.xlu0.b32.cont [15/16] 0.0, 128
          %1023 = vxpose.xlu0.b32.end [16/16] 0.0, 128
          %v1024 = vpop.trf.xlu0
          %v1025 = vpop.trf.xlu0
          %v1026 = vpop.trf.xlu0
          %v1027 = vpop.trf.xlu0
          %v1028 = vpop.trf.xlu0
          %v1029 = vpop.trf.xlu0
          %v1030 = vpop.trf.xlu0
          %v1031 = vpop.trf.xlu0
          %v1032 = vpop.trf.xlu0
          %v1033 = vpop.trf.xlu0
          %v1034 = vpop.trf.xlu0
          %v1035 = vpop.trf.xlu0
          %v1036 = vpop.trf.xlu0
          %v1037 = vpop.trf.xlu0
          %v1038 = vpop.trf.xlu0
          %v1039 = vpop.trf.xlu0
          %v1040 = vpack.c.bf16 %v800, %v800
          %v1041 = vpack.c.bf16 %v801, %v801
          %v1042 = vpack.c.bf16 %v832, %v832
          %v1043 = vpack.c.bf16 %v833, %v833
          %v1044 = vpack.c.bf16 %v864, %v864
          %v1045 = vpack.c.bf16 %v865, %v865
          %v1046 = vpack.c.bf16 %v896, %v896
          %v1047 = vpack.c.bf16 %v897, %v897
          %vm1048 = vcmask 60416
          %1049 = vst.msk [vmem:[#allocation2] sm:$0xf] %vm1048, %v1040
          %1050 = vst.msk [vmem:[#allocation2 + $0x4] sm:$0xf] %vm1048, %v1041
          %1051 = vst.msk [vmem:[#allocation2 + $0x8] sm:$0xf] %vm1048, %v1042
          %1052 = vst.msk [vmem:[#allocation2 + $0xc] sm:$0xf] %vm1048, %v1043
          %1053 = vst.msk [vmem:[#allocation2 + $0x10] sm:$0xf] %vm1048, %v1044
          %1054 = vst.msk [vmem:[#allocation2 + $0x14] sm:$0xf] %vm1048, %v1045
          %1055 = vst.msk [vmem:[#allocation2 + $0x18] sm:$0xf] %vm1048, %v1046
          %1056 = vst.msk [vmem:[#allocation2 + $0x1c] sm:$0xf] %vm1048, %v1047
          %v1057 = vpack.c.bf16 %v928, %v928
          %v1058 = vpack.c.bf16 %v929, %v929
          %v1059 = vpack.c.bf16 %v960, %v960
          %v1060 = vpack.c.bf16 %v961, %v961
          %v1061 = vpack.c.bf16 %v992, %v992
          %v1062 = vpack.c.bf16 %v993, %v993
          %v1063 = vpack.c.bf16 %v1024, %v1024
          %v1064 = vpack.c.bf16 %v1025, %v1025
          %1065 = vst.msk [vmem:[#allocation3] sm:$0xf] %vm1048, %v1057
          %1066 = vst.msk [vmem:[#allocation3 + $0x4] sm:$0xf] %vm1048, %v1058
          %1067 = vst.msk [vmem:[#allocation3 + $0x8] sm:$0xf] %vm1048, %v1059
          %1068 = vst.msk [vmem:[#allocation3 + $0xc] sm:$0xf] %vm1048, %v1060
          %1069 = vst.msk [vmem:[#allocation3 + $0x10] sm:$0xf] %vm1048, %v1061
          %1070 = vst.msk [vmem:[#allocation3 + $0x14] sm:$0xf] %vm1048, %v1062
          %1071 = vst.msk [vmem:[#allocation3 + $0x18] sm:$0xf] %vm1048, %v1063
          %1072 = vst.msk [vmem:[#allocation3 + $0x1c] sm:$0xf] %vm1048, %v1064
        $region104: #{tpu_custom_call.1} parent=83 // pred_fallthru
          _
        %v1073 = vld [vmem:[%s636] sm:$0xff]
        %v1074 = vld [vmem:[%s2] sm:$0x1]
        %v1075 = vld [vmem:[%s3] sm:$0x1]
        %vm1076 = vcmask 261120
        %v1077 = vsel %vm1076, %v1073, 0.0
        %1078 = vadd.xlane.f32.xlu0 %v1077
        %v1079 = vpop.xlane.xlu0 %1078
        %v1080 = vrcp.pop 32.0
        %v1081 = vmul.f32 32.0, %v1080
        %v1082 = vsub.f32 1.0, %v1081
        %v1083 = vmul.f32 %v1080, %v1082
        %v1084 = vadd.f32 %v1080, %v1083
        %vm1085 = vweird.f32 %v1080
        %v1086 = vsel %vm1085, %v1080, %v1084
        %v1087 = vmul.f32 %v1079, %v1086
        %v1088 = vsub.f32 %v1073, %v1087
        %v1089 = vmul.f32 %v1088, %v1088
        %v1090 = vsel %vm1076, %v1089, 0.0
        %1091 = vadd.xlane.f32.xlu0 %v1090
        %v1092 = vpop.xlane.xlu0 %1091
        %v1093 = vmul.f32 %v1092, 0.032258064
        %v1094 = vrsqrt.pop %v1093
        %v1095 = vmul.f32 %v1094, %v1093
        %v1096 = vmul.f32 %v1095, %v1094
        %v1097 = vmul.f32 0.5, %v1096
        %v1098 = vsub.f32 1.5, %v1097
        %v1099 = vmul.f32 %v1094, %v1098
        %v1100 = vmul.f32 %v1093, %v1099
        %vm1101 = vcmp.eq.f32.partialorder %v1093, inf
        %v1102 = vsel %vm1101, %v1093, %v1100
        %vm1103 = vcmp.eq.f32.partialorder %v1093, 0.0
        %v1104 = vand.u32 %v1093, 2147483648
        %v1105 = vsel %vm1103, %v1104, %v1102
        %v1106 = vadd.f32 %v1105, 1e-06
        %v1107 = vrcp.pop %v1106
        %v1109 = vperm.slane %v1074, 0
        %v1111 = vmul.f32 %v1109, %v1088
        %v1112 = vmul.f32 %v1111, %v1107
        %v1114 = vperm.slane %v1075, 0
        %v1116 = vadd.f32 %v1112, %v1114
        %v1117 = vld [vmem:[%s4] sm:$0xf]
        %v1118 = vld [vmem:[%s4 + $0x4] sm:$0xf]
        %v1119 = vld [vmem:[%s4 + $0x8] sm:$0xf]
        %v1120 = vld [vmem:[%s4 + $0xc] sm:$0xf]
        %v1121 = vpack.c.bf16 %v1116, %v1116
        %v1122 = vld [vmem:[%s5] sm:$0x1]
        %v1124 = vperm.slane %v1122, 0
        %v1130 = vunpack.c.l.b16 %v1117
        %v1131 = vunpack.c.l.b16 %v1118
        %v1132 = vunpack.c.l.b16 %v1119
        %v1133 = vunpack.c.l.b16 %v1120
        %v1134 = vpack.c.b16 %v1131, %v1130
        %v1135 = vpack.c.b16 %v1133, %v1132
        %v1139 = vsel %vm1076, %v1121, 0
        %1141 = vmatpush.bf16.msra.mxu0 0
        %1142 = vmatpush.bf16.msra.mxu0 0
        %1143 = vmatpush.bf16.msra.mxu0 0
        %1144 = vmatpush.bf16.msra.mxu0 0
        %1145 = vmatpush.bf16.msra.mxu0 0
        %1146 = vmatpush.bf16.msra.mxu0 0
        %1147 = vmatpush.bf16.msra.mxu0 %v1135
        %1148 = vmatpush.bf16.msra.mxu0 %v1134
        %1149 = vmatmul.bf16.gmra.mxu0 %v1139
        %v1150 = vpop.f32.mrf.mxu0
        %v1151 = vadd.f32 %v1124, %v1150
        %v1152 = vpop.f32.mrf.mxu0
        %1153 = vdwg.mxu0
        %1154 = vxpose.xlu0.b32.start [1/16] %v1151, 128
        %1155 = vxpose.xlu0.b32.cont [2/16] 0.0, 128
        %1156 = vxpose.xlu0.b32.cont [3/16] 0.0, 128
        %1157 = vxpose.xlu0.b32.cont [4/16] 0.0, 128
        %1158 = vxpose.xlu0.b32.cont [5/16] 0.0, 128
        %1159 = vxpose.xlu0.b32.cont [6/16] 0.0, 128
        %1160 = vxpose.xlu0.b32.cont [7/16] 0.0, 128
        %1161 = vxpose.xlu0.b32.cont [8/16] 0.0, 128
        %1162 = vxpose.xlu0.b32.cont [9/16] 0.0, 128
        %1163 = vxpose.xlu0.b32.cont [10/16] 0.0, 128
        %1164 = vxpose.xlu0.b32.cont [11/16] 0.0, 128
        %1165 = vxpose.xlu0.b32.cont [12/16] 0.0, 128
        %1166 = vxpose.xlu0.b32.cont [13/16] 0.0, 128
        %1167 = vxpose.xlu0.b32.cont [14/16] 0.0, 128
        %1168 = vxpose.xlu0.b32.cont [15/16] 0.0, 128
        %1169 = vxpose.xlu0.b32.end [16/16] 0.0, 128
        %v1170 = vpop.trf.xlu0
        %v1171 = vpop.trf.xlu0
        %v1172 = vpop.trf.xlu0
        %v1173 = vpop.trf.xlu0
        %v1174 = vpop.trf.xlu0
        %v1175 = vpop.trf.xlu0
        %v1176 = vpop.trf.xlu0
        %v1177 = vpop.trf.xlu0
        %v1178 = vpop.trf.xlu0
        %v1179 = vpop.trf.xlu0
        %v1180 = vpop.trf.xlu0
        %v1181 = vpop.trf.xlu0
        %v1182 = vpop.trf.xlu0
        %v1183 = vpop.trf.xlu0
        %v1184 = vpop.trf.xlu0
        %v1185 = vpop.trf.xlu0
        %1186 = vxpose.xlu0.b32.start [1/16] %v1170, 128
        %1187 = vxpose.xlu0.b32.cont [2/16] 0.0, 128
        %1188 = vxpose.xlu0.b32.cont [3/16] 0.0, 128
        %1189 = vxpose.xlu0.b32.cont [4/16] 0.0, 128
        %1190 = vxpose.xlu0.b32.cont [5/16] 0.0, 128
        %1191 = vxpose.xlu0.b32.cont [6/16] 0.0, 128
        %1192 = vxpose.xlu0.b32.cont [7/16] 0.0, 128
        %1193 = vxpose.xlu0.b32.cont [8/16] 0.0, 128
        %1194 = vxpose.xlu0.b32.cont [9/16] 0.0, 128
        %1195 = vxpose.xlu0.b32.cont [10/16] 0.0, 128
        %1196 = vxpose.xlu0.b32.cont [11/16] 0.0, 128
        %1197 = vxpose.xlu0.b32.cont [12/16] 0.0, 128
        %1198 = vxpose.xlu0.b32.cont [13/16] 0.0, 128
        %1199 = vxpose.xlu0.b32.cont [14/16] 0.0, 128
        %1200 = vxpose.xlu0.b32.cont [15/16] 0.0, 128
        %1201 = vxpose.xlu0.b32.end [16/16] 0.0, 128
        %v1202 = vpop.trf.xlu0
        %v1203 = vpop.trf.xlu0
        %v1204 = vpop.trf.xlu0
        %v1205 = vpop.trf.xlu0
        %v1206 = vpop.trf.xlu0
        %v1207 = vpop.trf.xlu0
        %v1208 = vpop.trf.xlu0
        %v1209 = vpop.trf.xlu0
        %v1210 = vpop.trf.xlu0
        %v1211 = vpop.trf.xlu0
        %v1212 = vpop.trf.xlu0
        %v1213 = vpop.trf.xlu0
        %v1214 = vpop.trf.xlu0
        %v1215 = vpop.trf.xlu0
        %v1216 = vpop.trf.xlu0
        %v1217 = vpop.trf.xlu0
        %1218 = vxpose.xlu0.b32.start [1/16] %v1171, 128
        %1219 = vxpose.xlu0.b32.cont [2/16] 0.0, 128
        %1220 = vxpose.xlu0.b32.cont [3/16] 0.0, 128
        %1221 = vxpose.xlu0.b32.cont [4/16] 0.0, 128
        %1222 = vxpose.xlu0.b32.cont [5/16] 0.0, 128
        %1223 = vxpose.xlu0.b32.cont [6/16] 0.0, 128
        %1224 = vxpose.xlu0.b32.cont [7/16] 0.0, 128
        %1225 = vxpose.xlu0.b32.cont [8/16] 0.0, 128
        %1226 = vxpose.xlu0.b32.cont [9/16] 0.0, 128
        %1227 = vxpose.xlu0.b32.cont [10/16] 0.0, 128
        %1228 = vxpose.xlu0.b32.cont [11/16] 0.0, 128
        %1229 = vxpose.xlu0.b32.cont [12/16] 0.0, 128
        %1230 = vxpose.xlu0.b32.cont [13/16] 0.0, 128
        %1231 = vxpose.xlu0.b32.cont [14/16] 0.0, 128
        %1232 = vxpose.xlu0.b32.cont [15/16] 0.0, 128
        %1233 = vxpose.xlu0.b32.end [16/16] 0.0, 128
        %v1234 = vpop.trf.xlu0
        %v1235 = vpop.trf.xlu0
        %v1236 = vpop.trf.xlu0
        %v1237 = vpop.trf.xlu0
        %v1238 = vpop.trf.xlu0
        %v1239 = vpop.trf.xlu0
        %v1240 = vpop.trf.xlu0
        %v1241 = vpop.trf.xlu0
        %v1242 = vpop.trf.xlu0
        %v1243 = vpop.trf.xlu0
        %v1244 = vpop.trf.xlu0
        %v1245 = vpop.trf.xlu0
        %v1246 = vpop.trf.xlu0
        %v1247 = vpop.trf.xlu0
        %v1248 = vpop.trf.xlu0
        %v1249 = vpop.trf.xlu0
        %1250 = vxpose.xlu0.b32.start [1/16] %v1172, 128
        %1251 = vxpose.xlu0.b32.cont [2/16] 0.0, 128
        %1252 = vxpose.xlu0.b32.cont [3/16] 0.0, 128
        %1253 = vxpose.xlu0.b32.cont [4/16] 0.0, 128
        %1254 = vxpose.xlu0.b32.cont [5/16] 0.0, 128
        %1255 = vxpose.xlu0.b32.cont [6/16] 0.0, 128
        %1256 = vxpose.xlu0.b32.cont [7/16] 0.0, 128
        %1257 = vxpose.xlu0.b32.cont [8/16] 0.0, 128
        %1258 = vxpose.xlu0.b32.cont [9/16] 0.0, 128
        %1259 = vxpose.xlu0.b32.cont [10/16] 0.0, 128
        %1260 = vxpose.xlu0.b32.cont [11/16] 0.0, 128
        %1261 = vxpose.xlu0.b32.cont [12/16] 0.0, 128
        %1262 = vxpose.xlu0.b32.cont [13/16] 0.0, 128
        %1263 = vxpose.xlu0.b32.cont [14/16] 0.0, 128
        %1264 = vxpose.xlu0.b32.cont [15/16] 0.0, 128
        %1265 = vxpose.xlu0.b32.end [16/16] 0.0, 128
        %v1266 = vpop.trf.xlu0
        %v1267 = vpop.trf.xlu0
        %v1268 = vpop.trf.xlu0
        %v1269 = vpop.trf.xlu0
        %v1270 = vpop.trf.xlu0
        %v1271 = vpop.trf.xlu0
        %v1272 = vpop.trf.xlu0
        %v1273 = vpop.trf.xlu0
        %v1274 = vpop.trf.xlu0
        %v1275 = vpop.trf.xlu0
        %v1276 = vpop.trf.xlu0
        %v1277 = vpop.trf.xlu0
        %v1278 = vpop.trf.xlu0
        %v1279 = vpop.trf.xlu0
        %v1280 = vpop.trf.xlu0
        %v1281 = vpop.trf.xlu0
        %1282 = vxpose.xlu0.b32.start [1/16] %v1173, 128
        %1283 = vxpose.xlu0.b32.cont [2/16] 0.0, 128
        %1284 = vxpose.xlu0.b32.cont [3/16] 0.0, 128
        %1285 = vxpose.xlu0.b32.cont [4/16] 0.0, 128
        %1286 = vxpose.xlu0.b32.cont [5/16] 0.0, 128
        %1287 = vxpose.xlu0.b32.cont [6/16] 0.0, 128
        %1288 = vxpose.xlu0.b32.cont [7/16] 0.0, 128
        %1289 = vxpose.xlu0.b32.cont [8/16] 0.0, 128
        %1290 = vxpose.xlu0.b32.cont [9/16] 0.0, 128
        %1291 = vxpose.xlu0.b32.cont [10/16] 0.0, 128
        %1292 = vxpose.xlu0.b32.cont [11/16] 0.0, 128
        %1293 = vxpose.xlu0.b32.cont [12/16] 0.0, 128
        %1294 = vxpose.xlu0.b32.cont [13/16] 0.0, 128
        %1295 = vxpose.xlu0.b32.cont [14/16] 0.0, 128
        %1296 = vxpose.xlu0.b32.cont [15/16] 0.0, 128
        %1297 = vxpose.xlu0.b32.end [16/16] 0.0, 128
        %v1298 = vpop.trf.xlu0
        %v1299 = vpop.trf.xlu0
        %v1300 = vpop.trf.xlu0
        %v1301 = vpop.trf.xlu0
        %v1302 = vpop.trf.xlu0
        %v1303 = vpop.trf.xlu0
        %v1304 = vpop.trf.xlu0
        %v1305 = vpop.trf.xlu0
        %v1306 = vpop.trf.xlu0
        %v1307 = vpop.trf.xlu0
        %v1308 = vpop.trf.xlu0
        %v1309 = vpop.trf.xlu0
        %v1310 = vpop.trf.xlu0
        %v1311 = vpop.trf.xlu0
        %v1312 = vpop.trf.xlu0
        %v1313 = vpop.trf.xlu0
        %v1314 = vpack.c.bf16 %v1202, %v1202
        %v1315 = vpack.c.bf16 %v1234, %v1234
        %v1316 = vpack.c.bf16 %v1266, %v1266
        %v1317 = vpack.c.bf16 %v1298, %v1298
        %v1318 = vld [vmem:[#allocation2] sm:$0xf]
        %v1319 = vld [vmem:[#allocation2 + $0x8] sm:$0xf]
        %v1320 = vld [vmem:[#allocation2 + $0x10] sm:$0xf]
        %v1321 = vld [vmem:[#allocation2 + $0x18] sm:$0xf]
        %vm1322 = vcmask 64512
        %v1324 = vsel %vm1322, %v1314, 0
        %v1327 = vsel %vm1322, %v1318, 0
        %1329 = vmatpush.bf16.xpose.msra.mxu0 0
        %1330 = vmatpush.bf16.xpose.msra.mxu0 0
        %1331 = vmatpush.bf16.xpose.msra.mxu0 0
        %1332 = vmatpush.bf16.xpose.msra.mxu0 0
        %1333 = vmatpush.bf16.xpose.msra.mxu0 0
        %1334 = vmatpush.bf16.xpose.msra.mxu0 0
        %1335 = vmatpush.bf16.xpose.msra.mxu0 0
        %1336 = vmatpush.bf16.xpose.msra.mxu0 %v1327
        %1337 = vmatmul.bf16.gmra.mxu0 %v1324
        %v1338 = vpop.f32.mrf.mxu0
        %v1339 = vadd.f32 0.0, %v1338
        %v1340 = vpop.f32.mrf.mxu0
        %1341 = vdwg.mxu0
        %v1343 = vsel %vm1322, %v1315, 0
        %v1346 = vsel %vm1322, %v1319, 0
        %1348 = vmatpush.bf16.xpose.msra.mxu0 0
        %1349 = vmatpush.bf16.xpose.msra.mxu0 0
        %1350 = vmatpush.bf16.xpose.msra.mxu0 0
        %1351 = vmatpush.bf16.xpose.msra.mxu0 0
        %1352 = vmatpush.bf16.xpose.msra.mxu0 0
        %1353 = vmatpush.bf16.xpose.msra.mxu0 0
        %1354 = vmatpush.bf16.xpose.msra.mxu0 0
        %1355 = vmatpush.bf16.xpose.msra.mxu0 %v1346
        %1356 = vmatmul.bf16.gmra.mxu0 %v1343
        %v1357 = vpop.f32.mrf.mxu0
        %v1358 = vadd.f32 0.0, %v1357
        %v1359 = vpop.f32.mrf.mxu0
        %1360 = vdwg.mxu0
        %v1362 = vsel %vm1322, %v1316, 0
        %v1365 = vsel %vm1322, %v1320, 0
        %1367 = vmatpush.bf16.xpose.msra.mxu0 0
        %1368 = vmatpush.bf16.xpose.msra.mxu0 0
        %1369 = vmatpush.bf16.xpose.msra.mxu0 0
        %1370 = vmatpush.bf16.xpose.msra.mxu0 0
        %1371 = vmatpush.bf16.xpose.msra.mxu0 0
        %1372 = vmatpush.bf16.xpose.msra.mxu0 0
        %1373 = vmatpush.bf16.xpose.msra.mxu0 0
        %1374 = vmatpush.bf16.xpose.msra.mxu0 %v1365
        %1375 = vmatmul.bf16.gmra.mxu0 %v1362
        %v1376 = vpop.f32.mrf.mxu0
        %v1377 = vadd.f32 0.0, %v1376
        %v1378 = vpop.f32.mrf.mxu0
        %1379 = vdwg.mxu0
        %v1381 = vsel %vm1322, %v1317, 0
        %v1384 = vsel %vm1322, %v1321, 0
        %1386 = vmatpush.bf16.xpose.msra.mxu0 0
        %1387 = vmatpush.bf16.xpose.msra.mxu0 0
        %1388 = vmatpush.bf16.xpose.msra.mxu0 0
        %1389 = vmatpush.bf16.xpose.msra.mxu0 0
        %1390 = vmatpush.bf16.xpose.msra.mxu0 0
        %1391 = vmatpush.bf16.xpose.msra.mxu0 0
        %1392 = vmatpush.bf16.xpose.msra.mxu0 0
        %1393 = vmatpush.bf16.xpose.msra.mxu0 %v1384
        %1394 = vmatmul.bf16.gmra.mxu0 %v1381
        %v1395 = vpop.f32.mrf.mxu0
        %v1396 = vadd.f32 0.0, %v1395
        %v1397 = vpop.f32.mrf.mxu0
        %1398 = vdwg.mxu0
        %v1399 = vsel %vm1322, %v1339, -inf
        %1400 = vmax.xlane.f32.xlu0 %v1399
        %v1401 = vpop.xlane.xlu0 %1400
        %v1402 = vsel %vm1322, %v1358, -inf
        %1403 = vmax.xlane.f32.xlu0 %v1402
        %v1404 = vpop.xlane.xlu0 %1403
        %v1405 = vsel %vm1322, %v1377, -inf
        %1406 = vmax.xlane.f32.xlu0 %v1405
        %v1407 = vpop.xlane.xlu0 %1406
        %v1408 = vsel %vm1322, %v1396, -inf
        %1409 = vmax.xlane.f32.xlu0 %v1408
        %v1410 = vpop.xlane.xlu0 %1409
        %v1411 = vsub.f32 %v1339, %v1401
        %v1412 = vsub.f32 %v1358, %v1404
        %v1413 = vsub.f32 %v1377, %v1407
        %v1414 = vsub.f32 %v1396, %v1410
        %v1415 = vmul.f32 %v1411, 1.442695
        %v1416 = vpow.pop %v1415
        %v1417 = vmul.f32 %v1412, 1.442695
        %v1418 = vpow.pop %v1417
        %v1419 = vmul.f32 %v1413, 1.442695
        %v1420 = vpow.pop %v1419
        %v1421 = vmul.f32 %v1414, 1.442695
        %v1422 = vpow.pop %v1421
        %v1423 = vsel %vm1322, %v1416, 0.0
        %1424 = vadd.xlane.f32.xlu0 %v1423
        %v1425 = vpop.xlane.xlu0 %1424
        %v1426 = vsel %vm1322, %v1418, 0.0
        %1427 = vadd.xlane.f32.xlu0 %v1426
        %v1428 = vpop.xlane.xlu0 %1427
        %v1429 = vsel %vm1322, %v1420, 0.0
        %1430 = vadd.xlane.f32.xlu0 %v1429
        %v1431 = vpop.xlane.xlu0 %1430
        %v1432 = vsel %vm1322, %v1422, 0.0
        %1433 = vadd.xlane.f32.xlu0 %v1432
        %v1434 = vpop.xlane.xlu0 %1433
        %v1435 = vld [vmem:[#allocation3] sm:$0xf]
        %v1436 = vld [vmem:[#allocation3 + $0x8] sm:$0xf]
        %v1437 = vld [vmem:[#allocation3 + $0x10] sm:$0xf]
        %v1438 = vld [vmem:[#allocation3 + $0x18] sm:$0xf]
        %v1439 = vpack.c.bf16 %v1416, %v1416
        %v1440 = vpack.c.bf16 %v1418, %v1418
        %v1441 = vpack.c.bf16 %v1420, %v1420
        %v1442 = vpack.c.bf16 %v1422, %v1422
        %v1444 = vsel %vm1322, %v1439, 0
        %vm1446 = vcmask 1043456
        %v1448 = vsel %vm1446, %v1435, 0
        %1450 = vmatpush.bf16.msra.mxu0 0
        %1451 = vmatpush.bf16.msra.mxu0 0
        %1452 = vmatpush.bf16.msra.mxu0 0
        %1453 = vmatpush.bf16.msra.mxu0 0
        %1454 = vmatpush.bf16.msra.mxu0 0
        %1455 = vmatpush.bf16.msra.mxu0 0
        %1456 = vmatpush.bf16.msra.mxu0 0
        %1457 = vmatpush.bf16.msra.mxu0 %v1448
        %1458 = vmatmul.bf16.gmra.mxu0 %v1444
        %v1459 = vpop.f32.mrf.mxu0
        %v1460 = vadd.f32 0.0, %v1459
        %v1461 = vpop.f32.mrf.mxu0
        %1462 = vdwg.mxu0
        %v1464 = vsel %vm1322, %v1440, 0
        %v1467 = vsel %vm1446, %v1436, 0
        %1469 = vmatpush.bf16.msra.mxu0 0
        %1470 = vmatpush.bf16.msra.mxu0 0
        %1471 = vmatpush.bf16.msra.mxu0 0
        %1472 = vmatpush.bf16.msra.mxu0 0
        %1473 = vmatpush.bf16.msra.mxu0 0
        %1474 = vmatpush.bf16.msra.mxu0 0
        %1475 = vmatpush.bf16.msra.mxu0 0
        %1476 = vmatpush.bf16.msra.mxu0 %v1467
        %1477 = vmatmul.bf16.gmra.mxu0 %v1464
        %v1478 = vpop.f32.mrf.mxu0
        %v1479 = vadd.f32 0.0, %v1478
        %v1480 = vpop.f32.mrf.mxu0
        %1481 = vdwg.mxu0
        %v1483 = vsel %vm1322, %v1441, 0
        %v1486 = vsel %vm1446, %v1437, 0
        %1488 = vmatpush.bf16.msra.mxu0 0
        %1489 = vmatpush.bf16.msra.mxu0 0
        %1490 = vmatpush.bf16.msra.mxu0 0
        %1491 = vmatpush.bf16.msra.mxu0 0
        %1492 = vmatpush.bf16.msra.mxu0 0
        %1493 = vmatpush.bf16.msra.mxu0 0
        %1494 = vmatpush.bf16.msra.mxu0 0
        %1495 = vmatpush.bf16.msra.mxu0 %v1486
        %1496 = vmatmul.bf16.gmra.mxu0 %v1483
        %v1497 = vpop.f32.mrf.mxu0
        %v1498 = vadd.f32 0.0, %v1497
        %v1499 = vpop.f32.mrf.mxu0
        %1500 = vdwg.mxu0
        %v1502 = vsel %vm1322, %v1442, 0
        %v1505 = vsel %vm1446, %v1438, 0
        %1507 = vmatpush.bf16.msra.mxu0 0
        %1508 = vmatpush.bf16.msra.mxu0 0
        %1509 = vmatpush.bf16.msra.mxu0 0
        %1510 = vmatpush.bf16.msra.mxu0 0
        %1511 = vmatpush.bf16.msra.mxu0 0
        %1512 = vmatpush.bf16.msra.mxu0 0
        %1513 = vmatpush.bf16.msra.mxu0 0
        %1514 = vmatpush.bf16.msra.mxu0 %v1505
        %1515 = vmatmul.bf16.gmra.mxu0 %v1502
        %v1516 = vpop.f32.mrf.mxu0
        %v1517 = vadd.f32 0.0, %v1516
        %v1518 = vpop.f32.mrf.mxu0
        %1519 = vdwg.mxu0
        %v1520 = vld [vmem:[#allocation2 + $0x4] sm:$0xf]
        %v1521 = vld [vmem:[#allocation2 + $0xc] sm:$0xf]
        %v1522 = vld [vmem:[#allocation2 + $0x14] sm:$0xf]
        %v1523 = vld [vmem:[#allocation2 + $0x1c] sm:$0xf]
        %v1525 = vsel %vm1322, %v1520, 0
        %1527 = vmatpush.bf16.xpose.msra.mxu0 0
        %1528 = vmatpush.bf16.xpose.msra.mxu0 0
        %1529 = vmatpush.bf16.xpose.msra.mxu0 0
        %1530 = vmatpush.bf16.xpose.msra.mxu0 0
        %1531 = vmatpush.bf16.xpose.msra.mxu0 0
        %1532 = vmatpush.bf16.xpose.msra.mxu0 0
        %1533 = vmatpush.bf16.xpose.msra.mxu0 0
        %1534 = vmatpush.bf16.xpose.msra.mxu0 %v1525
        %1535 = vmatmul.bf16.gmra.mxu0 %v1324
        %v1536 = vpop.f32.mrf.mxu0
        %v1537 = vadd.f32 0.0, %v1536
        %v1538 = vpop.f32.mrf.mxu0
        %1539 = vdwg.mxu0
        %v1541 = vsel %vm1322, %v1521, 0
        %1543 = vmatpush.bf16.xpose.msra.mxu0 0
        %1544 = vmatpush.bf16.xpose.msra.mxu0 0
        %1545 = vmatpush.bf16.xpose.msra.mxu0 0
        %1546 = vmatpush.bf16.xpose.msra.mxu0 0
        %1547 = vmatpush.bf16.xpose.msra.mxu0 0
        %1548 = vmatpush.bf16.xpose.msra.mxu0 0
        %1549 = vmatpush.bf16.xpose.msra.mxu0 0
        %1550 = vmatpush.bf16.xpose.msra.mxu0 %v1541
        %1551 = vmatmul.bf16.gmra.mxu0 %v1343
        %v1552 = vpop.f32.mrf.mxu0
        %v1553 = vadd.f32 0.0, %v1552
        %v1554 = vpop.f32.mrf.mxu0
        %1555 = vdwg.mxu0
        %v1557 = vsel %vm1322, %v1522, 0
        %1559 = vmatpush.bf16.xpose.msra.mxu0 0
        %1560 = vmatpush.bf16.xpose.msra.mxu0 0
        %1561 = vmatpush.bf16.xpose.msra.mxu0 0
        %1562 = vmatpush.bf16.xpose.msra.mxu0 0
        %1563 = vmatpush.bf16.xpose.msra.mxu0 0
        %1564 = vmatpush.bf16.xpose.msra.mxu0 0
        %1565 = vmatpush.bf16.xpose.msra.mxu0 0
        %1566 = vmatpush.bf16.xpose.msra.mxu0 %v1557
        %1567 = vmatmul.bf16.gmra.mxu0 %v1362
        %v1568 = vpop.f32.mrf.mxu0
        %v1569 = vadd.f32 0.0, %v1568
        %v1570 = vpop.f32.mrf.mxu0
        %1571 = vdwg.mxu0
        %v1573 = vsel %vm1322, %v1523, 0
        %1575 = vmatpush.bf16.xpose.msra.mxu0 0
        %1576 = vmatpush.bf16.xpose.msra.mxu0 0
        %1577 = vmatpush.bf16.xpose.msra.mxu0 0
        %1578 = vmatpush.bf16.xpose.msra.mxu0 0
        %1579 = vmatpush.bf16.xpose.msra.mxu0 0
        %1580 = vmatpush.bf16.xpose.msra.mxu0 0
        %1581 = vmatpush.bf16.xpose.msra.mxu0 0
        %1582 = vmatpush.bf16.xpose.msra.mxu0 %v1573
        %1583 = vmatmul.bf16.gmra.mxu0 %v1381
        %v1584 = vpop.f32.mrf.mxu0
        %v1585 = vadd.f32 0.0, %v1584
        %v1586 = vpop.f32.mrf.mxu0
        %1587 = vdwg.mxu0
        %v1588 = vsel %vm1322, %v1537, -inf
        %1589 = vmax.xlane.f32.xlu0 %v1588
        %v1590 = vpop.xlane.xlu0 %1589
        %v1591 = vsel %vm1322, %v1553, -inf
        %1592 = vmax.xlane.f32.xlu0 %v1591
        %v1593 = vpop.xlane.xlu0 %1592
        %v1594 = vsel %vm1322, %v1569, -inf
        %1595 = vmax.xlane.f32.xlu0 %v1594
        %v1596 = vpop.xlane.xlu0 %1595
        %v1597 = vsel %vm1322, %v1585, -inf
        %1598 = vmax.xlane.f32.xlu0 %v1597
        %v1599 = vpop.xlane.xlu0 %1598
        %v1600 = vmax.f32 %v1401, %v1590
        %v1601 = vmax.f32 %v1404, %v1593
        %v1602 = vmax.f32 %v1407, %v1596
        %v1603 = vmax.f32 %v1410, %v1599
        %v1604 = vsub.f32 %v1401, %v1600
        %v1605 = vsub.f32 %v1404, %v1601
        %v1606 = vsub.f32 %v1407, %v1602
        %v1607 = vsub.f32 %v1410, %v1603
        %v1608 = vmul.f32 %v1604, 1.442695
        %v1609 = vpow.pop %v1608
        %v1610 = vmul.f32 %v1605, 1.442695
        %v1611 = vpow.pop %v1610
        %v1612 = vmul.f32 %v1606, 1.442695
        %v1613 = vpow.pop %v1612
        %v1614 = vmul.f32 %v1607, 1.442695
        %v1615 = vpow.pop %v1614
        %v1616 = vsub.f32 %v1537, %v1600
        %v1617 = vsub.f32 %v1553, %v1601
        %v1618 = vsub.f32 %v1569, %v1602
        %v1619 = vsub.f32 %v1585, %v1603
        %v1620 = vmul.f32 %v1616, 1.442695
        %v1621 = vpow.pop %v1620
        %v1622 = vmul.f32 %v1617, 1.442695
        %v1623 = vpow.pop %v1622
        %v1624 = vmul.f32 %v1618, 1.442695
        %v1625 = vpow.pop %v1624
        %v1626 = vmul.f32 %v1619, 1.442695
        %v1627 = vpow.pop %v1626
        %v1628 = vmul.f32 %v1609, %v1425
        %v1629 = vmul.f32 %v1611, %v1428
        %v1630 = vmul.f32 %v1613, %v1431
        %v1631 = vmul.f32 %v1615, %v1434
        %v1632 = vsel %vm1322, %v1621, 0.0
        %1633 = vadd.xlane.f32.xlu0 %v1632
        %v1634 = vpop.xlane.xlu0 %1633
        %v1635 = vsel %vm1322, %v1623, 0.0
        %1636 = vadd.xlane.f32.xlu0 %v1635
        %v1637 = vpop.xlane.xlu0 %1636
        %v1638 = vsel %vm1322, %v1625, 0.0
        %1639 = vadd.xlane.f32.xlu0 %v1638
        %v1640 = vpop.xlane.xlu0 %1639
        %v1641 = vsel %vm1322, %v1627, 0.0
        %1642 = vadd.xlane.f32.xlu0 %v1641
        %v1643 = vpop.xlane.xlu0 %1642
        %v1644 = vadd.f32 %v1628, %v1634
        %v1645 = vadd.f32 %v1629, %v1637
        %v1646 = vadd.f32 %v1630, %v1640
        %v1647 = vadd.f32 %v1631, %v1643
        %v1648 = vmul.f32 %v1609, %v1460
        %v1649 = vmul.f32 %v1611, %v1479
        %v1650 = vmul.f32 %v1613, %v1498
        %v1651 = vmul.f32 %v1615, %v1517
        %v1652 = vld [vmem:[#allocation3 + $0x4] sm:$0xf]
        %v1653 = vld [vmem:[#allocation3 + $0xc] sm:$0xf]
        %v1654 = vld [vmem:[#allocation3 + $0x14] sm:$0xf]
        %v1655 = vld [vmem:[#allocation3 + $0x1c] sm:$0xf]
        %v1656 = vpack.c.bf16 %v1621, %v1621
        %v1657 = vpack.c.bf16 %v1623, %v1623
        %v1658 = vpack.c.bf16 %v1625, %v1625
        %v1659 = vpack.c.bf16 %v1627, %v1627
        %v1661 = vsel %vm1322, %v1656, 0
        %v1664 = vsel %vm1446, %v1652, 0
        %1666 = vmatpush.bf16.msra.mxu0 0
        %1667 = vmatpush.bf16.msra.mxu0 0
        %1668 = vmatpush.bf16.msra.mxu0 0
        %1669 = vmatpush.bf16.msra.mxu0 0
        %1670 = vmatpush.bf16.msra.mxu0 0
        %1671 = vmatpush.bf16.msra.mxu0 0
        %1672 = vmatpush.bf16.msra.mxu0 0
        %1673 = vmatpush.bf16.msra.mxu0 %v1664
        %1674 = vmatmul.bf16.gmra.mxu0 %v1661
        %v1675 = vpop.f32.mrf.mxu0
        %v1676 = vadd.f32 0.0, %v1675
        %v1677 = vpop.f32.mrf.mxu0
        %1678 = vdwg.mxu0
        %v1680 = vsel %vm1322, %v1657, 0
        %v1683 = vsel %vm1446, %v1653, 0
        %1685 = vmatpush.bf16.msra.mxu0 0
        %1686 = vmatpush.bf16.msra.mxu0 0
        %1687 = vmatpush.bf16.msra.mxu0 0
        %1688 = vmatpush.bf16.msra.mxu0 0
        %1689 = vmatpush.bf16.msra.mxu0 0
        %1690 = vmatpush.bf16.msra.mxu0 0
        %1691 = vmatpush.bf16.msra.mxu0 0
        %1692 = vmatpush.bf16.msra.mxu0 %v1683
        %1693 = vmatmul.bf16.gmra.mxu0 %v1680
        %v1694 = vpop.f32.mrf.mxu0
        %v1695 = vadd.f32 0.0, %v1694
        %v1696 = vpop.f32.mrf.mxu0
        %1697 = vdwg.mxu0
        %v1699 = vsel %vm1322, %v1658, 0
        %v1702 = vsel %vm1446, %v1654, 0
        %1704 = vmatpush.bf16.msra.mxu0 0
        %1705 = vmatpush.bf16.msra.mxu0 0
        %1706 = vmatpush.bf16.msra.mxu0 0
        %1707 = vmatpush.bf16.msra.mxu0 0
        %1708 = vmatpush.bf16.msra.mxu0 0
        %1709 = vmatpush.bf16.msra.mxu0 0
        %1710 = vmatpush.bf16.msra.mxu0 0
        %1711 = vmatpush.bf16.msra.mxu0 %v1702
        %1712 = vmatmul.bf16.gmra.mxu0 %v1699
        %v1713 = vpop.f32.mrf.mxu0
        %v1714 = vadd.f32 0.0, %v1713
        %v1715 = vpop.f32.mrf.mxu0
        %1716 = vdwg.mxu0
        %v1718 = vsel %vm1322, %v1659, 0
        %v1721 = vsel %vm1446, %v1655, 0
        %1723 = vmatpush.bf16.msra.mxu0 0
        %1724 = vmatpush.bf16.msra.mxu0 0
        %1725 = vmatpush.bf16.msra.mxu0 0
        %1726 = vmatpush.bf16.msra.mxu0 0
        %1727 = vmatpush.bf16.msra.mxu0 0
        %1728 = vmatpush.bf16.msra.mxu0 0
        %1729 = vmatpush.bf16.msra.mxu0 0
        %1730 = vmatpush.bf16.msra.mxu0 %v1721
        %1731 = vmatmul.bf16.gmra.mxu0 %v1718
        %v1732 = vpop.f32.mrf.mxu0
        %v1733 = vadd.f32 0.0, %v1732
        %v1734 = vpop.f32.mrf.mxu0
        %1735 = vdwg.mxu0
        %v1736 = vadd.f32 %v1648, %v1676
        %v1737 = vadd.f32 %v1649, %v1695
        %v1738 = vadd.f32 %v1650, %v1714
        %v1739 = vadd.f32 %v1651, %v1733
        %v1740 = vrcp.pop %v1644
        %v1741 = vrcp.pop %v1645
        %v1742 = vrcp.pop %v1646
        %v1743 = vrcp.pop %v1647
        %v1744 = vmul.f32 %v1736, %v1740
        %v1745 = vmul.f32 %v1737, %v1741
        %v1746 = vmul.f32 %v1738, %v1742
        %v1747 = vmul.f32 %v1739, %v1743
        %1748 = vxpose.xlu0.b32.start [1/16] %v1744, 128
        %1749 = vxpose.xlu0.b32.cont [2/16] 0.0, 128
        %1750 = vxpose.xlu0.b32.cont [3/16] 0.0, 128
        %1751 = vxpose.xlu0.b32.cont [4/16] 0.0, 128
        %1752 = vxpose.xlu0.b32.cont [5/16] 0.0, 128
        %1753 = vxpose.xlu0.b32.cont [6/16] 0.0, 128
        %1754 = vxpose.xlu0.b32.cont [7/16] 0.0, 128
        %1755 = vxpose.xlu0.b32.cont [8/16] 0.0, 128
        %1756 = vxpose.xlu0.b32.cont [9/16] 0.0, 128
        %1757 = vxpose.xlu0.b32.cont [10/16] 0.0, 128
        %1758 = vxpose.xlu0.b32.cont [11/16] 0.0, 128
        %1759 = vxpose.xlu0.b32.cont [12/16] 0.0, 128
        %1760 = vxpose.xlu0.b32.cont [13/16] 0.0, 128
        %1761 = vxpose.xlu0.b32.cont [14/16] 0.0, 128
        %1762 = vxpose.xlu0.b32.cont [15/16] 0.0, 128
        %1763 = vxpose.xlu0.b32.end [16/16] 0.0, 128
        %v1764 = vpop.trf.xlu0
        %v1765 = vpop.trf.xlu0
        %v1766 = vpop.trf.xlu0
        %v1767 = vpop.trf.xlu0
        %v1768 = vpop.trf.xlu0
        %v1769 = vpop.trf.xlu0
        %v1770 = vpop.trf.xlu0
        %v1771 = vpop.trf.xlu0
        %v1772 = vpop.trf.xlu0
        %v1773 = vpop.trf.xlu0
        %v1774 = vpop.trf.xlu0
        %v1775 = vpop.trf.xlu0
        %v1776 = vpop.trf.xlu0
        %v1777 = vpop.trf.xlu0
        %v1778 = vpop.trf.xlu0
        %v1779 = vpop.trf.xlu0
        %1780 = vxpose.xlu0.b32.start [1/16] %v1745, 128
        %1781 = vxpose.xlu0.b32.cont [2/16] 0.0, 128
        %1782 = vxpose.xlu0.b32.cont [3/16] 0.0, 128
        %1783 = vxpose.xlu0.b32.cont [4/16] 0.0, 128
        %1784 = vxpose.xlu0.b32.cont [5/16] 0.0, 128
        %1785 = vxpose.xlu0.b32.cont [6/16] 0.0, 128
        %1786 = vxpose.xlu0.b32.cont [7/16] 0.0, 128
        %1787 = vxpose.xlu0.b32.cont [8/16] 0.0, 128
        %1788 = vxpose.xlu0.b32.cont [9/16] 0.0, 128
        %1789 = vxpose.xlu0.b32.cont [10/16] 0.0, 128
        %1790 = vxpose.xlu0.b32.cont [11/16] 0.0, 128
        %1791 = vxpose.xlu0.b32.cont [12/16] 0.0, 128
        %1792 = vxpose.xlu0.b32.cont [13/16] 0.0, 128
        %1793 = vxpose.xlu0.b32.cont [14/16] 0.0, 128
        %1794 = vxpose.xlu0.b32.cont [15/16] 0.0, 128
        %1795 = vxpose.xlu0.b32.end [16/16] 0.0, 128
        %v1796 = vpop.trf.xlu0
        %v1797 = vpop.trf.xlu0
        %v1798 = vpop.trf.xlu0
        %v1799 = vpop.trf.xlu0
        %v1800 = vpop.trf.xlu0
        %v1801 = vpop.trf.xlu0
        %v1802 = vpop.trf.xlu0
        %v1803 = vpop.trf.xlu0
        %v1804 = vpop.trf.xlu0
        %v1805 = vpop.trf.xlu0
        %v1806 = vpop.trf.xlu0
        %v1807 = vpop.trf.xlu0
        %v1808 = vpop.trf.xlu0
        %v1809 = vpop.trf.xlu0
        %v1810 = vpop.trf.xlu0
        %v1811 = vpop.trf.xlu0
        %1812 = vxpose.xlu0.b32.start [1/16] %v1746, 128
        %1813 = vxpose.xlu0.b32.cont [2/16] 0.0, 128
        %1814 = vxpose.xlu0.b32.cont [3/16] 0.0, 128
        %1815 = vxpose.xlu0.b32.cont [4/16] 0.0, 128
        %1816 = vxpose.xlu0.b32.cont [5/16] 0.0, 128
        %1817 = vxpose.xlu0.b32.cont [6/16] 0.0, 128
        %1818 = vxpose.xlu0.b32.cont [7/16] 0.0, 128
        %1819 = vxpose.xlu0.b32.cont [8/16] 0.0, 128
        %1820 = vxpose.xlu0.b32.cont [9/16] 0.0, 128
        %1821 = vxpose.xlu0.b32.cont [10/16] 0.0, 128
        %1822 = vxpose.xlu0.b32.cont [11/16] 0.0, 128
        %1823 = vxpose.xlu0.b32.cont [12/16] 0.0, 128
        %1824 = vxpose.xlu0.b32.cont [13/16] 0.0, 128
        %1825 = vxpose.xlu0.b32.cont [14/16] 0.0, 128
        %1826 = vxpose.xlu0.b32.cont [15/16] 0.0, 128
        %1827 = vxpose.xlu0.b32.end [16/16] 0.0, 128
        %v1828 = vpop.trf.xlu0
        %v1829 = vpop.trf.xlu0
        %v1830 = vpop.trf.xlu0
        %v1831 = vpop.trf.xlu0
        %v1832 = vpop.trf.xlu0
        %v1833 = vpop.trf.xlu0
        %v1834 = vpop.trf.xlu0
        %v1835 = vpop.trf.xlu0
        %v1836 = vpop.trf.xlu0
        %v1837 = vpop.trf.xlu0
        %v1838 = vpop.trf.xlu0
        %v1839 = vpop.trf.xlu0
        %v1840 = vpop.trf.xlu0
        %v1841 = vpop.trf.xlu0
        %v1842 = vpop.trf.xlu0
        %v1843 = vpop.trf.xlu0
        %1844 = vxpose.xlu0.b32.start [1/16] %v1747, 128
        %1845 = vxpose.xlu0.b32.cont [2/16] 0.0, 128
        %1846 = vxpose.xlu0.b32.cont [3/16] 0.0, 128
        %1847 = vxpose.xlu0.b32.cont [4/16] 0.0, 128
        %1848 = vxpose.xlu0.b32.cont [5/16] 0.0, 128
        %1849 = vxpose.xlu0.b32.cont [6/16] 0.0, 128
        %1850 = vxpose.xlu0.b32.cont [7/16] 0.0, 128
        %1851 = vxpose.xlu0.b32.cont [8/16] 0.0, 128
        %1852 = vxpose.xlu0.b32.cont [9/16] 0.0, 128
        %1853 = vxpose.xlu0.b32.cont [10/16] 0.0, 128
        %1854 = vxpose.xlu0.b32.cont [11/16] 0.0, 128
        %1855 = vxpose.xlu0.b32.cont [12/16] 0.0, 128
        %1856 = vxpose.xlu0.b32.cont [13/16] 0.0, 128
        %1857 = vxpose.xlu0.b32.cont [14/16] 0.0, 128
        %1858 = vxpose.xlu0.b32.cont [15/16] 0.0, 128
        %1859 = vxpose.xlu0.b32.end [16/16] 0.0, 128
        %v1860 = vpop.trf.xlu0
        %v1861 = vpop.trf.xlu0
        %v1862 = vpop.trf.xlu0
        %v1863 = vpop.trf.xlu0
        %v1864 = vpop.trf.xlu0
        %v1865 = vpop.trf.xlu0
        %v1866 = vpop.trf.xlu0
        %v1867 = vpop.trf.xlu0
        %v1868 = vpop.trf.xlu0
        %v1869 = vpop.trf.xlu0
        %v1870 = vpop.trf.xlu0
        %v1871 = vpop.trf.xlu0
        %v1872 = vpop.trf.xlu0
        %v1873 = vpop.trf.xlu0
        %v1874 = vpop.trf.xlu0
        %v1875 = vpop.trf.xlu0
        %1876 = vxpose.xlu0.b32.start [1/16] %v1764, 128
        %1877 = vxpose.xlu0.b32.cont [2/16] %v1796, 128
        %1878 = vxpose.xlu0.b32.cont [3/16] %v1828, 128
        %1879 = vxpose.xlu0.b32.cont [4/16] %v1860, 128
        %1880 = vxpose.xlu0.b32.cont [5/16] 0.0, 128
        %1881 = vxpose.xlu0.b32.cont [6/16] 0.0, 128
        %1882 = vxpose.xlu0.b32.cont [7/16] 0.0, 128
        %1883 = vxpose.xlu0.b32.cont [8/16] 0.0, 128
        %1884 = vxpose.xlu0.b32.cont [9/16] 0.0, 128
        %1885 = vxpose.xlu0.b32.cont [10/16] 0.0, 128
        %1886 = vxpose.xlu0.b32.cont [11/16] 0.0, 128
        %1887 = vxpose.xlu0.b32.cont [12/16] 0.0, 128
        %1888 = vxpose.xlu0.b32.cont [13/16] 0.0, 128
        %1889 = vxpose.xlu0.b32.cont [14/16] 0.0, 128
        %1890 = vxpose.xlu0.b32.cont [15/16] 0.0, 128
        %1891 = vxpose.xlu0.b32.end [16/16] 0.0, 128
        %v1892 = vpop.trf.xlu0
        %v1893 = vpop.trf.xlu0
        %v1894 = vpop.trf.xlu0
        %v1895 = vpop.trf.xlu0
        %v1896 = vpop.trf.xlu0
        %v1897 = vpop.trf.xlu0
        %v1898 = vpop.trf.xlu0
        %v1899 = vpop.trf.xlu0
        %v1900 = vpop.trf.xlu0
        %v1901 = vpop.trf.xlu0
        %v1902 = vpop.trf.xlu0
        %v1903 = vpop.trf.xlu0
        %v1904 = vpop.trf.xlu0
        %v1905 = vpop.trf.xlu0
        %v1906 = vpop.trf.xlu0
        %v1907 = vpop.trf.xlu0
        %v1908 = vld [vmem:[#allocation9] sm:$0xf]
        %v1909 = vld [vmem:[#allocation9 + $0x4] sm:$0xf]
        %v1910 = vld [vmem:[#allocation9 + $0x8] sm:$0xf]
        %v1911 = vld [vmem:[#allocation9 + $0xc] sm:$0xf]
        %v1912 = vpack.c.bf16 %v1892, %v1892
        %v1913 = vld [vmem:[%s9] sm:$0x1]
        %v1915 = vperm.slane %v1913, 0
        %v1921 = vunpack.c.l.b16 %v1908
        %v1922 = vunpack.c.l.b16 %v1909
        %v1923 = vunpack.c.l.b16 %v1910
        %v1924 = vunpack.c.l.b16 %v1911
        %v1925 = vpack.c.b16 %v1922, %v1921
        %v1926 = vpack.c.b16 %v1924, %v1923
        %v1930 = vsel %vm1076, %v1912, 0
        %1932 = vmatpush.bf16.msra.mxu0 0
        %1933 = vmatpush.bf16.msra.mxu0 0
        %1934 = vmatpush.bf16.msra.mxu0 0
        %1935 = vmatpush.bf16.msra.mxu0 0
        %1936 = vmatpush.bf16.msra.mxu0 0
        %1937 = vmatpush.bf16.msra.mxu0 0
        %1938 = vmatpush.bf16.msra.mxu0 %v1926
        %1939 = vmatpush.bf16.msra.mxu0 %v1925
        %1940 = vmatmul.bf16.gmra.mxu0 %v1930
        %v1941 = vpop.f32.mrf.mxu0
        %v1942 = vadd.f32 %v1915, %v1941
        %v1943 = vpop.f32.mrf.mxu0
        %1944 = vdwg.mxu0
        %v1945 = vadd.f32 %v1073, %v1942
        %v1946 = vld [vmem:[%s10] sm:$0x1]
        %v1947 = vld [vmem:[%s11] sm:$0x1]
        %v1948 = vsel %vm1076, %v1945, 0.0
        %1949 = vadd.xlane.f32.xlu0 %v1948
        %v1950 = vpop.xlane.xlu0 %1949
        %v1951 = vmul.f32 %v1950, %v1086
        %v1952 = vsub.f32 %v1945, %v1951
        %v1953 = vmul.f32 %v1952, %v1952
        %v1954 = vsel %vm1076, %v1953, 0.0
        %1955 = vadd.xlane.f32.xlu0 %v1954
        %v1956 = vpop.xlane.xlu0 %1955
        %v1957 = vmul.f32 %v1956, 0.032258064
        %v1958 = vrsqrt.pop %v1957
        %v1959 = vmul.f32 %v1958, %v1957
        %v1960 = vmul.f32 %v1959, %v1958
        %v1961 = vmul.f32 0.5, %v1960
        %v1962 = vsub.f32 1.5, %v1961
        %v1963 = vmul.f32 %v1958, %v1962
        %v1964 = vmul.f32 %v1957, %v1963
        %vm1965 = vcmp.eq.f32.partialorder %v1957, inf
        %v1966 = vsel %vm1965, %v1957, %v1964
        %vm1967 = vcmp.eq.f32.partialorder %v1957, 0.0
        %v1968 = vand.u32 %v1957, 2147483648
        %v1969 = vsel %vm1967, %v1968, %v1966
        %v1970 = vadd.f32 %v1969, 1e-06
        %v1971 = vrcp.pop %v1970
        %v1973 = vperm.slane %v1946, 0
        %v1975 = vmul.f32 %v1973, %v1952
        %v1976 = vmul.f32 %v1975, %v1971
        %v1978 = vperm.slane %v1947, 0
        %v1980 = vadd.f32 %v1976, %v1978
        %v1981 = vld [vmem:[#allocation10] sm:$0xf]
        %v1982 = vld [vmem:[#allocation10 + $0x4] sm:$0xf]
        %v1983 = vld [vmem:[#allocation10 + $0x8] sm:$0xf]
        %v1984 = vld [vmem:[#allocation10 + $0xc] sm:$0xf]
        %v1985 = vpack.c.bf16 %v1980, %v1980
        %v1986 = vld [vmem:[%s13] sm:$0x1]
        %v1988 = vperm.slane %v1986, 0
        %v1994 = vunpack.c.l.b16 %v1981
        %v1995 = vunpack.c.l.b16 %v1982
        %v1996 = vunpack.c.l.b16 %v1983
        %v1997 = vunpack.c.l.b16 %v1984
        %v1998 = vpack.c.b16 %v1995, %v1994
        %v1999 = vpack.c.b16 %v1997, %v1996
        %v2003 = vsel %vm1076, %v1985, 0
        %2005 = vmatpush.bf16.msra.mxu0 0
        %2006 = vmatpush.bf16.msra.mxu0 0
        %2007 = vmatpush.bf16.msra.mxu0 0
        %2008 = vmatpush.bf16.msra.mxu0 0
        %2009 = vmatpush.bf16.msra.mxu0 0
        %2010 = vmatpush.bf16.msra.mxu0 0
        %2011 = vmatpush.bf16.msra.mxu0 %v1999
        %2012 = vmatpush.bf16.msra.mxu0 %v1998
        %2013 = vmatmul.bf16.gmra.mxu0 %v2003
        %v2014 = vpop.f32.mrf.mxu0
        %v2015 = vadd.f32 %v1988, %v2014
        %v2016 = vpop.f32.mrf.mxu0
        %2017 = vdwg.mxu0
        %v2018 = vmax.f32 %v2015, 0.0
        %v2019 = vld [vmem:[%s14] sm:$0xf]
        %v2020 = vld [vmem:[%s14 + $0x4] sm:$0xf]
        %v2021 = vld [vmem:[%s14 + $0x8] sm:$0xf]
        %v2022 = vld [vmem:[%s14 + $0xc] sm:$0xf]
        %v2023 = vld [vmem:[%s14 + $0x10] sm:$0xf]
        %v2024 = vld [vmem:[%s14 + $0x14] sm:$0xf]
        %v2025 = vld [vmem:[%s14 + $0x18] sm:$0xf]
        %v2026 = vld [vmem:[%s14 + $0x1c] sm:$0xf]
        %v2027 = vpack.c.bf16 %v2018, %v2018
        %v2028 = vld [vmem:[%s15] sm:$0x1]
        %v2030 = vperm.slane %v2028, 0
        %v2040 = vunpack.c.l.b16 %v2019
        %v2041 = vunpack.c.l.b16 %v2020
        %v2042 = vunpack.c.l.b16 %v2021
        %v2043 = vunpack.c.l.b16 %v2022
        %v2044 = vunpack.c.l.b16 %v2023
        %v2045 = vunpack.c.l.b16 %v2024
        %v2046 = vunpack.c.l.b16 %v2025
        %v2047 = vunpack.c.l.b16 %v2026
        %v2048 = vpack.c.b16 %v2041, %v2040
        %v2049 = vpack.c.b16 %v2043, %v2042
        %v2050 = vpack.c.b16 %v2045, %v2044
        %v2051 = vpack.c.b16 %v2047, %v2046
        %vm2056 = vcmask 523264
        %v2058 = vsel %vm2056, %v2027, 0
        %2060 = vmatpush.bf16.msra.mxu0 0
        %2061 = vmatpush.bf16.msra.mxu0 0
        %2062 = vmatpush.bf16.msra.mxu0 0
        %2063 = vmatpush.bf16.msra.mxu0 0
        %2064 = vmatpush.bf16.msra.mxu0 %v2051
        %2065 = vmatpush.bf16.msra.mxu0 %v2050
        %2066 = vmatpush.bf16.msra.mxu0 %v2049
        %2067 = vmatpush.bf16.msra.mxu0 %v2048
        %2068 = vmatmul.bf16.gmra.mxu0 %v2058
        %v2069 = vpop.f32.mrf.mxu0
        %v2070 = vadd.f32 %v2030, %v2069
        %v2071 = vpop.f32.mrf.mxu0
        %2072 = vdwg.mxu0
        %v2073 = vadd.f32 %v1945, %v2070
        %2074 = vst.msk [vmem:[%s628] sm:$0xff] %vm1076, %v2073
        %s2075 = sand.u32 %s405, 1
        %s2076 = scalar_lea.sflag [#allocation6], %s2075
        %s2077 = sand.u32 %s405, 1
        %s2078 = smul.addr %s2077, 8
        %s2079 = scalar_lea.vmem [#allocation12], %s2078
        // Predicated region
        $region105: #{tpu_custom_call.1} parent=83 // pred_check
          %p2080 = pneg %p415
        $region106: #{tpu_custom_call.1} parent=83 // pred_check_branch
          %2082 = sbr.rel (%p2080) target = $region108
        $region107: #{tpu_custom_call.1} parent=83 // pred_region
          %2084 = vsyncadd %s2076, 0
          %s2085 = smul.addr %s39, 2
          %s2086 = sadd.s32 %s40, %s2085
          %s2087 = smul.addr %s2086, 8
          %s2088 = scalar_lea.hbm %s16, %s2087
          %s2090 = sshll.u32 %s2079, 4
          %s2091 = int_to_ptr.vmem [resolvable:$true] %s2090
          %s2092 = sshll.u32 %s2088, 4
          %s2093 = int_to_ptr.hbm [resolvable:$true] %s2092
          %2095 = dma.vmem_to_hbm [thread:$0]  %s2091, 128, %s2093, %s2076
        $region108: #{tpu_custom_call.1} parent=83 // pred_fallthru
          _
      $region84: #{tpu_custom_call.1} parent=5 // pred_fallthru
        _
      %p2096 = scmp.le.s32.totalorder 2, %s30
      // Predicated region
      $region109: #{tpu_custom_call.1} parent=5 // pred_check
        %p2097 = pneg %p2096
      $region110: #{tpu_custom_call.1} parent=5 // pred_check_branch
        %2099 = sbr.rel (%p2097) target = $region112
      $region111: #{tpu_custom_call.1} parent=5 // pred_region
        %s2100 = ssub.s32 %s30, 2
        // Predicated region
        $region113: #{tpu_custom_call.1} parent=111 // pred_check
          %p2101 = pneg %p421
        $region114: #{tpu_custom_call.1} parent=111 // pred_check_branch
          %2103 = sbr.rel (%p2101) target = $region116
        $region115: #{tpu_custom_call.1} parent=111 // pred_region
          %s2104 = sand.u32 %s406, 1
          %s2105 = scalar_lea.sflag [#allocation6], %s2104
          %s2106 = sand.u32 %s406, 1
          %s2107 = smul.addr %s2106, 8
          %s2108 = scalar_lea.vmem [#allocation12], %s2107
          %2110 = dma.done %s2105, 128
        $region116: #{tpu_custom_call.1} parent=111 // pred_fallthru
          _
      $region112: #{tpu_custom_call.1} parent=5 // pred_fallthru
        _
    $region6: #{tpu_custom_call.1} parent=1 // loop_footer
      %s34 = sadd.s32 1, %s30
    $region7: #{tpu_custom_call.1} parent=1 // loop_footer_branch
      %29 = sbr.rel target = $region3
    $region8: #{tpu_custom_call.1} parent=1 // loop_exit
      _
    %2111 = vsyncpa [#allocation5], 1
    %s2112 = scalar_lea.sflag [#allocation5], 1
    %2113 = vsyncpa %s2112, 1
    %2114 = vsyncpa [#allocation8], 1
    %2115 = vsyncpa [#allocation11], 1
    %2116 = vsyncpa [#allocation6], 1
    %s2117 = scalar_lea.sflag [#allocation6], 1
    %2118 = vsyncpa %s2117, 1

// kernel: tpu_custom_call.1
$region0: #{tpu_custom_call.1}
  #allocation0 [shape = 'u32[]', space=smem, size = 0x4, offset = 0x4, fixed_abs, tag = 'smem constant byte address 0x4 - core index']
  #allocation1 [shape = 'u32[72,128]{1,0:T(1,128)}', space=vmem, size = 0x9000, scoped, tag = 'internal scratch']
  #allocation2 [shape = 'bf16[4,16,8]{2,1,0:T(8,128)(2,1)}', space=vmem, size = 0x4000, scoped, tag = 'scratch operand']
  #allocation3 [shape = 'bf16[4,16,8]{2,1,0:T(8,128)(2,1)}', space=vmem, size = 0x4000, scoped, tag = 'scratch operand']
  %s0 = inlined_call_operand.vmem [shape: f32[2,16,32], index: 0, kind: input, shape index: {}]
  %s1 = inlined_call_operand.hbm [shape: f32[2,16,32], index: 1, kind: input, shape index: {}]
  %s2 = inlined_call_operand.vmem [shape: f32[1,32], index: 2, kind: input, shape index: {}]
  %s3 = inlined_call_operand.vmem [shape: f32[1,32], index: 3, kind: input, shape index: {}]
  %s4 = inlined_call_operand.vmem [shape: bf16[32,32], index: 4, kind: input, shape index: {}]
  %s5 = inlined_call_operand.vmem [shape: f32[1,32], index: 5, kind: input, shape index: {}]
  %s6 = inlined_call_operand.hbm [shape: bf16[32,64], index: 6, kind: input, shape index: {}]
  %s7 = inlined_call_operand.vmem [shape: f32[1,64], index: 7, kind: input, shape index: {}]
  %s8 = inlined_call_operand.hbm [shape: bf16[32,32], index: 8, kind: input, shape index: {}]
  %s9 = inlined_call_operand.vmem [shape: f32[1,32], index: 9, kind: input, shape index: {}]
  %s10 = inlined_call_operand.vmem [shape: f32[1,32], index: 10, kind: input, shape index: {}]
  %s11 = inlined_call_operand.vmem [shape: f32[1,32], index: 11, kind: input, shape index: {}]
  %s12 = inlined_call_operand.hbm [shape: bf16[32,64], index: 12, kind: input, shape index: {}]
  %s13 = inlined_call_operand.vmem [shape: f32[1,64], index: 13, kind: input, shape index: {}]
  %s14 = inlined_call_operand.vmem [shape: bf16[64,32], index: 14, kind: input, shape index: {}]
  %s15 = inlined_call_operand.vmem [shape: f32[1,32], index: 15, kind: input, shape index: {}]
  %s16 = inlined_call_operand.hbm [shape: f32[2,16,32], index: 16, kind: output, shape index: {}]
  %s17 = sld [smem:[#allocation0]]
  $region117: #{tpu_custom_call.1} parent=0
    _
  %s19 = ssub.s32 1, %s17
  %s20 = scalar_select 0, %s19, %s17
  $region1: #{tpu_custom_call.1} parent=0
    #allocation4 [shape = 'u8[16384]{0}', space=vmem, size = 0x4000, scoped, tag = 'input window, operand 1']
    #allocation5 [shape = 's32[2]{0}', space=sflag, size = 0x8, scoped, tag = 'scoped memory for tpu_custom_call.1']
    #allocation6 [shape = 's32[2]{0}', space=sflag, size = 0x8, scoped, tag = 'scoped memory for tpu_custom_call.1']
    #allocation7 [shape = 'u8[8192]{0}', space=vmem, size = 0x2000, scoped, tag = 'input window, operand 6, single buffered']
    #allocation8 [shape = 's32[1]{0}', space=sflag, size = 0x4, scoped, tag = 'scoped memory for tpu_custom_call.1']
    #allocation9 [shape = 'u8[8192]{0}', space=vmem, size = 0x2000, scoped, tag = 'input window, operand 8, single buffered']
    #allocation10 [shape = 'u8[8192]{0}', space=vmem, size = 0x2000, scoped, tag = 'input window, operand 12, single buffered']
    #allocation11 [shape = 's32[1]{0}', space=sflag, size = 0x4, scoped, tag = 'scoped memory for tpu_custom_call.1']
    #allocation12 [shape = 'u8[8192]{0}', space=vmem, size = 0x2000, scoped, tag = 'output window, operand 0']
    %21 = vsyncpa [#allocation5], 0
    %s22 = scalar_lea.sflag [#allocation5], 1
    %23 = vsyncpa %s22, 0
    %24 = vsyncpa [#allocation8], 0
    %25 = vsyncpa [#allocation11], 0
    %26 = vsyncpa [#allocation6], 0
    %s27 = scalar_lea.sflag [#allocation6], 1
    %28 = vsyncpa %s27, 0
    loop: start=0, step=1, limit=6
    $region2: #{tpu_custom_call.1} parent=1 // loop_pre_header
      _
    $region3: #{tpu_custom_call.1} parent=1 // loop_header
      %s30 = sphi 0, %s34
      %p31 = scmp.ge.s32.totalorder %s30, 6
      %s37 = sphi 0, %s49
      %s38 = sphi 0, %s45
      %s39 = sphi 0, %s37
      %s40 = sphi 0, %s38
      %s41 = sphi 0, %s39
      %s42 = sphi 0, %s40
      %s54 = sphi 0, %s56
      %s57 = sphi 0, %s54
      %s58 = sphi 0, %s57
      %s74 = sphi 0, %s58
      %s80 = sphi 0, %s82
      %s83 = sphi 0, %s80
      %s84 = sphi 0, %s83
      %s100 = sphi 0, %s84
      %s104 = sphi 0, %s104
      %s106 = sphi 0, %s104
      %s107 = sphi 0, %s106
      %s121 = sphi 0, %s107
      %s125 = sphi 0, %s125
      %s127 = sphi 0, %s125
      %s128 = sphi 0, %s127
      %s142 = sphi 0, %s128
      %s146 = sphi 0, %s146
      %s148 = sphi 0, %s146
      %s149 = sphi 0, %s148
      %s163 = sphi 0, %s149
      %s167 = sphi 0, %s167
      %s169 = sphi 0, %s167
      %s170 = sphi 0, %s169
      %s184 = sphi 0, %s170
      %s188 = sphi 0, %s188
      %s190 = sphi 0, %s188
      %s191 = sphi 0, %s190
      %s205 = sphi 0, %s191
      %s209 = sphi 0, %s209
      %s211 = sphi 0, %s209
      %s212 = sphi 0, %s211
      %s226 = sphi 0, %s212
      %s230 = sphi 0, %s230
      %s232 = sphi 0, %s230
      %s233 = sphi 0, %s232
      %s247 = sphi 0, %s233
      %s251 = sphi 0, %s251
      %s253 = sphi 0, %s251
      %s254 = sphi 0, %s253
      %s268 = sphi 0, %s254
      %s272 = sphi 0, %s272
      %s274 = sphi 0, %s272
      %s275 = sphi 0, %s274
      %s289 = sphi 0, %s275
      %s293 = sphi 0, %s293
      %s295 = sphi 0, %s293
      %s296 = sphi 0, %s295
      %s310 = sphi 0, %s296
      %s314 = sphi 0, %s314
      %s316 = sphi 0, %s314
      %s317 = sphi 0, %s316
      %s331 = sphi 0, %s317
      %s335 = sphi 0, %s335
      %s337 = sphi 0, %s335
      %s338 = sphi 0, %s337
      %s352 = sphi 0, %s338
      %s356 = sphi 0, %s356
      %s358 = sphi 0, %s356
      %s359 = sphi 0, %s358
      %s373 = sphi 0, %s359
      %s377 = sphi 0, %s377
      %s379 = sphi 0, %s377
      %s380 = sphi 0, %s379
      %s394 = sphi 0, %s380
      %s402 = sphi 0, %s404
      %s405 = sphi 0, %s402
      %s406 = sphi 0, %s405
      %s422 = sphi 0, %s406
    $region4: #{tpu_custom_call.1} parent=1 // loop_header_branch
      %33 = sbr.rel (%p31) target = $region8
    $region5: #{tpu_custom_call.1} parent=1 // loop_body
      %s35 = ssub.s32 %s30, 1
      %s36 = ssub.s32 %s30, 2
      %s43 = sadd.s32 1, %s38
      %p44 = scmp.ge.s32.totalorder %s43, 2
      %s45 = scalar_select %p44, 0, %s43
      %s46 = sadd.s32 1, %s37
      %s47 = scalar_select %p44, %s46, %s37
      %p48 = scmp.ge.s32.totalorder %s47, 2
      %s49 = scalar_select %p48, 0, %s47
      %s50 = ssub.s32 %s37, %s49
      %s51 = ssub.s32 %s38, %s45
      %s52 = sor.u32 %s50, %s51
      %p53 = scmp.eq.s32.totalorder %s52, 0
      %s55 = sadd.s32 %s54, 1
      %s56 = scalar_select %p53, %s54, %s55
      %p59 = pneg %p53
      %p60 = scmp.eq.s32.totalorder %s30, 3
      %p61 = por %p59, %p60
      %p62 = scmp.ne.s32.totalorder %s54, %s57
      %p63 = scmp.eq.s32.totalorder %s30, 0
      %p64 = por %p62, %p63
      %p65 = scmp.ne.s32.totalorder %s54, %s57
      %p66 = scmp.eq.s32.totalorder %s35, 3
      %p67 = por %p65, %p66
      %p68 = scmp.ne.s32.totalorder %s57, %s58
      %p69 = scmp.eq.s32.totalorder %s35, 0
      %p70 = por %p68, %p69
      %p71 = scmp.ne.s32.totalorder %s57, %s58
      %p72 = scmp.eq.s32.totalorder %s36, 3
      %p73 = por %p71, %p72
      %p75 = scmp.ne.s32.totalorder %s58, %s74
      %p76 = scmp.eq.s32.totalorder %s36, 0
      %p77 = por %p75, %p76
      %s78 = ssub.s32 %s37, %s49
      %p79 = scmp.eq.s32.totalorder %s78, 0
      %s81 = sadd.s32 %s80, 1
      %s82 = scalar_select %p79, %s80, %s81
      %p85 = pneg %p79
      %p86 = scmp.eq.s32.totalorder %s30, 3
      %p87 = por %p85, %p86
      %p88 = scmp.ne.s32.totalorder %s80, %s83
      %p89 = scmp.eq.s32.totalorder %s30, 0
      %p90 = por %p88, %p89
      %p91 = scmp.ne.s32.totalorder %s80, %s83
      %p92 = scmp.eq.s32.totalorder %s35, 3
      %p93 = por %p91, %p92
      %p94 = scmp.ne.s32.totalorder %s83, %s84
      %p95 = scmp.eq.s32.totalorder %s35, 0
      %p96 = por %p94, %p95
      %p97 = scmp.ne.s32.totalorder %s83, %s84
      %p98 = scmp.eq.s32.totalorder %s36, 3
      %p99 = por %p97, %p98
      %p101 = scmp.ne.s32.totalorder %s84, %s100
      %p102 = scmp.eq.s32.totalorder %s36, 0
      %p103 = por %p101, %p102
      %s105 = sadd.s32 %s104, 1
      %p108 = scmp.eq.s32.totalorder %s30, 3
      %p109 = scmp.ne.s32.totalorder %s104, %s106
      %p110 = scmp.eq.s32.totalorder %s30, 0
      %p111 = por %p109, %p110
      %p112 = scmp.ne.s32.totalorder %s104, %s106
      %p113 = scmp.eq.s32.totalorder %s35, 3
      %p114 = por %p112, %p113
      %p115 = scmp.ne.s32.totalorder %s106, %s107
      %p116 = scmp.eq.s32.totalorder %s35, 0
      %p117 = por %p115, %p116
      %p118 = scmp.ne.s32.totalorder %s106, %s107
      %p119 = scmp.eq.s32.totalorder %s36, 3
      %p120 = por %p118, %p119
      %p122 = scmp.ne.s32.totalorder %s107, %s121
      %p123 = scmp.eq.s32.totalorder %s36, 0
      %p124 = por %p122, %p123
      %s126 = sadd.s32 %s125, 1
      %p129 = scmp.eq.s32.totalorder %s30, 3
      %p130 = scmp.ne.s32.totalorder %s125, %s127
      %p131 = scmp.eq.s32.totalorder %s30, 0
      %p132 = por %p130, %p131
      %p133 = scmp.ne.s32.totalorder %s125, %s127
      %p134 = scmp.eq.s32.totalorder %s35, 3
      %p135 = por %p133, %p134
      %p136 = scmp.ne.s32.totalorder %s127, %s128
      %p137 = scmp.eq.s32.totalorder %s35, 0
      %p138 = por %p136, %p137
      %p139 = scmp.ne.s32.totalorder %s127, %s128
      %p140 = scmp.eq.s32.totalorder %s36, 3
      %p141 = por %p139, %p140
      %p143 = scmp.ne.s32.totalorder %s128, %s142
      %p144 = scmp.eq.s32.totalorder %s36, 0
      %p145 = por %p143, %p144
      %s147 = sadd.s32 %s146, 1
      %p150 = scmp.eq.s32.totalorder %s30, 3
      %p151 = scmp.ne.s32.totalorder %s146, %s148
      %p152 = scmp.eq.s32.totalorder %s30, 0
      %p153 = por %p151, %p152
      %p154 = scmp.ne.s32.totalorder %s146, %s148
      %p155 = scmp.eq.s32.totalorder %s35, 3
      %p156 = por %p154, %p155
      %p157 = scmp.ne.s32.totalorder %s148, %s149
      %p158 = scmp.eq.s32.totalorder %s35, 0
      %p159 = por %p157, %p158
      %p160 = scmp.ne.s32.totalorder %s148, %s149
      %p161 = scmp.eq.s32.totalorder %s36, 3
      %p162 = por %p160, %p161
      %p164 = scmp.ne.s32.totalorder %s149, %s163
      %p165 = scmp.eq.s32.totalorder %s36, 0
      %p166 = por %p164, %p165
      %s168 = sadd.s32 %s167, 1
      %p171 = scmp.eq.s32.totalorder %s30, 3
      %p172 = scmp.ne.s32.totalorder %s167, %s169
      %p173 = scmp.eq.s32.totalorder %s30, 0
      %p174 = por %p172, %p173
      %p175 = scmp.ne.s32.totalorder %s167, %s169
      %p176 = scmp.eq.s32.totalorder %s35, 3
      %p177 = por %p175, %p176
      %p178 = scmp.ne.s32.totalorder %s169, %s170
      %p179 = scmp.eq.s32.totalorder %s35, 0
      %p180 = por %p178, %p179
      %p181 = scmp.ne.s32.totalorder %s169, %s170
      %p182 = scmp.eq.s32.totalorder %s36, 3
      %p183 = por %p181, %p182
      %p185 = scmp.ne.s32.totalorder %s170, %s184
      %p186 = scmp.eq.s32.totalorder %s36, 0
      %p187 = por %p185, %p186
      %s189 = sadd.s32 %s188, 1
      %p192 = scmp.eq.s32.totalorder %s30, 3
      %p193 = scmp.ne.s32.totalorder %s188, %s190
      %p194 = scmp.eq.s32.totalorder %s30, 0
      %p195 = por %p193, %p194
      %p196 = scmp.ne.s32.totalorder %s188, %s190
      %p197 = scmp.eq.s32.totalorder %s35, 3
      %p198 = por %p196, %p197
      %p199 = scmp.ne.s32.totalorder %s190, %s191
      %p200 = scmp.eq.s32.totalorder %s35, 0
      %p201 = por %p199, %p200
      %p202 = scmp.ne.s32.totalorder %s190, %s191
      %p203 = scmp.eq.s32.totalorder %s36, 3
      %p204 = por %p202, %p203
      %p206 = scmp.ne.s32.totalorder %s191, %s205
      %p207 = scmp.eq.s32.totalorder %s36, 0
      %p208 = por %p206, %p207
      %s210 = sadd.s32 %s209, 1
      %p213 = scmp.eq.s32.totalorder %s30, 3
      %p214 = scmp.ne.s32.totalorder %s209, %s211
      %p215 = scmp.eq.s32.totalorder %s30, 0
      %p216 = por %p214, %p215
      %p217 = scmp.ne.s32.totalorder %s209, %s211
      %p218 = scmp.eq.s32.totalorder %s35, 3
      %p219 = por %p217, %p218
      %p220 = scmp.ne.s32.totalorder %s211, %s212
      %p221 = scmp.eq.s32.totalorder %s35, 0
      %p222 = por %p220, %p221
      %p223 = scmp.ne.s32.totalorder %s211, %s212
      %p224 = scmp.eq.s32.totalorder %s36, 3
      %p225 = por %p223, %p224
      %p227 = scmp.ne.s32.totalorder %s212, %s226
      %p228 = scmp.eq.s32.totalorder %s36, 0
      %p229 = por %p227, %p228
      %s231 = sadd.s32 %s230, 1
      %p234 = scmp.eq.s32.totalorder %s30, 3
      %p235 = scmp.ne.s32.totalorder %s230, %s232
      %p236 = scmp.eq.s32.totalorder %s30, 0
      %p237 = por %p235, %p236
      %p238 = scmp.ne.s32.totalorder %s230, %s232
      %p239 = scmp.eq.s32.totalorder %s35, 3
      %p240 = por %p238, %p239
      %p241 = scmp.ne.s32.totalorder %s232, %s233
      %p242 = scmp.eq.s32.totalorder %s35, 0
      %p243 = por %p241, %p242
      %p244 = scmp.ne.s32.totalorder %s232, %s233
      %p245 = scmp.eq.s32.totalorder %s36, 3
      %p246 = por %p244, %p245
      %p248 = scmp.ne.s32.totalorder %s233, %s247
      %p249 = scmp.eq.s32.totalorder %s36, 0
      %p250 = por %p248, %p249
      %s252 = sadd.s32 %s251, 1
      %p255 = scmp.eq.s32.totalorder %s30, 3
      %p256 = scmp.ne.s32.totalorder %s251, %s253
      %p257 = scmp.eq.s32.totalorder %s30, 0
      %p258 = por %p256, %p257
      %p259 = scmp.ne.s32.totalorder %s251, %s253
      %p260 = scmp.eq.s32.totalorder %s35, 3
      %p261 = por %p259, %p260
      %p262 = scmp.ne.s32.totalorder %s253, %s254
      %p263 = scmp.eq.s32.totalorder %s35, 0
      %p264 = por %p262, %p263
      %p265 = scmp.ne.s32.totalorder %s253, %s254
      %p266 = scmp.eq.s32.totalorder %s36, 3
      %p267 = por %p265, %p266
      %p269 = scmp.ne.s32.totalorder %s254, %s268
      %p270 = scmp.eq.s32.totalorder %s36, 0
      %p271 = por %p269, %p270
      %s273 = sadd.s32 %s272, 1
      %p276 = scmp.eq.s32.totalorder %s30, 3
      %p277 = scmp.ne.s32.totalorder %s272, %s274
      %p278 = scmp.eq.s32.totalorder %s30, 0
      %p279 = por %p277, %p278
      %p280 = scmp.ne.s32.totalorder %s272, %s274
      %p281 = scmp.eq.s32.totalorder %s35, 3
      %p282 = por %p280, %p281
      %p283 = scmp.ne.s32.totalorder %s274, %s275
      %p284 = scmp.eq.s32.totalorder %s35, 0
      %p285 = por %p283, %p284
      %p286 = scmp.ne.s32.totalorder %s274, %s275
      %p287 = scmp.eq.s32.totalorder %s36, 3
      %p288 = por %p286, %p287
      %p290 = scmp.ne.s32.totalorder %s275, %s289
      %p291 = scmp.eq.s32.totalorder %s36, 0
      %p292 = por %p290, %p291
      %s294 = sadd.s32 %s293, 1
      %p297 = scmp.eq.s32.totalorder %s30, 3
      %p298 = scmp.ne.s32.totalorder %s293, %s295
      %p299 = scmp.eq.s32.totalorder %s30, 0
      %p300 = por %p298, %p299
      %p301 = scmp.ne.s32.totalorder %s293, %s295
      %p302 = scmp.eq.s32.totalorder %s35, 3
      %p303 = por %p301, %p302
      %p304 = scmp.ne.s32.totalorder %s295, %s296
      %p305 = scmp.eq.s32.totalorder %s35, 0
      %p306 = por %p304, %p305
      %p307 = scmp.ne.s32.totalorder %s295, %s296
      %p308 = scmp.eq.s32.totalorder %s36, 3
      %p309 = por %p307, %p308
      %p311 = scmp.ne.s32.totalorder %s296, %s310
      %p312 = scmp.eq.s32.totalorder %s36, 0
      %p313 = por %p311, %p312
      %s315 = sadd.s32 %s314, 1
      %p318 = scmp.eq.s32.totalorder %s30, 3
      %p319 = scmp.ne.s32.totalorder %s314, %s316
      %p320 = scmp.eq.s32.totalorder %s30, 0
      %p321 = por %p319, %p320
      %p322 = scmp.ne.s32.totalorder %s314, %s316
      %p323 = scmp.eq.s32.totalorder %s35, 3
      %p324 = por %p322, %p323
      %p325 = scmp.ne.s32.totalorder %s316, %s317
      %p326 = scmp.eq.s32.totalorder %s35, 0
      %p327 = por %p325, %p326
      %p328 = scmp.ne.s32.totalorder %s316, %s317
      %p329 = scmp.eq.s32.totalorder %s36, 3
      %p330 = por %p328, %p329
      %p332 = scmp.ne.s32.totalorder %s317, %s331
      %p333 = scmp.eq.s32.totalorder %s36, 0
      %p334 = por %p332, %p333
      %s336 = sadd.s32 %s335, 1
      %p339 = scmp.eq.s32.totalorder %s30, 3
      %p340 = scmp.ne.s32.totalorder %s335, %s337
      %p341 = scmp.eq.s32.totalorder %s30, 0
      %p342 = por %p340, %p341
      %p343 = scmp.ne.s32.totalorder %s335, %s337
      %p344 = scmp.eq.s32.totalorder %s35, 3
      %p345 = por %p343, %p344
      %p346 = scmp.ne.s32.totalorder %s337, %s338
      %p347 = scmp.eq.s32.totalorder %s35, 0
      %p348 = por %p346, %p347
      %p349 = scmp.ne.s32.totalorder %s337, %s338
      %p350 = scmp.eq.s32.totalorder %s36, 3
      %p351 = por %p349, %p350
      %p353 = scmp.ne.s32.totalorder %s338, %s352
      %p354 = scmp.eq.s32.totalorder %s36, 0
      %p355 = por %p353, %p354
      %s357 = sadd.s32 %s356, 1
      %p360 = scmp.eq.s32.totalorder %s30, 3
      %p361 = scmp.ne.s32.totalorder %s356, %s358
      %p362 = scmp.eq.s32.totalorder %s30, 0
      %p363 = por %p361, %p362
      %p364 = scmp.ne.s32.totalorder %s356, %s358
      %p365 = scmp.eq.s32.totalorder %s35, 3
      %p366 = por %p364, %p365
      %p367 = scmp.ne.s32.totalorder %s358, %s359
      %p368 = scmp.eq.s32.totalorder %s35, 0
      %p369 = por %p367, %p368
      %p370 = scmp.ne.s32.totalorder %s358, %s359
      %p371 = scmp.eq.s32.totalorder %s36, 3
      %p372 = por %p370, %p371
      %p374 = scmp.ne.s32.totalorder %s359, %s373
      %p375 = scmp.eq.s32.totalorder %s36, 0
      %p376 = por %p374, %p375
      %s378 = sadd.s32 %s377, 1
      %p381 = scmp.eq.s32.totalorder %s30, 3
      %p382 = scmp.ne.s32.totalorder %s377, %s379
      %p383 = scmp.eq.s32.totalorder %s30, 0
      %p384 = por %p382, %p383
      %p385 = scmp.ne.s32.totalorder %s377, %s379
      %p386 = scmp.eq.s32.totalorder %s35, 3
      %p387 = por %p385, %p386
      %p388 = scmp.ne.s32.totalorder %s379, %s380
      %p389 = scmp.eq.s32.totalorder %s35, 0
      %p390 = por %p388, %p389
      %p391 = scmp.ne.s32.totalorder %s379, %s380
      %p392 = scmp.eq.s32.totalorder %s36, 3
      %p393 = por %p391, %p392
      %p395 = scmp.ne.s32.totalorder %s380, %s394
      %p396 = scmp.eq.s32.totalorder %s36, 0
      %p397 = por %p395, %p396
      %s398 = ssub.s32 %s37, %s49
      %s399 = ssub.s32 %s38, %s45
      %s400 = sor.u32 %s398, %s399
      %p401 = scmp.eq.s32.totalorder %s400, 0
      %s403 = sadd.s32 %s402, 1
      %s404 = scalar_select %p401, %s402, %s403
      %p407 = pneg %p401
      %p408 = scmp.eq.s32.totalorder %s30, 3
      %p409 = por %p407, %p408
      %p410 = scmp.ne.s32.totalorder %s402, %s405
      %p411 = scmp.eq.s32.totalorder %s30, 0
      %p412 = por %p410, %p411
      %p413 = scmp.ne.s32.totalorder %s402, %s405
      %p414 = scmp.eq.s32.totalorder %s35, 3
      %p415 = por %p413, %p414
      %p416 = scmp.ne.s32.totalorder %s405, %s406
      %p417 = scmp.eq.s32.totalorder %s35, 0
      %p418 = por %p416, %p417
      %p419 = scmp.ne.s32.totalorder %s405, %s406
      %p420 = scmp.eq.s32.totalorder %s36, 3
      %p421 = por %p419, %p420
      %p423 = scmp.ne.s32.totalorder %s406, %s422
      %p424 = scmp.eq.s32.totalorder %s36, 0
      %p425 = por %p423, %p424
      %p426 = scmp.le.s32.totalorder 1, %s30
      %p427 = scmp.lt.s32.totalorder %s30, 5
      %p428 = pnand %p426, %p427
      %p429 = pneg %p428
      // Predicated region
      $region9: #{tpu_custom_call.1} parent=5 // pred_check
        _
      $region10: #{tpu_custom_call.1} parent=5 // pred_check_branch
        %431 = sbr.rel (%p428) target = $region12
      $region11: #{tpu_custom_call.1} parent=5 // pred_region
        %s432 = ssub.s32 %s30, 1
        // Predicated region
        $region13: #{tpu_custom_call.1} parent=11 // pred_check
          %p433 = pneg %p117
        $region14: #{tpu_custom_call.1} parent=11 // pred_check_branch
          %435 = sbr.rel (%p433) target = $region16
        $region15: #{tpu_custom_call.1} parent=11 // pred_region
          _
        $region16: #{tpu_custom_call.1} parent=11 // pred_fallthru
          _
        // Predicated region
        $region17: #{tpu_custom_call.1} parent=11 // pred_check
          %p436 = pneg %p138
        $region18: #{tpu_custom_call.1} parent=11 // pred_check_branch
          %438 = sbr.rel (%p436) target = $region20
        $region19: #{tpu_custom_call.1} parent=11 // pred_region
          _
        $region20: #{tpu_custom_call.1} parent=11 // pred_fallthru
          _
        // Predicated region
        $region21: #{tpu_custom_call.1} parent=11 // pred_check
          %p439 = pneg %p159
        $region22: #{tpu_custom_call.1} parent=11 // pred_check_branch
          %441 = sbr.rel (%p439) target = $region24
        $region23: #{tpu_custom_call.1} parent=11 // pred_region
          _
        $region24: #{tpu_custom_call.1} parent=11 // pred_fallthru
          _
        // Predicated region
        $region25: #{tpu_custom_call.1} parent=11 // pred_check
          %p442 = pneg %p180
        $region26: #{tpu_custom_call.1} parent=11 // pred_check_branch
          %444 = sbr.rel (%p442) target = $region28
        $region27: #{tpu_custom_call.1} parent=11 // pred_region
          _
        $region28: #{tpu_custom_call.1} parent=11 // pred_fallthru
          _
        // Predicated region
        $region29: #{tpu_custom_call.1} parent=11 // pred_check
          %p445 = pneg %p201
        $region30: #{tpu_custom_call.1} parent=11 // pred_check_branch
          %447 = sbr.rel (%p445) target = $region32
        $region31: #{tpu_custom_call.1} parent=11 // pred_region
          %449 = vsyncadd [#allocation8], 0
          %s450 = sshll.u32 %s6, 4
          %s451 = int_to_ptr.hbm [resolvable:$true] %s450
          %s452 = sshll.u32 [#allocation7], 4
          %s453 = int_to_ptr.vmem [resolvable:$true] %s452
          %458 = dma.hbm_to_vmem [thread:$0]  %s451, 256, %s453, [#allocation8], 64, 64, 4
        $region32: #{tpu_custom_call.1} parent=11 // pred_fallthru
          _
        // Predicated region
        $region33: #{tpu_custom_call.1} parent=11 // pred_check
          %p459 = pneg %p222
        $region34: #{tpu_custom_call.1} parent=11 // pred_check_branch
          %461 = sbr.rel (%p459) target = $region36
        $region35: #{tpu_custom_call.1} parent=11 // pred_region
          _
        $region36: #{tpu_custom_call.1} parent=11 // pred_fallthru
          _
        // Predicated region
        $region37: #{tpu_custom_call.1} parent=11 // pred_check
          %p462 = pneg %p243
        $region38: #{tpu_custom_call.1} parent=11 // pred_check_branch
          %464 = sbr.rel (%p462) target = $region40
        $region39: #{tpu_custom_call.1} parent=11 // pred_region
          %466 = vsyncadd [#allocation8], 0
          %s467 = sshll.u32 %s8, 4
          %s468 = int_to_ptr.hbm [resolvable:$true] %s467
          %s469 = sshll.u32 [#allocation9], 4
          %s470 = int_to_ptr.vmem [resolvable:$true] %s469
          %475 = dma.hbm_to_vmem [thread:$0]  %s468, 256, %s470, [#allocation8], 64, 64, 4
        $region40: #{tpu_custom_call.1} parent=11 // pred_fallthru
          _
        // Predicated region
        $region41: #{tpu_custom_call.1} parent=11 // pred_check
          %p476 = pneg %p264
        $region42: #{tpu_custom_call.1} parent=11 // pred_check_branch
          %478 = sbr.rel (%p476) target = $region44
        $region43: #{tpu_custom_call.1} parent=11 // pred_region
          _
        $region44: #{tpu_custom_call.1} parent=11 // pred_fallthru
          _
        // Predicated region
        $region45: #{tpu_custom_call.1} parent=11 // pred_check
          %p479 = pneg %p285
        $region46: #{tpu_custom_call.1} parent=11 // pred_check_branch
          %481 = sbr.rel (%p479) target = $region48
        $region47: #{tpu_custom_call.1} parent=11 // pred_region
          _
        $region48: #{tpu_custom_call.1} parent=11 // pred_fallthru
          _
        // Predicated region
        $region49: #{tpu_custom_call.1} parent=11 // pred_check
          %p482 = pneg %p306
        $region50: #{tpu_custom_call.1} parent=11 // pred_check_branch
          %484 = sbr.rel (%p482) target = $region52
        $region51: #{tpu_custom_call.1} parent=11 // pred_region
          _
        $region52: #{tpu_custom_call.1} parent=11 // pred_fallthru
          _
        // Predicated region
        $region53: #{tpu_custom_call.1} parent=11 // pred_check
          %p485 = pneg %p327
        $region54: #{tpu_custom_call.1} parent=11 // pred_check_branch
          %487 = sbr.rel (%p485) target = $region56
        $region55: #{tpu_custom_call.1} parent=11 // pred_region
          %489 = vsyncadd [#allocation11], 0
          %s490 = sshll.u32 %s12, 4
          %s491 = int_to_ptr.hbm [resolvable:$true] %s490
          %s492 = sshll.u32 [#allocation10], 4
          %s493 = int_to_ptr.vmem [resolvable:$true] %s492
          %498 = dma.hbm_to_vmem [thread:$0]  %s491, 256, %s493, [#allocation11], 64, 64, 4
        $region56: #{tpu_custom_call.1} parent=11 // pred_fallthru
          _
        // Predicated region
        $region57: #{tpu_custom_call.1} parent=11 // pred_check
          %p499 = pneg %p348
        $region58: #{tpu_custom_call.1} parent=11 // pred_check_branch
          %501 = sbr.rel (%p499) target = $region60
        $region59: #{tpu_custom_call.1} parent=11 // pred_region
          _
        $region60: #{tpu_custom_call.1} parent=11 // pred_fallthru
          _
        // Predicated region
        $region61: #{tpu_custom_call.1} parent=11 // pred_check
          %p502 = pneg %p369
        $region62: #{tpu_custom_call.1} parent=11 // pred_check_branch
          %504 = sbr.rel (%p502) target = $region64
        $region63: #{tpu_custom_call.1} parent=11 // pred_region
          _
        $region64: #{tpu_custom_call.1} parent=11 // pred_fallthru
          _
        // Predicated region
        $region65: #{tpu_custom_call.1} parent=11 // pred_check
          %p505 = pneg %p390
        $region66: #{tpu_custom_call.1} parent=11 // pred_check_branch
          %507 = sbr.rel (%p505) target = $region68
        $region67: #{tpu_custom_call.1} parent=11 // pred_region
          _
        $region68: #{tpu_custom_call.1} parent=11 // pred_fallthru
          _
      $region12: #{tpu_custom_call.1} parent=5 // pred_fallthru
        _
      %p508 = scmp.lt.s32.totalorder %s30, 4
      // Predicated region
      $region69: #{tpu_custom_call.1} parent=5 // pred_check
        %p509 = pneg %p508
      $region70: #{tpu_custom_call.1} parent=5 // pred_check_branch
        %511 = sbr.rel (%p509) target = $region72
      $region71: #{tpu_custom_call.1} parent=5 // pred_region
        // Predicated region
        $region73: #{tpu_custom_call.1} parent=71 // pred_check
          %p512 = pneg %p64
        $region74: #{tpu_custom_call.1} parent=71 // pred_check_branch
          %514 = sbr.rel (%p512) target = $region76
        $region75: #{tpu_custom_call.1} parent=71 // pred_region
          %p515 = scmp.lt.s32.totalorder %s37, 1
          %s516 = scalar_select %p515, %s37, 1
          %p517 = scmp.lt.s32.totalorder %s38, 1
          %s518 = scalar_select %p517, %s38, 1
          %s519 = smul.addr %s516, 2
          %s520 = sadd.s32 %s518, %s519
          %s521 = smul.addr %s520, 8
          %s522 = scalar_lea.vmem %s0, %s521
        $region76: #{tpu_custom_call.1} parent=71 // pred_fallthru
          _
        // Predicated region
        $region77: #{tpu_custom_call.1} parent=71 // pred_check
          %p523 = pneg %p90
        $region78: #{tpu_custom_call.1} parent=71 // pred_check_branch
          %525 = sbr.rel (%p523) target = $region80
        $region79: #{tpu_custom_call.1} parent=71 // pred_region
          %s526 = sand.u32 %s80, 1
          %s527 = scalar_lea.sflag [#allocation5], %s526
          %s528 = sand.u32 %s80, 1
          %s529 = smul.addr %s528, 16
          %s530 = scalar_lea.vmem [#allocation4], %s529
          %532 = vsyncadd %s527, 0
          %s533 = smul.addr %s37, 2
          %s534 = smul.addr %s533, 8
          %s535 = scalar_lea.hbm %s1, %s534
          %s536 = sshll.u32 %s535, 4
          %s537 = int_to_ptr.hbm [resolvable:$true] %s536
          %s538 = sshll.u32 %s530, 4
          %s539 = int_to_ptr.vmem [resolvable:$true] %s538
          %544 = dma.hbm_to_vmem [thread:$0]  %s537, 256, %s539, %s527, 128, 128, 8
        $region80: #{tpu_custom_call.1} parent=71 // pred_fallthru
          _
      $region72: #{tpu_custom_call.1} parent=5 // pred_fallthru
        _
      %p545 = scmp.le.s32.totalorder 1, %s30
      %p546 = scmp.lt.s32.totalorder %s30, 5
      %p547 = pnand %p545, %p546
      %p548 = pneg %p547
      // Predicated region
      $region81: #{tpu_custom_call.1} parent=5 // pred_check
        _
      $region82: #{tpu_custom_call.1} parent=5 // pred_check_branch
        %550 = sbr.rel (%p547) target = $region84
      $region83: #{tpu_custom_call.1} parent=5 // pred_region
        %s551 = ssub.s32 %s30, 1
        %s552 = sand.u32 %s83, 1
        %s553 = scalar_lea.sflag [#allocation5], %s552
        %s554 = sand.u32 %s83, 1
        %s555 = smul.addr %s554, 16
        %s556 = scalar_lea.vmem [#allocation4], %s555
        // Predicated region
        $region85: #{tpu_custom_call.1} parent=83 // pred_check
          %p557 = pneg %p96
        $region86: #{tpu_custom_call.1} parent=83 // pred_check_branch
          %559 = sbr.rel (%p557) target = $region88
        $region87: #{tpu_custom_call.1} parent=83 // pred_region
          %561 = dma.done %s553, 256
        $region88: #{tpu_custom_call.1} parent=83 // pred_fallthru
          _
        // Predicated region
        $region89: #{tpu_custom_call.1} parent=83 // pred_check
          %p562 = pneg %p201
        $region90: #{tpu_custom_call.1} parent=83 // pred_check_branch
          %564 = sbr.rel (%p562) target = $region92
        $region91: #{tpu_custom_call.1} parent=83 // pred_region
          %566 = dma.done [#allocation8], 256
        $region92: #{tpu_custom_call.1} parent=83 // pred_fallthru
          _
        // Predicated region
        $region93: #{tpu_custom_call.1} parent=83 // pred_check
          %p567 = pneg %p243
        $region94: #{tpu_custom_call.1} parent=83 // pred_check_branch
          %569 = sbr.rel (%p567) target = $region96
        $region95: #{tpu_custom_call.1} parent=83 // pred_region
          %571 = dma.done [#allocation8], 256
        $region96: #{tpu_custom_call.1} parent=83 // pred_fallthru
          _
        // Predicated region
        $region97: #{tpu_custom_call.1} parent=83 // pred_check
          %p572 = pneg %p327
        $region98: #{tpu_custom_call.1} parent=83 // pred_check_branch
          %574 = sbr.rel (%p572) target = $region100
        $region99: #{tpu_custom_call.1} parent=83 // pred_region
          %576 = dma.done [#allocation11], 256
        $region100: #{tpu_custom_call.1} parent=83 // pred_fallthru
          _
        %p577 = scmp.lt.s32.totalorder %s39, 1
        %s578 = scalar_select %p577, %s39, 1
        %p579 = scmp.lt.s32.totalorder %s40, 1
        %s580 = scalar_select %p579, %s40, 1
        %s581 = smul.addr %s578, 2
        %s582 = sadd.s32 %s580, %s581
        %s583 = smul.addr %s582, 8
        %s584 = scalar_lea.vmem %s0, %s583
        %p585 = pneg %p70
        %p586 = pneg %p67
        %s587 = sand.u32 %s83, 1
        %s588 = scalar_lea.sflag [#allocation5], %s587
        %s589 = sand.u32 %s83, 1
        %s590 = smul.addr %s589, 16
        %s591 = scalar_lea.vmem [#allocation4], %s590
        %p592 = pneg %p96
        %p593 = pneg %p93
        %p594 = pneg %p117
        %p595 = pneg %p114
        %p596 = pneg %p138
        %p597 = pneg %p135
        %p598 = pneg %p159
        %p599 = pneg %p156
        %p600 = pneg %p180
        %p601 = pneg %p177
        %p602 = pneg %p201
        %p603 = pneg %p198
        %p604 = pneg %p222
        %p605 = pneg %p219
        %p606 = pneg %p243
        %p607 = pneg %p240
        %p608 = pneg %p264
        %p609 = pneg %p261
        %p610 = pneg %p285
        %p611 = pneg %p282
        %p612 = pneg %p306
        %p613 = pneg %p303
        %p614 = pneg %p327
        %p615 = pneg %p324
        %p616 = pneg %p348
        %p617 = pneg %p345
        %p618 = pneg %p369
        %p619 = pneg %p366
        %p620 = pneg %p390
        %p621 = pneg %p387
        %p622 = pneg %p418
        %p623 = pneg %p415
        %s624 = sand.u32 %s405, 1
        %s625 = scalar_lea.sflag [#allocation6], %s624
        %s626 = sand.u32 %s405, 1
        %s627 = smul.addr %s626, 8
        %s628 = scalar_lea.vmem [#allocation12], %s627
        %p629 = scmp.lt.s32.totalorder %s39, 1
        %s630 = scalar_select %p629, %s39, 1
        %p631 = scmp.lt.s32.totalorder %s40, 1
        %s632 = scalar_select %p631, %s40, 1
        %s633 = smul.addr %s630, 2
        %s634 = sadd.s32 %s632, %s633
        %s635 = smul.addr %s634, 8
        %s636 = scalar_lea.vmem %s0, %s635
        %p638 = scmp.eq.s32.totalorder %s40, 0
        // Predicated region
        $region101: #{tpu_custom_call.1} parent=83 // pred_check
          %p639 = pneg %p638
        $region102: #{tpu_custom_call.1} parent=83 // pred_check_branch
          %641 = sbr.rel (%p639) target = $region104
        $region103: #{tpu_custom_call.1} parent=83 // pred_region
          %v642 = vld [vmem:[%s556] sm:$0xff]
          %v643 = vld [vmem:[%s556 + $0x8] sm:$0xff]
          %v644 = vld [vmem:[%s2] sm:$0x1]
          %v645 = vld [vmem:[%s3] sm:$0x1]
          %vm646 = vcmask 261120
          %v647 = vsel %vm646, %v642, 0.0
          %648 = vadd.xlane.f32.xlu0 %v647
          %v649 = vpop.xlane.xlu0 %648
          %v650 = vsel %vm646, %v643, 0.0
          %651 = vadd.xlane.f32.xlu0 %v650
          %v652 = vpop.xlane.xlu0 %651
          %v653 = vrcp.pop 32.0
          %v654 = vmul.f32 32.0, %v653
          %v655 = vsub.f32 1.0, %v654
          %v656 = vmul.f32 %v653, %v655
          %v657 = vadd.f32 %v653, %v656
          %vm658 = vweird.f32 %v653
          %v659 = vsel %vm658, %v653, %v657
          %v660 = vmul.f32 %v649, %v659
          %v661 = vmul.f32 %v652, %v659
          %v662 = vsub.f32 %v642, %v660
          %v663 = vsub.f32 %v643, %v661
          %v664 = vmul.f32 %v662, %v662
          %v665 = vmul.f32 %v663, %v663
          %v666 = vsel %vm646, %v664, 0.0
          %667 = vadd.xlane.f32.xlu0 %v666
          %v668 = vpop.xlane.xlu0 %667
          %v669 = vsel %vm646, %v665, 0.0
          %670 = vadd.xlane.f32.xlu0 %v669
          %v671 = vpop.xlane.xlu0 %670
          %v672 = vmul.f32 %v668, 0.032258064
          %v673 = vmul.f32 %v671, 0.032258064
          %v674 = vrsqrt.pop %v672
          %v675 = vmul.f32 %v674, %v672
          %v676 = vmul.f32 %v675, %v674
          %v677 = vmul.f32 0.5, %v676
          %v678 = vsub.f32 1.5, %v677
          %v679 = vmul.f32 %v674, %v678
          %v680 = vmul.f32 %v672, %v679
          %vm681 = vcmp.eq.f32.partialorder %v672, inf
          %v682 = vsel %vm681, %v672, %v680
          %vm683 = vcmp.eq.f32.partialorder %v672, 0.0
          %v684 = vand.u32 %v672, 2147483648
          %v685 = vsel %vm683, %v684, %v682
          %v686 = vrsqrt.pop %v673
          %v687 = vmul.f32 %v686, %v673
          %v688 = vmul.f32 %v687, %v686
          %v689 = vmul.f32 0.5, %v688
          %v690 = vsub.f32 1.5, %v689
          %v691 = vmul.f32 %v686, %v690
          %v692 = vmul.f32 %v673, %v691
          %vm693 = vcmp.eq.f32.partialorder %v673, inf
          %v694 = vsel %vm693, %v673, %v692
          %vm695 = vcmp.eq.f32.partialorder %v673, 0.0
          %v696 = vand.u32 %v673, 2147483648
          %v697 = vsel %vm695, %v696, %v694
          %v698 = vadd.f32 %v685, 1e-06
          %v699 = vadd.f32 %v697, 1e-06
          %v700 = vrcp.pop %v698
          %v701 = vrcp.pop %v699
          %v703 = vperm.slane %v644, 0
          %v705 = vmul.f32 %v703, %v662
          %v706 = vmul.f32 %v703, %v663
          %v707 = vmul.f32 %v705, %v700
          %v708 = vmul.f32 %v706, %v701
          %v710 = vperm.slane %v645, 0
          %v712 = vadd.f32 %v707, %v710
          %v713 = vadd.f32 %v708, %v710
          %v714 = vld [vmem:[#allocation7] sm:$0xf]
          %v715 = vld [vmem:[#allocation7 + $0x4] sm:$0xf]
          %v716 = vld [vmem:[#allocation7 + $0x8] sm:$0xf]
          %v717 = vld [vmem:[#allocation7 + $0xc] sm:$0xf]
          %v718 = vpack.c.bf16 %v713, %v712
          %v719 = vld [vmem:[%s7] sm:$0x1]
          %v721 = vperm.slane %v719, 0
          %v727 = vunpack.c.l.b16 %v714
          %v728 = vunpack.c.l.b16 %v715
          %v729 = vunpack.c.l.b16 %v716
          %v730 = vunpack.c.l.b16 %v717
          %v731 = vpack.c.b16 %v728, %v727
          %v732 = vpack.c.b16 %v730, %v729
          %v736 = vsel %vm646, %v718, 0
          %738 = vmatpush.bf16.msra.mxu0 0
          %739 = vmatpush.bf16.msra.mxu0 0
          %740 = vmatpush.bf16.msra.mxu0 0
          %741 = vmatpush.bf16.msra.mxu0 0
          %742 = vmatpush.bf16.msra.mxu0 0
          %743 = vmatpush.bf16.msra.mxu0 0
          %744 = vmatpush.bf16.msra.mxu0 %v732
          %745 = vmatpush.bf16.msra.mxu0 %v731
          %746 = vmatmul.bf16.gmra.mxu0 %v736
          %v747 = vpop.f32.mrf.mxu0
          %v748 = vadd.f32 %v721, %v747
          %v749 = vpop.f32.mrf.mxu0
          %v750 = vadd.f32 %v721, %v749
          %751 = vdwg.mxu0
          %752 = vxpose.xlu0.b32.start [1/16] %v748, 128
          %753 = vxpose.xlu0.b32.cont [2/16] %v750, 128
          %754 = vxpose.xlu0.b32.cont [3/16] 0.0, 128
          %755 = vxpose.xlu0.b32.cont [4/16] 0.0, 128
          %756 = vxpose.xlu0.b32.cont [5/16] 0.0, 128
          %757 = vxpose.xlu0.b32.cont [6/16] 0.0, 128
          %758 = vxpose.xlu0.b32.cont [7/16] 0.0, 128
          %759 = vxpose.xlu0.b32.cont [8/16] 0.0, 128
          %760 = vxpose.xlu0.b32.cont [9/16] 0.0, 128
          %761 = vxpose.xlu0.b32.cont [10/16] 0.0, 128
          %762 = vxpose.xlu0.b32.cont [11/16] 0.0, 128
          %763 = vxpose.xlu0.b32.cont [12/16] 0.0, 128
          %764 = vxpose.xlu0.b32.cont [13/16] 0.0, 128
          %765 = vxpose.xlu0.b32.cont [14/16] 0.0, 128
          %766 = vxpose.xlu0.b32.cont [15/16] 0.0, 128
          %767 = vxpose.xlu0.b32.end [16/16] 0.0, 128
          %v768 = vpop.trf.xlu0
          %v769 = vpop.trf.xlu0
          %v770 = vpop.trf.xlu0
          %v771 = vpop.trf.xlu0
          %v772 = vpop.trf.xlu0
          %v773 = vpop.trf.xlu0
          %v774 = vpop.trf.xlu0
          %v775 = vpop.trf.xlu0
          %v776 = vpop.trf.xlu0
          %v777 = vpop.trf.xlu0
          %v778 = vpop.trf.xlu0
          %v779 = vpop.trf.xlu0
          %v780 = vpop.trf.xlu0
          %v781 = vpop.trf.xlu0
          %v782 = vpop.trf.xlu0
          %v783 = vpop.trf.xlu0
          %784 = vxpose.xlu0.b32.start [1/16] %v768, 128
          %785 = vxpose.xlu0.b32.cont [2/16] 0.0, 128
          %786 = vxpose.xlu0.b32.cont [3/16] 0.0, 128
          %787 = vxpose.xlu0.b32.cont [4/16] 0.0, 128
          %788 = vxpose.xlu0.b32.cont [5/16] 0.0, 128
          %789 = vxpose.xlu0.b32.cont [6/16] 0.0, 128
          %790 = vxpose.xlu0.b32.cont [7/16] 0.0, 128
          %791 = vxpose.xlu0.b32.cont [8/16] 0.0, 128
          %792 = vxpose.xlu0.b32.cont [9/16] 0.0, 128
          %793 = vxpose.xlu0.b32.cont [10/16] 0.0, 128
          %794 = vxpose.xlu0.b32.cont [11/16] 0.0, 128
          %795 = vxpose.xlu0.b32.cont [12/16] 0.0, 128
          %796 = vxpose.xlu0.b32.cont [13/16] 0.0, 128
          %797 = vxpose.xlu0.b32.cont [14/16] 0.0, 128
          %798 = vxpose.xlu0.b32.cont [15/16] 0.0, 128
          %799 = vxpose.xlu0.b32.end [16/16] 0.0, 128
          %v800 = vpop.trf.xlu0
          %v801 = vpop.trf.xlu0
          %v802 = vpop.trf.xlu0
          %v803 = vpop.trf.xlu0
          %v804 = vpop.trf.xlu0
          %v805 = vpop.trf.xlu0
          %v806 = vpop.trf.xlu0
          %v807 = vpop.trf.xlu0
          %v808 = vpop.trf.xlu0
          %v809 = vpop.trf.xlu0
          %v810 = vpop.trf.xlu0
          %v811 = vpop.trf.xlu0
          %v812 = vpop.trf.xlu0
          %v813 = vpop.trf.xlu0
          %v814 = vpop.trf.xlu0
          %v815 = vpop.trf.xlu0
          %816 = vxpose.xlu0.b32.start [1/16] %v769, 128
          %817 = vxpose.xlu0.b32.cont [2/16] 0.0, 128
          %818 = vxpose.xlu0.b32.cont [3/16] 0.0, 128
          %819 = vxpose.xlu0.b32.cont [4/16] 0.0, 128
          %820 = vxpose.xlu0.b32.cont [5/16] 0.0, 128
          %821 = vxpose.xlu0.b32.cont [6/16] 0.0, 128
          %822 = vxpose.xlu0.b32.cont [7/16] 0.0, 128
          %823 = vxpose.xlu0.b32.cont [8/16] 0.0, 128
          %824 = vxpose.xlu0.b32.cont [9/16] 0.0, 128
          %825 = vxpose.xlu0.b32.cont [10/16] 0.0, 128
          %826 = vxpose.xlu0.b32.cont [11/16] 0.0, 128
          %827 = vxpose.xlu0.b32.cont [12/16] 0.0, 128
          %828 = vxpose.xlu0.b32.cont [13/16] 0.0, 128
          %829 = vxpose.xlu0.b32.cont [14/16] 0.0, 128
          %830 = vxpose.xlu0.b32.cont [15/16] 0.0, 128
          %831 = vxpose.xlu0.b32.end [16/16] 0.0, 128
          %v832 = vpop.trf.xlu0
          %v833 = vpop.trf.xlu0
          %v834 = vpop.trf.xlu0
          %v835 = vpop.trf.xlu0
          %v836 = vpop.trf.xlu0
          %v837 = vpop.trf.xlu0
          %v838 = vpop.trf.xlu0
          %v839 = vpop.trf.xlu0
          %v840 = vpop.trf.xlu0
          %v841 = vpop.trf.xlu0
          %v842 = vpop.trf.xlu0
          %v843 = vpop.trf.xlu0
          %v844 = vpop.trf.xlu0
          %v845 = vpop.trf.xlu0
          %v846 = vpop.trf.xlu0
          %v847 = vpop.trf.xlu0
          %848 = vxpose.xlu0.b32.start [1/16] %v770, 128
          %849 = vxpose.xlu0.b32.cont [2/16] 0.0, 128
          %850 = vxpose.xlu0.b32.cont [3/16] 0.0, 128
          %851 = vxpose.xlu0.b32.cont [4/16] 0.0, 128
          %852 = vxpose.xlu0.b32.cont [5/16] 0.0, 128
          %853 = vxpose.xlu0.b32.cont [6/16] 0.0, 128
          %854 = vxpose.xlu0.b32.cont [7/16] 0.0, 128
          %855 = vxpose.xlu0.b32.cont [8/16] 0.0, 128
          %856 = vxpose.xlu0.b32.cont [9/16] 0.0, 128
          %857 = vxpose.xlu0.b32.cont [10/16] 0.0, 128
          %858 = vxpose.xlu0.b32.cont [11/16] 0.0, 128
          %859 = vxpose.xlu0.b32.cont [12/16] 0.0, 128
          %860 = vxpose.xlu0.b32.cont [13/16] 0.0, 128
          %861 = vxpose.xlu0.b32.cont [14/16] 0.0, 128
          %862 = vxpose.xlu0.b32.cont [15/16] 0.0, 128
          %863 = vxpose.xlu0.b32.end [16/16] 0.0, 128
          %v864 = vpop.trf.xlu0
          %v865 = vpop.trf.xlu0
          %v866 = vpop.trf.xlu0
          %v867 = vpop.trf.xlu0
          %v868 = vpop.trf.xlu0
          %v869 = vpop.trf.xlu0
          %v870 = vpop.trf.xlu0
          %v871 = vpop.trf.xlu0
          %v872 = vpop.trf.xlu0
          %v873 = vpop.trf.xlu0
          %v874 = vpop.trf.xlu0
          %v875 = vpop.trf.xlu0
          %v876 = vpop.trf.xlu0
          %v877 = vpop.trf.xlu0
          %v878 = vpop.trf.xlu0
          %v879 = vpop.trf.xlu0
          %880 = vxpose.xlu0.b32.start [1/16] %v771, 128
          %881 = vxpose.xlu0.b32.cont [2/16] 0.0, 128
          %882 = vxpose.xlu0.b32.cont [3/16] 0.0, 128
          %883 = vxpose.xlu0.b32.cont [4/16] 0.0, 128
          %884 = vxpose.xlu0.b32.cont [5/16] 0.0, 128
          %885 = vxpose.xlu0.b32.cont [6/16] 0.0, 128
          %886 = vxpose.xlu0.b32.cont [7/16] 0.0, 128
          %887 = vxpose.xlu0.b32.cont [8/16] 0.0, 128
          %888 = vxpose.xlu0.b32.cont [9/16] 0.0, 128
          %889 = vxpose.xlu0.b32.cont [10/16] 0.0, 128
          %890 = vxpose.xlu0.b32.cont [11/16] 0.0, 128
          %891 = vxpose.xlu0.b32.cont [12/16] 0.0, 128
          %892 = vxpose.xlu0.b32.cont [13/16] 0.0, 128
          %893 = vxpose.xlu0.b32.cont [14/16] 0.0, 128
          %894 = vxpose.xlu0.b32.cont [15/16] 0.0, 128
          %895 = vxpose.xlu0.b32.end [16/16] 0.0, 128
          %v896 = vpop.trf.xlu0
          %v897 = vpop.trf.xlu0
          %v898 = vpop.trf.xlu0
          %v899 = vpop.trf.xlu0
          %v900 = vpop.trf.xlu0
          %v901 = vpop.trf.xlu0
          %v902 = vpop.trf.xlu0
          %v903 = vpop.trf.xlu0
          %v904 = vpop.trf.xlu0
          %v905 = vpop.trf.xlu0
          %v906 = vpop.trf.xlu0
          %v907 = vpop.trf.xlu0
          %v908 = vpop.trf.xlu0
          %v909 = vpop.trf.xlu0
          %v910 = vpop.trf.xlu0
          %v911 = vpop.trf.xlu0
          %912 = vxpose.xlu0.b32.start [1/16] %v772, 128
          %913 = vxpose.xlu0.b32.cont [2/16] 0.0, 128
          %914 = vxpose.xlu0.b32.cont [3/16] 0.0, 128
          %915 = vxpose.xlu0.b32.cont [4/16] 0.0, 128
          %916 = vxpose.xlu0.b32.cont [5/16] 0.0, 128
          %917 = vxpose.xlu0.b32.cont [6/16] 0.0, 128
          %918 = vxpose.xlu0.b32.cont [7/16] 0.0, 128
          %919 = vxpose.xlu0.b32.cont [8/16] 0.0, 128
          %920 = vxpose.xlu0.b32.cont [9/16] 0.0, 128
          %921 = vxpose.xlu0.b32.cont [10/16] 0.0, 128
          %922 = vxpose.xlu0.b32.cont [11/16] 0.0, 128
          %923 = vxpose.xlu0.b32.cont [12/16] 0.0, 128
          %924 = vxpose.xlu0.b32.cont [13/16] 0.0, 128
          %925 = vxpose.xlu0.b32.cont [14/16] 0.0, 128
          %926 = vxpose.xlu0.b32.cont [15/16] 0.0, 128
          %927 = vxpose.xlu0.b32.end [16/16] 0.0, 128
          %v928 = vpop.trf.xlu0
          %v929 = vpop.trf.xlu0
          %v930 = vpop.trf.xlu0
          %v931 = vpop.trf.xlu0
          %v932 = vpop.trf.xlu0
          %v933 = vpop.trf.xlu0
          %v934 = vpop.trf.xlu0
          %v935 = vpop.trf.xlu0
          %v936 = vpop.trf.xlu0
          %v937 = vpop.trf.xlu0
          %v938 = vpop.trf.xlu0
          %v939 = vpop.trf.xlu0
          %v940 = vpop.trf.xlu0
          %v941 = vpop.trf.xlu0
          %v942 = vpop.trf.xlu0
          %v943 = vpop.trf.xlu0
          %944 = vxpose.xlu0.b32.start [1/16] %v773, 128
          %945 = vxpose.xlu0.b32.cont [2/16] 0.0, 128
          %946 = vxpose.xlu0.b32.cont [3/16] 0.0, 128
          %947 = vxpose.xlu0.b32.cont [4/16] 0.0, 128
          %948 = vxpose.xlu0.b32.cont [5/16] 0.0, 128
          %949 = vxpose.xlu0.b32.cont [6/16] 0.0, 128
          %950 = vxpose.xlu0.b32.cont [7/16] 0.0, 128
          %951 = vxpose.xlu0.b32.cont [8/16] 0.0, 128
          %952 = vxpose.xlu0.b32.cont [9/16] 0.0, 128
          %953 = vxpose.xlu0.b32.cont [10/16] 0.0, 128
          %954 = vxpose.xlu0.b32.cont [11/16] 0.0, 128
          %955 = vxpose.xlu0.b32.cont [12/16] 0.0, 128
          %956 = vxpose.xlu0.b32.cont [13/16] 0.0, 128
          %957 = vxpose.xlu0.b32.cont [14/16] 0.0, 128
          %958 = vxpose.xlu0.b32.cont [15/16] 0.0, 128
          %959 = vxpose.xlu0.b32.end [16/16] 0.0, 128
          %v960 = vpop.trf.xlu0
          %v961 = vpop.trf.xlu0
          %v962 = vpop.trf.xlu0
          %v963 = vpop.trf.xlu0
          %v964 = vpop.trf.xlu0
          %v965 = vpop.trf.xlu0
          %v966 = vpop.trf.xlu0
          %v967 = vpop.trf.xlu0
          %v968 = vpop.trf.xlu0
          %v969 = vpop.trf.xlu0
          %v970 = vpop.trf.xlu0
          %v971 = vpop.trf.xlu0
          %v972 = vpop.trf.xlu0
          %v973 = vpop.trf.xlu0
          %v974 = vpop.trf.xlu0
          %v975 = vpop.trf.xlu0
          %976 = vxpose.xlu0.b32.start [1/16] %v774, 128
          %977 = vxpose.xlu0.b32.cont [2/16] 0.0, 128
          %978 = vxpose.xlu0.b32.cont [3/16] 0.0, 128
          %979 = vxpose.xlu0.b32.cont [4/16] 0.0, 128
          %980 = vxpose.xlu0.b32.cont [5/16] 0.0, 128
          %981 = vxpose.xlu0.b32.cont [6/16] 0.0, 128
          %982 = vxpose.xlu0.b32.cont [7/16] 0.0, 128
          %983 = vxpose.xlu0.b32.cont [8/16] 0.0, 128
          %984 = vxpose.xlu0.b32.cont [9/16] 0.0, 128
          %985 = vxpose.xlu0.b32.cont [10/16] 0.0, 128
          %986 = vxpose.xlu0.b32.cont [11/16] 0.0, 128
          %987 = vxpose.xlu0.b32.cont [12/16] 0.0, 128
          %988 = vxpose.xlu0.b32.cont [13/16] 0.0, 128
          %989 = vxpose.xlu0.b32.cont [14/16] 0.0, 128
          %990 = vxpose.xlu0.b32.cont [15/16] 0.0, 128
          %991 = vxpose.xlu0.b32.end [16/16] 0.0, 128
          %v992 = vpop.trf.xlu0
          %v993 = vpop.trf.xlu0
          %v994 = vpop.trf.xlu0
          %v995 = vpop.trf.xlu0
          %v996 = vpop.trf.xlu0
          %v997 = vpop.trf.xlu0
          %v998 = vpop.trf.xlu0
          %v999 = vpop.trf.xlu0
          %v1000 = vpop.trf.xlu0
          %v1001 = vpop.trf.xlu0
          %v1002 = vpop.trf.xlu0
          %v1003 = vpop.trf.xlu0
          %v1004 = vpop.trf.xlu0
          %v1005 = vpop.trf.xlu0
          %v1006 = vpop.trf.xlu0
          %v1007 = vpop.trf.xlu0
          %1008 = vxpose.xlu0.b32.start [1/16] %v775, 128
          %1009 = vxpose.xlu0.b32.cont [2/16] 0.0, 128
          %1010 = vxpose.xlu0.b32.cont [3/16] 0.0, 128
          %1011 = vxpose.xlu0.b32.cont [4/16] 0.0, 128
          %1012 = vxpose.xlu0.b32.cont [5/16] 0.0, 128
          %1013 = vxpose.xlu0.b32.cont [6/16] 0.0, 128
          %1014 = vxpose.xlu0.b32.cont [7/16] 0.0, 128
          %1015 = vxpose.xlu0.b32.cont [8/16] 0.0, 128
          %1016 = vxpose.xlu0.b32.cont [9/16] 0.0, 128
          %1017 = vxpose.xlu0.b32.cont [10/16] 0.0, 128
          %1018 = vxpose.xlu0.b32.cont [11/16] 0.0, 128
          %1019 = vxpose.xlu0.b32.cont [12/16] 0.0, 128
          %1020 = vxpose.xlu0.b32.cont [13/16] 0.0, 128
          %1021 = vxpose.xlu0.b32.cont [14/16] 0.0, 128
          %1022 = vxpose.xlu0.b32.cont [15/16] 0.0, 128
          %1023 = vxpose.xlu0.b32.end [16/16] 0.0, 128
          %v1024 = vpop.trf.xlu0
          %v1025 = vpop.trf.xlu0
          %v1026 = vpop.trf.xlu0
          %v1027 = vpop.trf.xlu0
          %v1028 = vpop.trf.xlu0
          %v1029 = vpop.trf.xlu0
          %v1030 = vpop.trf.xlu0
          %v1031 = vpop.trf.xlu0
          %v1032 = vpop.trf.xlu0
          %v1033 = vpop.trf.xlu0
          %v1034 = vpop.trf.xlu0
          %v1035 = vpop.trf.xlu0
          %v1036 = vpop.trf.xlu0
          %v1037 = vpop.trf.xlu0
          %v1038 = vpop.trf.xlu0
          %v1039 = vpop.trf.xlu0
          %v1040 = vpack.c.bf16 %v800, %v800
          %v1041 = vpack.c.bf16 %v801, %v801
          %v1042 = vpack.c.bf16 %v832, %v832
          %v1043 = vpack.c.bf16 %v833, %v833
          %v1044 = vpack.c.bf16 %v864, %v864
          %v1045 = vpack.c.bf16 %v865, %v865
          %v1046 = vpack.c.bf16 %v896, %v896
          %v1047 = vpack.c.bf16 %v897, %v897
          %vm1048 = vcmask 60416
          %1049 = vst.msk [vmem:[#allocation2] sm:$0xf] %vm1048, %v1040
          %1050 = vst.msk [vmem:[#allocation2 + $0x4] sm:$0xf] %vm1048, %v1041
          %1051 = vst.msk [vmem:[#allocation2 + $0x8] sm:$0xf] %vm1048, %v1042
          %1052 = vst.msk [vmem:[#allocation2 + $0xc] sm:$0xf] %vm1048, %v1043
          %1053 = vst.msk [vmem:[#allocation2 + $0x10] sm:$0xf] %vm1048, %v1044
          %1054 = vst.msk [vmem:[#allocation2 + $0x14] sm:$0xf] %vm1048, %v1045
          %1055 = vst.msk [vmem:[#allocation2 + $0x18] sm:$0xf] %vm1048, %v1046
          %1056 = vst.msk [vmem:[#allocation2 + $0x1c] sm:$0xf] %vm1048, %v1047
          %v1057 = vpack.c.bf16 %v928, %v928
          %v1058 = vpack.c.bf16 %v929, %v929
          %v1059 = vpack.c.bf16 %v960, %v960
          %v1060 = vpack.c.bf16 %v961, %v961
          %v1061 = vpack.c.bf16 %v992, %v992
          %v1062 = vpack.c.bf16 %v993, %v993
          %v1063 = vpack.c.bf16 %v1024, %v1024
          %v1064 = vpack.c.bf16 %v1025, %v1025
          %1065 = vst.msk [vmem:[#allocation3] sm:$0xf] %vm1048, %v1057
          %1066 = vst.msk [vmem:[#allocation3 + $0x4] sm:$0xf] %vm1048, %v1058
          %1067 = vst.msk [vmem:[#allocation3 + $0x8] sm:$0xf] %vm1048, %v1059
          %1068 = vst.msk [vmem:[#allocation3 + $0xc] sm:$0xf] %vm1048, %v1060
          %1069 = vst.msk [vmem:[#allocation3 + $0x10] sm:$0xf] %vm1048, %v1061
          %1070 = vst.msk [vmem:[#allocation3 + $0x14] sm:$0xf] %vm1048, %v1062
          %1071 = vst.msk [vmem:[#allocation3 + $0x18] sm:$0xf] %vm1048, %v1063
          %1072 = vst.msk [vmem:[#allocation3 + $0x1c] sm:$0xf] %vm1048, %v1064
        $region104: #{tpu_custom_call.1} parent=83 // pred_fallthru
          _
        %v1073 = vld [vmem:[%s636] sm:$0xff]
        %v1074 = vld [vmem:[%s2] sm:$0x1]
        %v1075 = vld [vmem:[%s3] sm:$0x1]
        %vm1076 = vcmask 261120
        %v1077 = vsel %vm1076, %v1073, 0.0
        %1078 = vadd.xlane.f32.xlu0 %v1077
        %v1079 = vpop.xlane.xlu0 %1078
        %v1080 = vrcp.pop 32.0
        %v1081 = vmul.f32 32.0, %v1080
        %v1082 = vsub.f32 1.0, %v1081
        %v1083 = vmul.f32 %v1080, %v1082
        %v1084 = vadd.f32 %v1080, %v1083
        %vm1085 = vweird.f32 %v1080
        %v1086 = vsel %vm1085, %v1080, %v1084
        %v1087 = vmul.f32 %v1079, %v1086
        %v1088 = vsub.f32 %v1073, %v1087
        %v1089 = vmul.f32 %v1088, %v1088
        %v1090 = vsel %vm1076, %v1089, 0.0
        %1091 = vadd.xlane.f32.xlu0 %v1090
        %v1092 = vpop.xlane.xlu0 %1091
        %v1093 = vmul.f32 %v1092, 0.032258064
        %v1094 = vrsqrt.pop %v1093
        %v1095 = vmul.f32 %v1094, %v1093
        %v1096 = vmul.f32 %v1095, %v1094
        %v1097 = vmul.f32 0.5, %v1096
        %v1098 = vsub.f32 1.5, %v1097
        %v1099 = vmul.f32 %v1094, %v1098
        %v1100 = vmul.f32 %v1093, %v1099
        %vm1101 = vcmp.eq.f32.partialorder %v1093, inf
        %v1102 = vsel %vm1101, %v1093, %v1100
        %vm1103 = vcmp.eq.f32.partialorder %v1093, 0.0
        %v1104 = vand.u32 %v1093, 2147483648
        %v1105 = vsel %vm1103, %v1104, %v1102
        %v1106 = vadd.f32 %v1105, 1e-06
        %v1107 = vrcp.pop %v1106
        %v1109 = vperm.slane %v1074, 0
        %v1111 = vmul.f32 %v1109, %v1088
        %v1112 = vmul.f32 %v1111, %v1107
        %v1114 = vperm.slane %v1075, 0
        %v1116 = vadd.f32 %v1112, %v1114
        %v1117 = vld [vmem:[%s4] sm:$0xf]
        %v1118 = vld [vmem:[%s4 + $0x4] sm:$0xf]
        %v1119 = vld [vmem:[%s4 + $0x8] sm:$0xf]
        %v1120 = vld [vmem:[%s4 + $0xc] sm:$0xf]
        %v1121 = vpack.c.bf16 %v1116, %v1116
        %v1122 = vld [vmem:[%s5] sm:$0x1]
        %v1124 = vperm.slane %v1122, 0
        %v1130 = vunpack.c.l.b16 %v1117
        %v1131 = vunpack.c.l.b16 %v1118
        %v1132 = vunpack.c.l.b16 %v1119
        %v1133 = vunpack.c.l.b16 %v1120
        %v1134 = vpack.c.b16 %v1131, %v1130
        %v1135 = vpack.c.b16 %v1133, %v1132
        %v1139 = vsel %vm1076, %v1121, 0
        %1141 = vmatpush.bf16.msra.mxu0 0
        %1142 = vmatpush.bf16.msra.mxu0 0
        %1143 = vmatpush.bf16.msra.mxu0 0
        %1144 = vmatpush.bf16.msra.mxu0 0
        %1145 = vmatpush.bf16.msra.mxu0 0
        %1146 = vmatpush.bf16.msra.mxu0 0
        %1147 = vmatpush.bf16.msra.mxu0 %v1135
        %1148 = vmatpush.bf16.msra.mxu0 %v1134
        %1149 = vmatmul.bf16.gmra.mxu0 %v1139
        %v1150 = vpop.f32.mrf.mxu0
        %v1151 = vadd.f32 %v1124, %v1150
        %v1152 = vpop.f32.mrf.mxu0
        %1153 = vdwg.mxu0
        %1154 = vxpose.xlu0.b32.start [1/16] %v1151, 128
        %1155 = vxpose.xlu0.b32.cont [2/16] 0.0, 128
        %1156 = vxpose.xlu0.b32.cont [3/16] 0.0, 128
        %1157 = vxpose.xlu0.b32.cont [4/16] 0.0, 128
        %1158 = vxpose.xlu0.b32.cont [5/16] 0.0, 128
        %1159 = vxpose.xlu0.b32.cont [6/16] 0.0, 128
        %1160 = vxpose.xlu0.b32.cont [7/16] 0.0, 128
        %1161 = vxpose.xlu0.b32.cont [8/16] 0.0, 128
        %1162 = vxpose.xlu0.b32.cont [9/16] 0.0, 128
        %1163 = vxpose.xlu0.b32.cont [10/16] 0.0, 128
        %1164 = vxpose.xlu0.b32.cont [11/16] 0.0, 128
        %1165 = vxpose.xlu0.b32.cont [12/16] 0.0, 128
        %1166 = vxpose.xlu0.b32.cont [13/16] 0.0, 128
        %1167 = vxpose.xlu0.b32.cont [14/16] 0.0, 128
        %1168 = vxpose.xlu0.b32.cont [15/16] 0.0, 128
        %1169 = vxpose.xlu0.b32.end [16/16] 0.0, 128
        %v1170 = vpop.trf.xlu0
        %v1171 = vpop.trf.xlu0
        %v1172 = vpop.trf.xlu0
        %v1173 = vpop.trf.xlu0
        %v1174 = vpop.trf.xlu0
        %v1175 = vpop.trf.xlu0
        %v1176 = vpop.trf.xlu0
        %v1177 = vpop.trf.xlu0
        %v1178 = vpop.trf.xlu0
        %v1179 = vpop.trf.xlu0
        %v1180 = vpop.trf.xlu0
        %v1181 = vpop.trf.xlu0
        %v1182 = vpop.trf.xlu0
        %v1183 = vpop.trf.xlu0
        %v1184 = vpop.trf.xlu0
        %v1185 = vpop.trf.xlu0
        %1186 = vxpose.xlu0.b32.start [1/16] %v1170, 128
        %1187 = vxpose.xlu0.b32.cont [2/16] 0.0, 128
        %1188 = vxpose.xlu0.b32.cont [3/16] 0.0, 128
        %1189 = vxpose.xlu0.b32.cont [4/16] 0.0, 128
        %1190 = vxpose.xlu0.b32.cont [5/16] 0.0, 128
        %1191 = vxpose.xlu0.b32.cont [6/16] 0.0, 128
        %1192 = vxpose.xlu0.b32.cont [7/16] 0.0, 128
        %1193 = vxpose.xlu0.b32.cont [8/16] 0.0, 128
        %1194 = vxpose.xlu0.b32.cont [9/16] 0.0, 128
        %1195 = vxpose.xlu0.b32.cont [10/16] 0.0, 128
        %1196 = vxpose.xlu0.b32.cont [11/16] 0.0, 128
        %1197 = vxpose.xlu0.b32.cont [12/16] 0.0, 128
        %1198 = vxpose.xlu0.b32.cont [13/16] 0.0, 128
        %1199 = vxpose.xlu0.b32.cont [14/16] 0.0, 128
        %1200 = vxpose.xlu0.b32.cont [15/16] 0.0, 128
        %1201 = vxpose.xlu0.b32.end [16/16] 0.0, 128
        %v1202 = vpop.trf.xlu0
        %v1203 = vpop.trf.xlu0
        %v1204 = vpop.trf.xlu0
        %v1205 = vpop.trf.xlu0
        %v1206 = vpop.trf.xlu0
        %v1207 = vpop.trf.xlu0
        %v1208 = vpop.trf.xlu0
        %v1209 = vpop.trf.xlu0
        %v1210 = vpop.trf.xlu0
        %v1211 = vpop.trf.xlu0
        %v1212 = vpop.trf.xlu0
        %v1213 = vpop.trf.xlu0
        %v1214 = vpop.trf.xlu0
        %v1215 = vpop.trf.xlu0
        %v1216 = vpop.trf.xlu0
        %v1217 = vpop.trf.xlu0
        %1218 = vxpose.xlu0.b32.start [1/16] %v1171, 128
        %1219 = vxpose.xlu0.b32.cont [2/16] 0.0, 128
        %1220 = vxpose.xlu0.b32.cont [3/16] 0.0, 128
        %1221 = vxpose.xlu0.b32.cont [4/16] 0.0, 128
        %1222 = vxpose.xlu0.b32.cont [5/16] 0.0, 128
        %1223 = vxpose.xlu0.b32.cont [6/16] 0.0, 128
        %1224 = vxpose.xlu0.b32.cont [7/16] 0.0, 128
        %1225 = vxpose.xlu0.b32.cont [8/16] 0.0, 128
        %1226 = vxpose.xlu0.b32.cont [9/16] 0.0, 128
        %1227 = vxpose.xlu0.b32.cont [10/16] 0.0, 128
        %1228 = vxpose.xlu0.b32.cont [11/16] 0.0, 128
        %1229 = vxpose.xlu0.b32.cont [12/16] 0.0, 128
        %1230 = vxpose.xlu0.b32.cont [13/16] 0.0, 128
        %1231 = vxpose.xlu0.b32.cont [14/16] 0.0, 128
        %1232 = vxpose.xlu0.b32.cont [15/16] 0.0, 128
        %1233 = vxpose.xlu0.b32.end [16/16] 0.0, 128
        %v1234 = vpop.trf.xlu0
        %v1235 = vpop.trf.xlu0
        %v1236 = vpop.trf.xlu0
        %v1237 = vpop.trf.xlu0
        %v1238 = vpop.trf.xlu0
        %v1239 = vpop.trf.xlu0
        %v1240 = vpop.trf.xlu0
        %v1241 = vpop.trf.xlu0
        %v1242 = vpop.trf.xlu0
        %v1243 = vpop.trf.xlu0
        %v1244 = vpop.trf.xlu0
        %v1245 = vpop.trf.xlu0
        %v1246 = vpop.trf.xlu0
        %v1247 = vpop.trf.xlu0
        %v1248 = vpop.trf.xlu0
        %v1249 = vpop.trf.xlu0
        %1250 = vxpose.xlu0.b32.start [1/16] %v1172, 128
        %1251 = vxpose.xlu0.b32.cont [2/16] 0.0, 128
        %1252 = vxpose.xlu0.b32.cont [3/16] 0.0, 128
        %1253 = vxpose.xlu0.b32.cont [4/16] 0.0, 128
        %1254 = vxpose.xlu0.b32.cont [5/16] 0.0, 128
        %1255 = vxpose.xlu0.b32.cont [6/16] 0.0, 128
        %1256 = vxpose.xlu0.b32.cont [7/16] 0.0, 128
        %1257 = vxpose.xlu0.b32.cont [8/16] 0.0, 128
        %1258 = vxpose.xlu0.b32.cont [9/16] 0.0, 128
        %1259 = vxpose.xlu0.b32.cont [10/16] 0.0, 128
        %1260 = vxpose.xlu0.b32.cont [11/16] 0.0, 128
        %1261 = vxpose.xlu0.b32.cont [12/16] 0.0, 128
        %1262 = vxpose.xlu0.b32.cont [13/16] 0.0, 128
        %1263 = vxpose.xlu0.b32.cont [14/16] 0.0, 128
        %1264 = vxpose.xlu0.b32.cont [15/16] 0.0, 128
        %1265 = vxpose.xlu0.b32.end [16/16] 0.0, 128
        %v1266 = vpop.trf.xlu0
        %v1267 = vpop.trf.xlu0
        %v1268 = vpop.trf.xlu0
        %v1269 = vpop.trf.xlu0
        %v1270 = vpop.trf.xlu0
        %v1271 = vpop.trf.xlu0
        %v1272 = vpop.trf.xlu0
        %v1273 = vpop.trf.xlu0
        %v1274 = vpop.trf.xlu0
        %v1275 = vpop.trf.xlu0
        %v1276 = vpop.trf.xlu0
        %v1277 = vpop.trf.xlu0
        %v1278 = vpop.trf.xlu0
        %v1279 = vpop.trf.xlu0
        %v1280 = vpop.trf.xlu0
        %v1281 = vpop.trf.xlu0
        %1282 = vxpose.xlu0.b32.start [1/16] %v1173, 128
        %1283 = vxpose.xlu0.b32.cont [2/16] 0.0, 128
        %1284 = vxpose.xlu0.b32.cont [3/16] 0.0, 128
        %1285 = vxpose.xlu0.b32.cont [4/16] 0.0, 128
        %1286 = vxpose.xlu0.b32.cont [5/16] 0.0, 128
        %1287 = vxpose.xlu0.b32.cont [6/16] 0.0, 128
        %1288 = vxpose.xlu0.b32.cont [7/16] 0.0, 128
        %1289 = vxpose.xlu0.b32.cont [8/16] 0.0, 128
        %1290 = vxpose.xlu0.b32.cont [9/16] 0.0, 128
        %1291 = vxpose.xlu0.b32.cont [10/16] 0.0, 128
        %1292 = vxpose.xlu0.b32.cont [11/16] 0.0, 128
        %1293 = vxpose.xlu0.b32.cont [12/16] 0.0, 128
        %1294 = vxpose.xlu0.b32.cont [13/16] 0.0, 128
        %1295 = vxpose.xlu0.b32.cont [14/16] 0.0, 128
        %1296 = vxpose.xlu0.b32.cont [15/16] 0.0, 128
        %1297 = vxpose.xlu0.b32.end [16/16] 0.0, 128
        %v1298 = vpop.trf.xlu0
        %v1299 = vpop.trf.xlu0
        %v1300 = vpop.trf.xlu0
        %v1301 = vpop.trf.xlu0
        %v1302 = vpop.trf.xlu0
        %v1303 = vpop.trf.xlu0
        %v1304 = vpop.trf.xlu0
        %v1305 = vpop.trf.xlu0
        %v1306 = vpop.trf.xlu0
        %v1307 = vpop.trf.xlu0
        %v1308 = vpop.trf.xlu0
        %v1309 = vpop.trf.xlu0
        %v1310 = vpop.trf.xlu0
        %v1311 = vpop.trf.xlu0
        %v1312 = vpop.trf.xlu0
        %v1313 = vpop.trf.xlu0
        %v1314 = vpack.c.bf16 %v1202, %v1202
        %v1315 = vpack.c.bf16 %v1234, %v1234
        %v1316 = vpack.c.bf16 %v1266, %v1266
        %v1317 = vpack.c.bf16 %v1298, %v1298
        %v1318 = vld [vmem:[#allocation2] sm:$0xf]
        %v1319 = vld [vmem:[#allocation2 + $0x8] sm:$0xf]
        %v1320 = vld [vmem:[#allocation2 + $0x10] sm:$0xf]
        %v1321 = vld [vmem:[#allocation2 + $0x18] sm:$0xf]
        %vm1322 = vcmask 64512
        %v1324 = vsel %vm1322, %v1314, 0
        %v1327 = vsel %vm1322, %v1318, 0
        %1329 = vmatpush.bf16.xpose.msra.mxu0 0
        %1330 = vmatpush.bf16.xpose.msra.mxu0 0
        %1331 = vmatpush.bf16.xpose.msra.mxu0 0
        %1332 = vmatpush.bf16.xpose.msra.mxu0 0
        %1333 = vmatpush.bf16.xpose.msra.mxu0 0
        %1334 = vmatpush.bf16.xpose.msra.mxu0 0
        %1335 = vmatpush.bf16.xpose.msra.mxu0 0
        %1336 = vmatpush.bf16.xpose.msra.mxu0 %v1327
        %1337 = vmatmul.bf16.gmra.mxu0 %v1324
        %v1338 = vpop.f32.mrf.mxu0
        %v1339 = vadd.f32 0.0, %v1338
        %v1340 = vpop.f32.mrf.mxu0
        %1341 = vdwg.mxu0
        %v1343 = vsel %vm1322, %v1315, 0
        %v1346 = vsel %vm1322, %v1319, 0
        %1348 = vmatpush.bf16.xpose.msra.mxu0 0
        %1349 = vmatpush.bf16.xpose.msra.mxu0 0
        %1350 = vmatpush.bf16.xpose.msra.mxu0 0
        %1351 = vmatpush.bf16.xpose.msra.mxu0 0
        %1352 = vmatpush.bf16.xpose.msra.mxu0 0
        %1353 = vmatpush.bf16.xpose.msra.mxu0 0
        %1354 = vmatpush.bf16.xpose.msra.mxu0 0
        %1355 = vmatpush.bf16.xpose.msra.mxu0 %v1346
        %1356 = vmatmul.bf16.gmra.mxu0 %v1343
        %v1357 = vpop.f32.mrf.mxu0
        %v1358 = vadd.f32 0.0, %v1357
        %v1359 = vpop.f32.mrf.mxu0
        %1360 = vdwg.mxu0
        %v1362 = vsel %vm1322, %v1316, 0
        %v1365 = vsel %vm1322, %v1320, 0
        %1367 = vmatpush.bf16.xpose.msra.mxu0 0
        %1368 = vmatpush.bf16.xpose.msra.mxu0 0
        %1369 = vmatpush.bf16.xpose.msra.mxu0 0
        %1370 = vmatpush.bf16.xpose.msra.mxu0 0
        %1371 = vmatpush.bf16.xpose.msra.mxu0 0
        %1372 = vmatpush.bf16.xpose.msra.mxu0 0
        %1373 = vmatpush.bf16.xpose.msra.mxu0 0
        %1374 = vmatpush.bf16.xpose.msra.mxu0 %v1365
        %1375 = vmatmul.bf16.gmra.mxu0 %v1362
        %v1376 = vpop.f32.mrf.mxu0
        %v1377 = vadd.f32 0.0, %v1376
        %v1378 = vpop.f32.mrf.mxu0
        %1379 = vdwg.mxu0
        %v1381 = vsel %vm1322, %v1317, 0
        %v1384 = vsel %vm1322, %v1321, 0
        %1386 = vmatpush.bf16.xpose.msra.mxu0 0
        %1387 = vmatpush.bf16.xpose.msra.mxu0 0
        %1388 = vmatpush.bf16.xpose.msra.mxu0 0
        %1389 = vmatpush.bf16.xpose.msra.mxu0 0
        %1390 = vmatpush.bf16.xpose.msra.mxu0 0
        %1391 = vmatpush.bf16.xpose.msra.mxu0 0
        %1392 = vmatpush.bf16.xpose.msra.mxu0 0
        %1393 = vmatpush.bf16.xpose.msra.mxu0 %v1384
        %1394 = vmatmul.bf16.gmra.mxu0 %v1381
        %v1395 = vpop.f32.mrf.mxu0
        %v1396 = vadd.f32 0.0, %v1395
        %v1397 = vpop.f32.mrf.mxu0
        %1398 = vdwg.mxu0
        %v1399 = vsel %vm1322, %v1339, -inf
        %1400 = vmax.xlane.f32.xlu0 %v1399
        %v1401 = vpop.xlane.xlu0 %1400
        %v1402 = vsel %vm1322, %v1358, -inf
        %1403 = vmax.xlane.f32.xlu0 %v1402
        %v1404 = vpop.xlane.xlu0 %1403
        %v1405 = vsel %vm1322, %v1377, -inf
        %1406 = vmax.xlane.f32.xlu0 %v1405
        %v1407 = vpop.xlane.xlu0 %1406
        %v1408 = vsel %vm1322, %v1396, -inf
        %1409 = vmax.xlane.f32.xlu0 %v1408
        %v1410 = vpop.xlane.xlu0 %1409
        %v1411 = vsub.f32 %v1339, %v1401
        %v1412 = vsub.f32 %v1358, %v1404
        %v1413 = vsub.f32 %v1377, %v1407
        %v1414 = vsub.f32 %v1396, %v1410
        %v1415 = vmul.f32 %v1411, 1.442695
        %v1416 = vpow.pop %v1415
        %v1417 = vmul.f32 %v1412, 1.442695
        %v1418 = vpow.pop %v1417
        %v1419 = vmul.f32 %v1413, 1.442695
        %v1420 = vpow.pop %v1419
        %v1421 = vmul.f32 %v1414, 1.442695
        %v1422 = vpow.pop %v1421
        %v1423 = vsel %vm1322, %v1416, 0.0
        %1424 = vadd.xlane.f32.xlu0 %v1423
        %v1425 = vpop.xlane.xlu0 %1424
        %v1426 = vsel %vm1322, %v1418, 0.0
        %1427 = vadd.xlane.f32.xlu0 %v1426
        %v1428 = vpop.xlane.xlu0 %1427
        %v1429 = vsel %vm1322, %v1420, 0.0
        %1430 = vadd.xlane.f32.xlu0 %v1429
        %v1431 = vpop.xlane.xlu0 %1430
        %v1432 = vsel %vm1322, %v1422, 0.0
        %1433 = vadd.xlane.f32.xlu0 %v1432
        %v1434 = vpop.xlane.xlu0 %1433
        %v1435 = vld [vmem:[#allocation3] sm:$0xf]
        %v1436 = vld [vmem:[#allocation3 + $0x8] sm:$0xf]
        %v1437 = vld [vmem:[#allocation3 + $0x10] sm:$0xf]
        %v1438 = vld [vmem:[#allocation3 + $0x18] sm:$0xf]
        %v1439 = vpack.c.bf16 %v1416, %v1416
        %v1440 = vpack.c.bf16 %v1418, %v1418
        %v1441 = vpack.c.bf16 %v1420, %v1420
        %v1442 = vpack.c.bf16 %v1422, %v1422
        %v1444 = vsel %vm1322, %v1439, 0
        %vm1446 = vcmask 1043456
        %v1448 = vsel %vm1446, %v1435, 0
        %1450 = vmatpush.bf16.msra.mxu0 0
        %1451 = vmatpush.bf16.msra.mxu0 0
        %1452 = vmatpush.bf16.msra.mxu0 0
        %1453 = vmatpush.bf16.msra.mxu0 0
        %1454 = vmatpush.bf16.msra.mxu0 0
        %1455 = vmatpush.bf16.msra.mxu0 0
        %1456 = vmatpush.bf16.msra.mxu0 0
        %1457 = vmatpush.bf16.msra.mxu0 %v1448
        %1458 = vmatmul.bf16.gmra.mxu0 %v1444
        %v1459 = vpop.f32.mrf.mxu0
        %v1460 = vadd.f32 0.0, %v1459
        %v1461 = vpop.f32.mrf.mxu0
        %1462 = vdwg.mxu0
        %v1464 = vsel %vm1322, %v1440, 0
        %v1467 = vsel %vm1446, %v1436, 0
        %1469 = vmatpush.bf16.msra.mxu0 0
        %1470 = vmatpush.bf16.msra.mxu0 0
        %1471 = vmatpush.bf16.msra.mxu0 0
        %1472 = vmatpush.bf16.msra.mxu0 0
        %1473 = vmatpush.bf16.msra.mxu0 0
        %1474 = vmatpush.bf16.msra.mxu0 0
        %1475 = vmatpush.bf16.msra.mxu0 0
        %1476 = vmatpush.bf16.msra.mxu0 %v1467
        %1477 = vmatmul.bf16.gmra.mxu0 %v1464
        %v1478 = vpop.f32.mrf.mxu0
        %v1479 = vadd.f32 0.0, %v1478
        %v1480 = vpop.f32.mrf.mxu0
        %1481 = vdwg.mxu0
        %v1483 = vsel %vm1322, %v1441, 0
        %v1486 = vsel %vm1446, %v1437, 0
        %1488 = vmatpush.bf16.msra.mxu0 0
        %1489 = vmatpush.bf16.msra.mxu0 0
        %1490 = vmatpush.bf16.msra.mxu0 0
        %1491 = vmatpush.bf16.msra.mxu0 0
        %1492 = vmatpush.bf16.msra.mxu0 0
        %1493 = vmatpush.bf16.msra.mxu0 0
        %1494 = vmatpush.bf16.msra.mxu0 0
        %1495 = vmatpush.bf16.msra.mxu0 %v1486
        %1496 = vmatmul.bf16.gmra.mxu0 %v1483
        %v1497 = vpop.f32.mrf.mxu0
        %v1498 = vadd.f32 0.0, %v1497
        %v1499 = vpop.f32.mrf.mxu0
        %1500 = vdwg.mxu0
        %v1502 = vsel %vm1322, %v1442, 0
        %v1505 = vsel %vm1446, %v1438, 0
        %1507 = vmatpush.bf16.msra.mxu0 0
        %1508 = vmatpush.bf16.msra.mxu0 0
        %1509 = vmatpush.bf16.msra.mxu0 0
        %1510 = vmatpush.bf16.msra.mxu0 0
        %1511 = vmatpush.bf16.msra.mxu0 0
        %1512 = vmatpush.bf16.msra.mxu0 0
        %1513 = vmatpush.bf16.msra.mxu0 0
        %1514 = vmatpush.bf16.msra.mxu0 %v1505
        %1515 = vmatmul.bf16.gmra.mxu0 %v1502
        %v1516 = vpop.f32.mrf.mxu0
        %v1517 = vadd.f32 0.0, %v1516
        %v1518 = vpop.f32.mrf.mxu0
        %1519 = vdwg.mxu0
        %v1520 = vld [vmem:[#allocation2 + $0x4] sm:$0xf]
        %v1521 = vld [vmem:[#allocation2 + $0xc] sm:$0xf]
        %v1522 = vld [vmem:[#allocation2 + $0x14] sm:$0xf]
        %v1523 = vld [vmem:[#allocation2 + $0x1c] sm:$0xf]
        %v1525 = vsel %vm1322, %v1520, 0
        %1527 = vmatpush.bf16.xpose.msra.mxu0 0
        %1528 = vmatpush.bf16.xpose.msra.mxu0 0
        %1529 = vmatpush.bf16.xpose.msra.mxu0 0
        %1530 = vmatpush.bf16.xpose.msra.mxu0 0
        %1531 = vmatpush.bf16.xpose.msra.mxu0 0
        %1532 = vmatpush.bf16.xpose.msra.mxu0 0
        %1533 = vmatpush.bf16.xpose.msra.mxu0 0
        %1534 = vmatpush.bf16.xpose.msra.mxu0 %v1525
        %1535 = vmatmul.bf16.gmra.mxu0 %v1324
        %v1536 = vpop.f32.mrf.mxu0
        %v1537 = vadd.f32 0.0, %v1536
        %v1538 = vpop.f32.mrf.mxu0
        %1539 = vdwg.mxu0
        %v1541 = vsel %vm1322, %v1521, 0
        %1543 = vmatpush.bf16.xpose.msra.mxu0 0
        %1544 = vmatpush.bf16.xpose.msra.mxu0 0
        %1545 = vmatpush.bf16.xpose.msra.mxu0 0
        %1546 = vmatpush.bf16.xpose.msra.mxu0 0
        %1547 = vmatpush.bf16.xpose.msra.mxu0 0
        %1548 = vmatpush.bf16.xpose.msra.mxu0 0
        %1549 = vmatpush.bf16.xpose.msra.mxu0 0
        %1550 = vmatpush.bf16.xpose.msra.mxu0 %v1541
        %1551 = vmatmul.bf16.gmra.mxu0 %v1343
        %v1552 = vpop.f32.mrf.mxu0
        %v1553 = vadd.f32 0.0, %v1552
        %v1554 = vpop.f32.mrf.mxu0
        %1555 = vdwg.mxu0
        %v1557 = vsel %vm1322, %v1522, 0
        %1559 = vmatpush.bf16.xpose.msra.mxu0 0
        %1560 = vmatpush.bf16.xpose.msra.mxu0 0
        %1561 = vmatpush.bf16.xpose.msra.mxu0 0
        %1562 = vmatpush.bf16.xpose.msra.mxu0 0
        %1563 = vmatpush.bf16.xpose.msra.mxu0 0
        %1564 = vmatpush.bf16.xpose.msra.mxu0 0
        %1565 = vmatpush.bf16.xpose.msra.mxu0 0
        %1566 = vmatpush.bf16.xpose.msra.mxu0 %v1557
        %1567 = vmatmul.bf16.gmra.mxu0 %v1362
        %v1568 = vpop.f32.mrf.mxu0
        %v1569 = vadd.f32 0.0, %v1568
        %v1570 = vpop.f32.mrf.mxu0
        %1571 = vdwg.mxu0
        %v1573 = vsel %vm1322, %v1523, 0
        %1575 = vmatpush.bf16.xpose.msra.mxu0 0
        %1576 = vmatpush.bf16.xpose.msra.mxu0 0
        %1577 = vmatpush.bf16.xpose.msra.mxu0 0
        %1578 = vmatpush.bf16.xpose.msra.mxu0 0
        %1579 = vmatpush.bf16.xpose.msra.mxu0 0
        %1580 = vmatpush.bf16.xpose.msra.mxu0 0
        %1581 = vmatpush.bf16.xpose.msra.mxu0 0
        %1582 = vmatpush.bf16.xpose.msra.mxu0 %v1573
        %1583 = vmatmul.bf16.gmra.mxu0 %v1381
        %v1584 = vpop.f32.mrf.mxu0
        %v1585 = vadd.f32 0.0, %v1584
        %v1586 = vpop.f32.mrf.mxu0
        %1587 = vdwg.mxu0
        %v1588 = vsel %vm1322, %v1537, -inf
        %1589 = vmax.xlane.f32.xlu0 %v1588
        %v1590 = vpop.xlane.xlu0 %1589
        %v1591 = vsel %vm1322, %v1553, -inf
        %1592 = vmax.xlane.f32.xlu0 %v1591
        %v1593 = vpop.xlane.xlu0 %1592
        %v1594 = vsel %vm1322, %v1569, -inf
        %1595 = vmax.xlane.f32.xlu0 %v1594
        %v1596 = vpop.xlane.xlu0 %1595
        %v1597 = vsel %vm1322, %v1585, -inf
        %1598 = vmax.xlane.f32.xlu0 %v1597
        %v1599 = vpop.xlane.xlu0 %1598
        %v1600 = vmax.f32 %v1401, %v1590
        %v1601 = vmax.f32 %v1404, %v1593
        %v1602 = vmax.f32 %v1407, %v1596
        %v1603 = vmax.f32 %v1410, %v1599
        %v1604 = vsub.f32 %v1401, %v1600
        %v1605 = vsub.f32 %v1404, %v1601
        %v1606 = vsub.f32 %v1407, %v1602
        %v1607 = vsub.f32 %v1410, %v1603
        %v1608 = vmul.f32 %v1604, 1.442695
        %v1609 = vpow.pop %v1608
        %v1610 = vmul.f32 %v1605, 1.442695
        %v1611 = vpow.pop %v1610
        %v1612 = vmul.f32 %v1606, 1.442695
        %v1613 = vpow.pop %v1612
        %v1614 = vmul.f32 %v1607, 1.442695
        %v1615 = vpow.pop %v1614
        %v1616 = vsub.f32 %v1537, %v1600
        %v1617 = vsub.f32 %v1553, %v1601
        %v1618 = vsub.f32 %v1569, %v1602
        %v1619 = vsub.f32 %v1585, %v1603
        %v1620 = vmul.f32 %v1616, 1.442695
        %v1621 = vpow.pop %v1620
        %v1622 = vmul.f32 %v1617, 1.442695
        %v1623 = vpow.pop %v1622
        %v1624 = vmul.f32 %v1618, 1.442695
        %v1625 = vpow.pop %v1624
        %v1626 = vmul.f32 %v1619, 1.442695
        %v1627 = vpow.pop %v1626
        %v1628 = vmul.f32 %v1609, %v1425
        %v1629 = vmul.f32 %v1611, %v1428
        %v1630 = vmul.f32 %v1613, %v1431
        %v1631 = vmul.f32 %v1615, %v1434
        %v1632 = vsel %vm1322, %v1621, 0.0
        %1633 = vadd.xlane.f32.xlu0 %v1632
        %v1634 = vpop.xlane.xlu0 %1633
        %v1635 = vsel %vm1322, %v1623, 0.0
        %1636 = vadd.xlane.f32.xlu0 %v1635
        %v1637 = vpop.xlane.xlu0 %1636
        %v1638 = vsel %vm1322, %v1625, 0.0
        %1639 = vadd.xlane.f32.xlu0 %v1638
        %v1640 = vpop.xlane.xlu0 %1639
        %v1641 = vsel %vm1322, %v1627, 0.0
        %1642 = vadd.xlane.f32.xlu0 %v1641
        %v1643 = vpop.xlane.xlu0 %1642
        %v1644 = vadd.f32 %v1628, %v1634
        %v1645 = vadd.f32 %v1629, %v1637
        %v1646 = vadd.f32 %v1630, %v1640
        %v1647 = vadd.f32 %v1631, %v1643
        %v1648 = vmul.f32 %v1609, %v1460
        %v1649 = vmul.f32 %v1611, %v1479
        %v1650 = vmul.f32 %v1613, %v1498
        %v1651 = vmul.f32 %v1615, %v1517
        %v1652 = vld [vmem:[#allocation3 + $0x4] sm:$0xf]
        %v1653 = vld [vmem:[#allocation3 + $0xc] sm:$0xf]
        %v1654 = vld [vmem:[#allocation3 + $0x14] sm:$0xf]
        %v1655 = vld [vmem:[#allocation3 + $0x1c] sm:$0xf]
        %v1656 = vpack.c.bf16 %v1621, %v1621
        %v1657 = vpack.c.bf16 %v1623, %v1623
        %v1658 = vpack.c.bf16 %v1625, %v1625
        %v1659 = vpack.c.bf16 %v1627, %v1627
        %v1661 = vsel %vm1322, %v1656, 0
        %v1664 = vsel %vm1446, %v1652, 0
        %1666 = vmatpush.bf16.msra.mxu0 0
        %1667 = vmatpush.bf16.msra.mxu0 0
        %1668 = vmatpush.bf16.msra.mxu0 0
        %1669 = vmatpush.bf16.msra.mxu0 0
        %1670 = vmatpush.bf16.msra.mxu0 0
        %1671 = vmatpush.bf16.msra.mxu0 0
        %1672 = vmatpush.bf16.msra.mxu0 0
        %1673 = vmatpush.bf16.msra.mxu0 %v1664
        %1674 = vmatmul.bf16.gmra.mxu0 %v1661
        %v1675 = vpop.f32.mrf.mxu0
        %v1676 = vadd.f32 0.0, %v1675
        %v1677 = vpop.f32.mrf.mxu0
        %1678 = vdwg.mxu0
        %v1680 = vsel %vm1322, %v1657, 0
        %v1683 = vsel %vm1446, %v1653, 0
        %1685 = vmatpush.bf16.msra.mxu0 0
        %1686 = vmatpush.bf16.msra.mxu0 0
        %1687 = vmatpush.bf16.msra.mxu0 0
        %1688 = vmatpush.bf16.msra.mxu0 0
        %1689 = vmatpush.bf16.msra.mxu0 0
        %1690 = vmatpush.bf16.msra.mxu0 0
        %1691 = vmatpush.bf16.msra.mxu0 0
        %1692 = vmatpush.bf16.msra.mxu0 %v1683
        %1693 = vmatmul.bf16.gmra.mxu0 %v1680
        %v1694 = vpop.f32.mrf.mxu0
        %v1695 = vadd.f32 0.0, %v1694
        %v1696 = vpop.f32.mrf.mxu0
        %1697 = vdwg.mxu0
        %v1699 = vsel %vm1322, %v1658, 0
        %v1702 = vsel %vm1446, %v1654, 0
        %1704 = vmatpush.bf16.msra.mxu0 0
        %1705 = vmatpush.bf16.msra.mxu0 0
        %1706 = vmatpush.bf16.msra.mxu0 0
        %1707 = vmatpush.bf16.msra.mxu0 0
        %1708 = vmatpush.bf16.msra.mxu0 0
        %1709 = vmatpush.bf16.msra.mxu0 0
        %1710 = vmatpush.bf16.msra.mxu0 0
        %1711 = vmatpush.bf16.msra.mxu0 %v1702
        %1712 = vmatmul.bf16.gmra.mxu0 %v1699
        %v1713 = vpop.f32.mrf.mxu0
        %v1714 = vadd.f32 0.0, %v1713
        %v1715 = vpop.f32.mrf.mxu0
        %1716 = vdwg.mxu0
        %v1718 = vsel %vm1322, %v1659, 0
        %v1721 = vsel %vm1446, %v1655, 0
        %1723 = vmatpush.bf16.msra.mxu0 0
        %1724 = vmatpush.bf16.msra.mxu0 0
        %1725 = vmatpush.bf16.msra.mxu0 0
        %1726 = vmatpush.bf16.msra.mxu0 0
        %1727 = vmatpush.bf16.msra.mxu0 0
        %1728 = vmatpush.bf16.msra.mxu0 0
        %1729 = vmatpush.bf16.msra.mxu0 0
        %1730 = vmatpush.bf16.msra.mxu0 %v1721
        %1731 = vmatmul.bf16.gmra.mxu0 %v1718
        %v1732 = vpop.f32.mrf.mxu0
        %v1733 = vadd.f32 0.0, %v1732
        %v1734 = vpop.f32.mrf.mxu0
        %1735 = vdwg.mxu0
        %v1736 = vadd.f32 %v1648, %v1676
        %v1737 = vadd.f32 %v1649, %v1695
        %v1738 = vadd.f32 %v1650, %v1714
        %v1739 = vadd.f32 %v1651, %v1733
        %v1740 = vrcp.pop %v1644
        %v1741 = vrcp.pop %v1645
        %v1742 = vrcp.pop %v1646
        %v1743 = vrcp.pop %v1647
        %v1744 = vmul.f32 %v1736, %v1740
        %v1745 = vmul.f32 %v1737, %v1741
        %v1746 = vmul.f32 %v1738, %v1742
        %v1747 = vmul.f32 %v1739, %v1743
        %1748 = vxpose.xlu0.b32.start [1/16] %v1744, 128
        %1749 = vxpose.xlu0.b32.cont [2/16] 0.0, 128
        %1750 = vxpose.xlu0.b32.cont [3/16] 0.0, 128
        %1751 = vxpose.xlu0.b32.cont [4/16] 0.0, 128
        %1752 = vxpose.xlu0.b32.cont [5/16] 0.0, 128
        %1753 = vxpose.xlu0.b32.cont [6/16] 0.0, 128
        %1754 = vxpose.xlu0.b32.cont [7/16] 0.0, 128
        %1755 = vxpose.xlu0.b32.cont [8/16] 0.0, 128
        %1756 = vxpose.xlu0.b32.cont [9/16] 0.0, 128
        %1757 = vxpose.xlu0.b32.cont [10/16] 0.0, 128
        %1758 = vxpose.xlu0.b32.cont [11/16] 0.0, 128
        %1759 = vxpose.xlu0.b32.cont [12/16] 0.0, 128
        %1760 = vxpose.xlu0.b32.cont [13/16] 0.0, 128
        %1761 = vxpose.xlu0.b32.cont [14/16] 0.0, 128
        %1762 = vxpose.xlu0.b32.cont [15/16] 0.0, 128
        %1763 = vxpose.xlu0.b32.end [16/16] 0.0, 128
        %v1764 = vpop.trf.xlu0
        %v1765 = vpop.trf.xlu0
        %v1766 = vpop.trf.xlu0
        %v1767 = vpop.trf.xlu0
        %v1768 = vpop.trf.xlu0
        %v1769 = vpop.trf.xlu0
        %v1770 = vpop.trf.xlu0
        %v1771 = vpop.trf.xlu0
        %v1772 = vpop.trf.xlu0
        %v1773 = vpop.trf.xlu0
        %v1774 = vpop.trf.xlu0
        %v1775 = vpop.trf.xlu0
        %v1776 = vpop.trf.xlu0
        %v1777 = vpop.trf.xlu0
        %v1778 = vpop.trf.xlu0
        %v1779 = vpop.trf.xlu0
        %1780 = vxpose.xlu0.b32.start [1/16] %v1745, 128
        %1781 = vxpose.xlu0.b32.cont [2/16] 0.0, 128
        %1782 = vxpose.xlu0.b32.cont [3/16] 0.0, 128
        %1783 = vxpose.xlu0.b32.cont [4/16] 0.0, 128
        %1784 = vxpose.xlu0.b32.cont [5/16] 0.0, 128
        %1785 = vxpose.xlu0.b32.cont [6/16] 0.0, 128
        %1786 = vxpose.xlu0.b32.cont [7/16] 0.0, 128
        %1787 = vxpose.xlu0.b32.cont [8/16] 0.0, 128
        %1788 = vxpose.xlu0.b32.cont [9/16] 0.0, 128
        %1789 = vxpose.xlu0.b32.cont [10/16] 0.0, 128
        %1790 = vxpose.xlu0.b32.cont [11/16] 0.0, 128
        %1791 = vxpose.xlu0.b32.cont [12/16] 0.0, 128
        %1792 = vxpose.xlu0.b32.cont [13/16] 0.0, 128
        %1793 = vxpose.xlu0.b32.cont [14/16] 0.0, 128
        %1794 = vxpose.xlu0.b32.cont [15/16] 0.0, 128
        %1795 = vxpose.xlu0.b32.end [16/16] 0.0, 128
        %v1796 = vpop.trf.xlu0
        %v1797 = vpop.trf.xlu0
        %v1798 = vpop.trf.xlu0
        %v1799 = vpop.trf.xlu0
        %v1800 = vpop.trf.xlu0
        %v1801 = vpop.trf.xlu0
        %v1802 = vpop.trf.xlu0
        %v1803 = vpop.trf.xlu0
        %v1804 = vpop.trf.xlu0
        %v1805 = vpop.trf.xlu0
        %v1806 = vpop.trf.xlu0
        %v1807 = vpop.trf.xlu0
        %v1808 = vpop.trf.xlu0
        %v1809 = vpop.trf.xlu0
        %v1810 = vpop.trf.xlu0
        %v1811 = vpop.trf.xlu0
        %1812 = vxpose.xlu0.b32.start [1/16] %v1746, 128
        %1813 = vxpose.xlu0.b32.cont [2/16] 0.0, 128
        %1814 = vxpose.xlu0.b32.cont [3/16] 0.0, 128
        %1815 = vxpose.xlu0.b32.cont [4/16] 0.0, 128
        %1816 = vxpose.xlu0.b32.cont [5/16] 0.0, 128
        %1817 = vxpose.xlu0.b32.cont [6/16] 0.0, 128
        %1818 = vxpose.xlu0.b32.cont [7/16] 0.0, 128
        %1819 = vxpose.xlu0.b32.cont [8/16] 0.0, 128
        %1820 = vxpose.xlu0.b32.cont [9/16] 0.0, 128
        %1821 = vxpose.xlu0.b32.cont [10/16] 0.0, 128
        %1822 = vxpose.xlu0.b32.cont [11/16] 0.0, 128
        %1823 = vxpose.xlu0.b32.cont [12/16] 0.0, 128
        %1824 = vxpose.xlu0.b32.cont [13/16] 0.0, 128
        %1825 = vxpose.xlu0.b32.cont [14/16] 0.0, 128
        %1826 = vxpose.xlu0.b32.cont [15/16] 0.0, 128
        %1827 = vxpose.xlu0.b32.end [16/16] 0.0, 128
        %v1828 = vpop.trf.xlu0
        %v1829 = vpop.trf.xlu0
        %v1830 = vpop.trf.xlu0
        %v1831 = vpop.trf.xlu0
        %v1832 = vpop.trf.xlu0
        %v1833 = vpop.trf.xlu0
        %v1834 = vpop.trf.xlu0
        %v1835 = vpop.trf.xlu0
        %v1836 = vpop.trf.xlu0
        %v1837 = vpop.trf.xlu0
        %v1838 = vpop.trf.xlu0
        %v1839 = vpop.trf.xlu0
        %v1840 = vpop.trf.xlu0
        %v1841 = vpop.trf.xlu0
        %v1842 = vpop.trf.xlu0
        %v1843 = vpop.trf.xlu0
        %1844 = vxpose.xlu0.b32.start [1/16] %v1747, 128
        %1845 = vxpose.xlu0.b32.cont [2/16] 0.0, 128
        %1846 = vxpose.xlu0.b32.cont [3/16] 0.0, 128
        %1847 = vxpose.xlu0.b32.cont [4/16] 0.0, 128
        %1848 = vxpose.xlu0.b32.cont [5/16] 0.0, 128
        %1849 = vxpose.xlu0.b32.cont [6/16] 0.0, 128
        %1850 = vxpose.xlu0.b32.cont [7/16] 0.0, 128
        %1851 = vxpose.xlu0.b32.cont [8/16] 0.0, 128
        %1852 = vxpose.xlu0.b32.cont [9/16] 0.0, 128
        %1853 = vxpose.xlu0.b32.cont [10/16] 0.0, 128
        %1854 = vxpose.xlu0.b32.cont [11/16] 0.0, 128
        %1855 = vxpose.xlu0.b32.cont [12/16] 0.0, 128
        %1856 = vxpose.xlu0.b32.cont [13/16] 0.0, 128
        %1857 = vxpose.xlu0.b32.cont [14/16] 0.0, 128
        %1858 = vxpose.xlu0.b32.cont [15/16] 0.0, 128
        %1859 = vxpose.xlu0.b32.end [16/16] 0.0, 128
        %v1860 = vpop.trf.xlu0
        %v1861 = vpop.trf.xlu0
        %v1862 = vpop.trf.xlu0
        %v1863 = vpop.trf.xlu0
        %v1864 = vpop.trf.xlu0
        %v1865 = vpop.trf.xlu0
        %v1866 = vpop.trf.xlu0
        %v1867 = vpop.trf.xlu0
        %v1868 = vpop.trf.xlu0
        %v1869 = vpop.trf.xlu0
        %v1870 = vpop.trf.xlu0
        %v1871 = vpop.trf.xlu0
        %v1872 = vpop.trf.xlu0
        %v1873 = vpop.trf.xlu0
        %v1874 = vpop.trf.xlu0
        %v1875 = vpop.trf.xlu0
        %1876 = vxpose.xlu0.b32.start [1/16] %v1764, 128
        %1877 = vxpose.xlu0.b32.cont [2/16] %v1796, 128
        %1878 = vxpose.xlu0.b32.cont [3/16] %v1828, 128
        %1879 = vxpose.xlu0.b32.cont [4/16] %v1860, 128
        %1880 = vxpose.xlu0.b32.cont [5/16] 0.0, 128
        %1881 = vxpose.xlu0.b32.cont [6/16] 0.0, 128
        %1882 = vxpose.xlu0.b32.cont [7/16] 0.0, 128
        %1883 = vxpose.xlu0.b32.cont [8/16] 0.0, 128
        %1884 = vxpose.xlu0.b32.cont [9/16] 0.0, 128
        %1885 = vxpose.xlu0.b32.cont [10/16] 0.0, 128
        %1886 = vxpose.xlu0.b32.cont [11/16] 0.0, 128
        %1887 = vxpose.xlu0.b32.cont [12/16] 0.0, 128
        %1888 = vxpose.xlu0.b32.cont [13/16] 0.0, 128
        %1889 = vxpose.xlu0.b32.cont [14/16] 0.0, 128
        %1890 = vxpose.xlu0.b32.cont [15/16] 0.0, 128
        %1891 = vxpose.xlu0.b32.end [16/16] 0.0, 128
        %v1892 = vpop.trf.xlu0
        %v1893 = vpop.trf.xlu0
        %v1894 = vpop.trf.xlu0
        %v1895 = vpop.trf.xlu0
        %v1896 = vpop.trf.xlu0
        %v1897 = vpop.trf.xlu0
        %v1898 = vpop.trf.xlu0
        %v1899 = vpop.trf.xlu0
        %v1900 = vpop.trf.xlu0
        %v1901 = vpop.trf.xlu0
        %v1902 = vpop.trf.xlu0
        %v1903 = vpop.trf.xlu0
        %v1904 = vpop.trf.xlu0
        %v1905 = vpop.trf.xlu0
        %v1906 = vpop.trf.xlu0
        %v1907 = vpop.trf.xlu0
        %v1908 = vld [vmem:[#allocation9] sm:$0xf]
        %v1909 = vld [vmem:[#allocation9 + $0x4] sm:$0xf]
        %v1910 = vld [vmem:[#allocation9 + $0x8] sm:$0xf]
        %v1911 = vld [vmem:[#allocation9 + $0xc] sm:$0xf]
        %v1912 = vpack.c.bf16 %v1892, %v1892
        %v1913 = vld [vmem:[%s9] sm:$0x1]
        %v1915 = vperm.slane %v1913, 0
        %v1921 = vunpack.c.l.b16 %v1908
        %v1922 = vunpack.c.l.b16 %v1909
        %v1923 = vunpack.c.l.b16 %v1910
        %v1924 = vunpack.c.l.b16 %v1911
        %v1925 = vpack.c.b16 %v1922, %v1921
        %v1926 = vpack.c.b16 %v1924, %v1923
        %v1930 = vsel %vm1076, %v1912, 0
        %1932 = vmatpush.bf16.msra.mxu0 0
        %1933 = vmatpush.bf16.msra.mxu0 0
        %1934 = vmatpush.bf16.msra.mxu0 0
        %1935 = vmatpush.bf16.msra.mxu0 0
        %1936 = vmatpush.bf16.msra.mxu0 0
        %1937 = vmatpush.bf16.msra.mxu0 0
        %1938 = vmatpush.bf16.msra.mxu0 %v1926
        %1939 = vmatpush.bf16.msra.mxu0 %v1925
        %1940 = vmatmul.bf16.gmra.mxu0 %v1930
        %v1941 = vpop.f32.mrf.mxu0
        %v1942 = vadd.f32 %v1915, %v1941
        %v1943 = vpop.f32.mrf.mxu0
        %1944 = vdwg.mxu0
        %v1945 = vadd.f32 %v1073, %v1942
        %v1946 = vld [vmem:[%s10] sm:$0x1]
        %v1947 = vld [vmem:[%s11] sm:$0x1]
        %v1948 = vsel %vm1076, %v1945, 0.0
        %1949 = vadd.xlane.f32.xlu0 %v1948
        %v1950 = vpop.xlane.xlu0 %1949
        %v1951 = vmul.f32 %v1950, %v1086
        %v1952 = vsub.f32 %v1945, %v1951
        %v1953 = vmul.f32 %v1952, %v1952
        %v1954 = vsel %vm1076, %v1953, 0.0
        %1955 = vadd.xlane.f32.xlu0 %v1954
        %v1956 = vpop.xlane.xlu0 %1955
        %v1957 = vmul.f32 %v1956, 0.032258064
        %v1958 = vrsqrt.pop %v1957
        %v1959 = vmul.f32 %v1958, %v1957
        %v1960 = vmul.f32 %v1959, %v1958
        %v1961 = vmul.f32 0.5, %v1960
        %v1962 = vsub.f32 1.5, %v1961
        %v1963 = vmul.f32 %v1958, %v1962
        %v1964 = vmul.f32 %v1957, %v1963
        %vm1965 = vcmp.eq.f32.partialorder %v1957, inf
        %v1966 = vsel %vm1965, %v1957, %v1964
        %vm1967 = vcmp.eq.f32.partialorder %v1957, 0.0
        %v1968 = vand.u32 %v1957, 2147483648
        %v1969 = vsel %vm1967, %v1968, %v1966
        %v1970 = vadd.f32 %v1969, 1e-06
        %v1971 = vrcp.pop %v1970
        %v1973 = vperm.slane %v1946, 0
        %v1975 = vmul.f32 %v1973, %v1952
        %v1976 = vmul.f32 %v1975, %v1971
        %v1978 = vperm.slane %v1947, 0
        %v1980 = vadd.f32 %v1976, %v1978
        %v1981 = vld [vmem:[#allocation10] sm:$0xf]
        %v1982 = vld [vmem:[#allocation10 + $0x4] sm:$0xf]
        %v1983 = vld [vmem:[#allocation10 + $0x8] sm:$0xf]
        %v1984 = vld [vmem:[#allocation10 + $0xc] sm:$0xf]
        %v1985 = vpack.c.bf16 %v1980, %v1980
        %v1986 = vld [vmem:[%s13] sm:$0x1]
        %v1988 = vperm.slane %v1986, 0
        %v1994 = vunpack.c.l.b16 %v1981
        %v1995 = vunpack.c.l.b16 %v1982
        %v1996 = vunpack.c.l.b16 %v1983
        %v1997 = vunpack.c.l.b16 %v1984
        %v1998 = vpack.c.b16 %v1995, %v1994
        %v1999 = vpack.c.b16 %v1997, %v1996
        %v2003 = vsel %vm1076, %v1985, 0
        %2005 = vmatpush.bf16.msra.mxu0 0
        %2006 = vmatpush.bf16.msra.mxu0 0
        %2007 = vmatpush.bf16.msra.mxu0 0
        %2008 = vmatpush.bf16.msra.mxu0 0
        %2009 = vmatpush.bf16.msra.mxu0 0
        %2010 = vmatpush.bf16.msra.mxu0 0
        %2011 = vmatpush.bf16.msra.mxu0 %v1999
        %2012 = vmatpush.bf16.msra.mxu0 %v1998
        %2013 = vmatmul.bf16.gmra.mxu0 %v2003
        %v2014 = vpop.f32.mrf.mxu0
        %v2015 = vadd.f32 %v1988, %v2014
        %v2016 = vpop.f32.mrf.mxu0
        %2017 = vdwg.mxu0
        %v2018 = vmax.f32 %v2015, 0.0
        %v2019 = vld [vmem:[%s14] sm:$0xf]
        %v2020 = vld [vmem:[%s14 + $0x4] sm:$0xf]
        %v2021 = vld [vmem:[%s14 + $0x8] sm:$0xf]
        %v2022 = vld [vmem:[%s14 + $0xc] sm:$0xf]
        %v2023 = vld [vmem:[%s14 + $0x10] sm:$0xf]
        %v2024 = vld [vmem:[%s14 + $0x14] sm:$0xf]
        %v2025 = vld [vmem:[%s14 + $0x18] sm:$0xf]
        %v2026 = vld [vmem:[%s14 + $0x1c] sm:$0xf]
        %v2027 = vpack.c.bf16 %v2018, %v2018
        %v2028 = vld [vmem:[%s15] sm:$0x1]
        %v2030 = vperm.slane %v2028, 0
        %v2040 = vunpack.c.l.b16 %v2019
        %v2041 = vunpack.c.l.b16 %v2020
        %v2042 = vunpack.c.l.b16 %v2021
        %v2043 = vunpack.c.l.b16 %v2022
        %v2044 = vunpack.c.l.b16 %v2023
        %v2045 = vunpack.c.l.b16 %v2024
        %v2046 = vunpack.c.l.b16 %v2025
        %v2047 = vunpack.c.l.b16 %v2026
        %v2048 = vpack.c.b16 %v2041, %v2040
        %v2049 = vpack.c.b16 %v2043, %v2042
        %v2050 = vpack.c.b16 %v2045, %v2044
        %v2051 = vpack.c.b16 %v2047, %v2046
        %vm2056 = vcmask 523264
        %v2058 = vsel %vm2056, %v2027, 0
        %2060 = vmatpush.bf16.msra.mxu0 0
        %2061 = vmatpush.bf16.msra.mxu0 0
        %2062 = vmatpush.bf16.msra.mxu0 0
        %2063 = vmatpush.bf16.msra.mxu0 0
        %2064 = vmatpush.bf16.msra.mxu0 %v2051
        %2065 = vmatpush.bf16.msra.mxu0 %v2050
        %2066 = vmatpush.bf16.msra.mxu0 %v2049
        %2067 = vmatpush.bf16.msra.mxu0 %v2048
        %2068 = vmatmul.bf16.gmra.mxu0 %v2058
        %v2069 = vpop.f32.mrf.mxu0
        %v2070 = vadd.f32 %v2030, %v2069
        %v2071 = vpop.f32.mrf.mxu0
        %2072 = vdwg.mxu0
        %v2073 = vadd.f32 %v1945, %v2070
        %2074 = vst.msk [vmem:[%s628] sm:$0xff] %vm1076, %v2073
        %s2075 = sand.u32 %s405, 1
        %s2076 = scalar_lea.sflag [#allocation6], %s2075
        %s2077 = sand.u32 %s405, 1
        %s2078 = smul.addr %s2077, 8
        %s2079 = scalar_lea.vmem [#allocation12], %s2078
        // Predicated region
        $region105: #{tpu_custom_call.1} parent=83 // pred_check
          %p2080 = pneg %p415
        $region106: #{tpu_custom_call.1} parent=83 // pred_check_branch
          %2082 = sbr.rel (%p2080) target = $region108
        $region107: #{tpu_custom_call.1} parent=83 // pred_region
          %2084 = vsyncadd %s2076, 0
          %s2085 = smul.addr %s39, 2
          %s2086 = sadd.s32 %s40, %s2085
          %s2087 = smul.addr %s2086, 8
          %s2088 = scalar_lea.hbm %s16, %s2087
          %s2090 = sshll.u32 %s2079, 4
          %s2091 = int_to_ptr.vmem [resolvable:$true] %s2090
          %s2092 = sshll.u32 %s2088, 4
          %s2093 = int_to_ptr.hbm [resolvable:$true] %s2092
          %2095 = dma.vmem_to_hbm [thread:$0]  %s2091, 128, %s2093, %s2076
        $region108: #{tpu_custom_call.1} parent=83 // pred_fallthru
          _
      $region84: #{tpu_custom_call.1} parent=5 // pred_fallthru
        _
      %p2096 = scmp.le.s32.totalorder 2, %s30
      // Predicated region
      $region109: #{tpu_custom_call.1} parent=5 // pred_check
        %p2097 = pneg %p2096
      $region110: #{tpu_custom_call.1} parent=5 // pred_check_branch
        %2099 = sbr.rel (%p2097) target = $region112
      $region111: #{tpu_custom_call.1} parent=5 // pred_region
        %s2100 = ssub.s32 %s30, 2
        // Predicated region
        $region113: #{tpu_custom_call.1} parent=111 // pred_check
          %p2101 = pneg %p421
        $region114: #{tpu_custom_call.1} parent=111 // pred_check_branch
          %2103 = sbr.rel (%p2101) target = $region116
        $region115: #{tpu_custom_call.1} parent=111 // pred_region
          %s2104 = sand.u32 %s406, 1
          %s2105 = scalar_lea.sflag [#allocation6], %s2104
          %s2106 = sand.u32 %s406, 1
          %s2107 = smul.addr %s2106, 8
          %s2108 = scalar_lea.vmem [#allocation12], %s2107
          %2110 = dma.done %s2105, 128
        $region116: #{tpu_custom_call.1} parent=111 // pred_fallthru
          _
      $region112: #{tpu_custom_call.1} parent=5 // pred_fallthru
        _
    $region6: #{tpu_custom_call.1} parent=1 // loop_footer
      %s34 = sadd.s32 1, %s30
    $region7: #{tpu_custom_call.1} parent=1 // loop_footer_branch
      %29 = sbr.rel target = $region3
    $region8: #{tpu_custom_call.1} parent=1 // loop_exit
      _
    %2111 = vsyncpa [#allocation5], 1
    %s2112 = scalar_lea.sflag [#allocation5], 1
    %2113 = vsyncpa %s2112, 1
    %2114 = vsyncpa [#allocation8], 1
    %2115 = vsyncpa [#allocation11], 1
    %2116 = vsyncpa [#allocation6], 1
    %s2117 = scalar_lea.sflag [#allocation6], 1
    %2118 = vsyncpa %s2117, 1

</llo_original>
